<compile_context>
chip_gen: v6e
topology: v6e:2x2x1
jax: 0.10.0
libtpu: 0.0.40
codegen_flags: <defaults>
</compile_context>

<pallas_src>
import functools
import numpy as np
import jax
import jax.numpy as jnp
from jax.experimental import pallas as pl
from jax.experimental.pallas import tpu as pltpu

LN_EPS = 1e-5


def _layernorm(h, gamma, beta):
    mu = jnp.mean(h, axis=-1, keepdims=True)
    var = jnp.mean(jnp.square(h - mu), axis=-1, keepdims=True)
    return (h - mu) * jax.lax.rsqrt(var + LN_EPS) * gamma + beta


def _mlp_kernel(*refs, hidden_features, use_gating):
    if use_gating:
        (x_ref, w0_ref, b0_ref, g0_ref, be0_ref,
         whh_ref, wx_ref, bh_ref, gh_ref, beh_ref,
         wl_ref, bl_ref, gate_ref, o_ref) = refs
    else:
        (x_ref, w0_ref, b0_ref, g0_ref, be0_ref,
         whh_ref, wx_ref, bh_ref, gh_ref, beh_ref,
         wl_ref, bl_ref, o_ref) = refs
        gate_ref = None

    H = hidden_features
    x = x_ref[...]                                             # (tm, in_p) bf16

    # --- layer 0: Linear(in -> H) + LN + ReLU (bf16 MXU feed, f32 accumulate)
    h = jnp.dot(x, w0_ref[...], preferred_element_type=jnp.float32) + b0_ref[...]
    h = _layernorm(h, g0_ref[...], be0_ref[...])
    h = jnp.maximum(h, 0.0)

    # --- hoisted skip-connection branch: one wide matmul for ALL hidden layers
    L = whh_ref.shape[0]
    xw = jnp.dot(x, wx_ref[...], preferred_element_type=jnp.float32)  # (tm, L*H) f32

    # --- hidden layers: Linear(cat(h, x)) + LN + ReLU, then optional gating
    for l in range(L):                                         # static unroll
        z = (jnp.dot(h.astype(jnp.bfloat16), whh_ref[l],
                     preferred_element_type=jnp.float32)
             + xw[:, l * H:(l + 1) * H] + bh_ref[l])
        z = _layernorm(z, gh_ref[l], beh_ref[l])
        z = jnp.maximum(z, 0.0)
        if use_gating:
            z = z * gate_ref[l]
        h = z

    # --- last layer: Linear(H -> out_p) + ReLU (no LN); padded cols stay 0
    y = jnp.dot(h.astype(jnp.bfloat16), wl_ref[...],
                preferred_element_type=jnp.float32) + bl_ref[...]
    y = jnp.maximum(y, 0.0)
    o_ref[...] = y.astype(o_ref.dtype)


def init_params(key, in_features, out_features, hidden_layers, hidden_features):
    """Deterministic synthetic parameters. Weights are stored transposed
    (in_dim, out_dim) so the kernel computes x @ W (== x @ A^T in PyTorch)."""
    H, L = hidden_features, hidden_layers
    ks = jax.random.split(key, 6)

    def w(k, fan_in, fan_out, *lead):
        scale = 1.0 / np.sqrt(fan_in)
        return scale * jax.random.normal(k, (*lead, fan_in, fan_out), jnp.float32)

    return dict(
        w0=w(ks[0], in_features, H),                           # (in, H)
        b0=0.01 * jax.random.normal(ks[1], (1, H), jnp.float32),
        g0=jnp.ones((1, H), jnp.float32),                      # LN weight
        be0=jnp.zeros((1, H), jnp.float32),                    # LN bias
        wh=w(ks[2], H + in_features, H, L),                    # (L, H+in, H)
        bh=0.01 * jax.random.normal(ks[3], (L, 1, H), jnp.float32),
        gh=jnp.ones((L, 1, H), jnp.float32),
        beh=jnp.zeros((L, 1, H), jnp.float32),
        wl=w(ks[4], H, out_features),                          # (H, out)
        bl=0.01 * jax.random.normal(ks[5], (1, out_features), jnp.float32),
    )


def _round_up(v, m):
    return ((v + m - 1) // m) * m


def synthesis_mlp_forward(x, params, gating_layers=None, *, tm=256):
    """x: (..., in_features). gating_layers: optional list of hidden_layers
    arrays of shape (..., hidden_features).  tm: row tile (sweep 256/512/1024)."""
    in_f = x.shape[-1]
    lead = x.shape[:-1]
    M = int(np.prod(lead))
    H = params["w0"].shape[1]
    L = params["wh"].shape[0]
    out_f = params["wl"].shape[1]
    assert L >= 1

    # Padded sizes: rows to the tile, K sublane-aligned, output lane-dense.
    M_p = _round_up(max(M, tm), tm)
    in_p = _round_up(max(in_f, 8), 8)
    out_p = _round_up(max(out_f, 128), 128)

    # --- activations (bf16 MXU feed) ---
    x2 = x.reshape(M, in_f).astype(jnp.bfloat16)
    x2 = jnp.pad(x2, ((0, M_p - M), (0, in_p - in_f)))

    # --- parameters: weights in bf16 (zero-padded), biases / LN params in f32 ---
    w0 = jnp.pad(params["w0"], ((0, in_p - in_f), (0, 0))).astype(jnp.bfloat16)
    whh = params["wh"][:, :H, :].astype(jnp.bfloat16)                  # (L, H, H)
    wx = jnp.transpose(params["wh"][:, H:, :], (1, 0, 2)).reshape(in_f, L * H)
    wx = jnp.pad(wx, ((0, in_p - in_f), (0, 0))).astype(jnp.bfloat16)  # (in_p, L*H)
    wl = jnp.pad(params["wl"], ((0, 0), (0, out_p - out_f))).astype(jnp.bfloat16)
    bl = jnp.pad(params["bl"], ((0, 0), (0, out_p - out_f)))

    use_gating = gating_layers is not None
    args = [x2, w0, params["b0"], params["g0"], params["be0"],
            whh, wx, params["bh"], params["gh"], params["beh"], wl, bl]

    full = lambda i: (0, 0)
    full3 = lambda i: (0, 0, 0)
    # NOTE: at production H/L on v7x (64 MiB VMEM), the grid-invariant specs
    # below could be single-buffered via pipeline_mode=pl.Buffered(1).
    in_specs = [
        pl.BlockSpec((tm, in_p), lambda i: (i, 0)),     # x tile
        pl.BlockSpec((in_p, H), full),                  # w0
        pl.BlockSpec((1, H), full),                     # b0
        pl.BlockSpec((1, H), full),                     # LN0 gamma
        pl.BlockSpec((1, H), full),                     # LN0 beta
        pl.BlockSpec((L, H, H), full3),                 # hidden h-branch weights
        pl.BlockSpec((in_p, L * H), full),              # hoisted skip weights
        pl.BlockSpec((L, 1, H), full3),                 # bh
        pl.BlockSpec((L, 1, H), full3),                 # LN gamma
        pl.BlockSpec((L, 1, H), full3),                 # LN beta
        pl.BlockSpec((H, out_p), full),                 # wl (lane-padded)
        pl.BlockSpec((1, out_p), full),                 # bl (lane-padded)
    ]
    if use_gating:
        gate = jnp.stack(
            [g.reshape(M, H).astype(jnp.float32) for g in gating_layers], axis=0)
        gate = jnp.pad(gate, ((0, 0), (0, M_p - M), (0, 0)))   # (L, M_p, H)
        args.append(gate)
        in_specs.append(pl.BlockSpec((L, tm, H), lambda i: (0, i, 0)))

    out = pl.pallas_call(
        functools.partial(_mlp_kernel, hidden_features=H, use_gating=use_gating),
        out_shape=jax.ShapeDtypeStruct((M_p, out_p), jnp.float32),
        grid=(M_p // tm,),
        in_specs=in_specs,
        out_specs=pl.BlockSpec((tm, out_p), lambda i: (i, 0)),
        compiler_params=pltpu.CompilerParams(
            dimension_semantics=("parallel",),
            vmem_limit_bytes=32 * 1024 * 1024),
    )(*args)

    return out[:M, :out_f].reshape(*lead, out_f)


def synthesis_mlp_reference(x, params, gating_layers=None):
    """Pure-JAX reference mirroring the PyTorch forward.  Matmul operands are
    rounded to bf16 (matching the kernel's MXU feed); accumulation and all
    elementwise math (LN / ReLU / gating) are f32, same as the kernel."""
    def mm(a, w):
        return jnp.dot(a.astype(jnp.bfloat16).astype(jnp.float32),
                       w.astype(jnp.bfloat16).astype(jnp.float32))

    H = params["w0"].shape[1]
    L = params["wh"].shape[0]
    xf = x.astype(jnp.float32)
    h = _layernorm(mm(xf, params["w0"]) + params["b0"], params["g0"], params["be0"])
    h = jnp.maximum(h, 0.0)
    for l in range(L):
        z = (mm(h, params["wh"][l][:H, :]) + mm(xf, params["wh"][l][H:, :])
             + params["bh"][l])
        z = _layernorm(z, params["gh"][l], params["beh"][l])
        z = jnp.maximum(z, 0.0)
        if gating_layers is not None:
            z = gating_layers[l] * z
        h = z
    return jnp.maximum(mm(h, params["wl"]) + params["bl"], 0.0)


if __name__ == "__main__":
    # Small, module-consistent shapes.
    in_features, out_features = 4, 3
    hidden_layers, hidden_features = 2, 32

    key = jax.random.PRNGKey(0)
    kx, kp, kg, kx2 = jax.random.split(key, 4)
    params = init_params(kp, in_features, out_features, hidden_layers, hidden_features)

    # gating_layers=None path (specialized kernel: no gate tensor streamed).
    B, N = 2, 512                                   # M = 1024 rows -> 4 grid steps
    x = jax.random.normal(kx, (B, N, in_features), jnp.float32)
    y = jax.block_until_ready(synthesis_mlp_forward(x, params, gating_layers=None))
    y_ref = synthesis_mlp_reference(x, params, gating_layers=None)
    np.testing.assert_allclose(np.asarray(y), np.asarray(y_ref), rtol=5e-3, atol=5e-3)

    # gating path, with a row count that is NOT a multiple of tm (exercises padding).
    Bg, Ng = 2, 200                                 # M = 400 -> padded to 512
    xg = jax.random.normal(kx2, (Bg, Ng, in_features), jnp.float32)
    gates = [jax.random.uniform(k, (Bg, Ng, hidden_features), jnp.float32)
             for k in jax.random.split(kg, hidden_layers)]
    yg = jax.block_until_ready(synthesis_mlp_forward(xg, params, gating_layers=gates))
    yg_ref = synthesis_mlp_reference(xg, params, gating_layers=gates)
    np.testing.assert_allclose(np.asarray(yg), np.asarray(yg_ref), rtol=5e-3, atol=5e-3)

    print("KERNEL_OK")
</pallas_src>

<mosaic_0001>
module attributes {stable_mosaic.version = 11 : i64} {
  func.func @_mlp_kernel(%arg0: i32, %arg1: memref<256x8xbf16, #tpu.memory_space<vmem>>, %arg2: memref<8x32xbf16, #tpu.memory_space<vmem>>, %arg3: memref<1x32xf32, #tpu.memory_space<vmem>>, %arg4: memref<1x32xf32, #tpu.memory_space<vmem>>, %arg5: memref<1x32xf32, #tpu.memory_space<vmem>>, %arg6: memref<2x32x32xbf16, #tpu.memory_space<vmem>>, %arg7: memref<8x64xbf16, #tpu.memory_space<vmem>>, %arg8: memref<2x1x32xf32, #tpu.memory_space<vmem>>, %arg9: memref<2x1x32xf32, #tpu.memory_space<vmem>>, %arg10: memref<2x1x32xf32, #tpu.memory_space<vmem>>, %arg11: memref<32x128xbf16, #tpu.memory_space<vmem>>, %arg12: memref<1x128xf32, #tpu.memory_space<vmem>>, %arg13: memref<256x128xf32, #tpu.memory_space<vmem>>) attributes {dimension_semantics = [#tpu.dimension_semantics<parallel>], iteration_bounds = array<i64: 4>, scalar_prefetch = 0 : i64, scratch_operands = 0 : i64, tpu.core_type = #tpu.core_type<tc>, window_params = [{transform_indices = @transform_0, window_bounds = array<i64: 256, 8>}, {pipeline_mode = #tpu.pipeline_mode<synchronous>, transform_indices = @transform_1, window_bounds = array<i64: 8, 32>}, {pipeline_mode = #tpu.pipeline_mode<synchronous>, transform_indices = @transform_2, window_bounds = array<i64: 1, 32>}, {pipeline_mode = #tpu.pipeline_mode<synchronous>, transform_indices = @transform_3, window_bounds = array<i64: 1, 32>}, {pipeline_mode = #tpu.pipeline_mode<synchronous>, transform_indices = @transform_4, window_bounds = array<i64: 1, 32>}, {pipeline_mode = #tpu.pipeline_mode<synchronous>, transform_indices = @transform_5, window_bounds = array<i64: 2, 32, 32>}, {pipeline_mode = #tpu.pipeline_mode<synchronous>, transform_indices = @transform_6, window_bounds = array<i64: 8, 64>}, {pipeline_mode = #tpu.pipeline_mode<synchronous>, transform_indices = @transform_7, window_bounds = array<i64: 2, 1, 32>}, {pipeline_mode = #tpu.pipeline_mode<synchronous>, transform_indices = @transform_8, window_bounds = array<i64: 2, 1, 32>}, {pipeline_mode = #tpu.pipeline_mode<synchronous>, transform_indices = @transform_9, window_bounds = array<i64: 2, 1, 32>}, {pipeline_mode = #tpu.pipeline_mode<synchronous>, transform_indices = @transform_10, window_bounds = array<i64: 32, 128>}, {pipeline_mode = #tpu.pipeline_mode<synchronous>, transform_indices = @transform_11, window_bounds = array<i64: 1, 128>}, {transform_indices = @transform_12, window_bounds = array<i64: 256, 128>}]} {
    %c0 = arith.constant 0 : index
    %c0_0 = arith.constant 0 : index
    %0 = vector.load %arg1[%c0, %c0_0] : memref<256x8xbf16, #tpu.memory_space<vmem>>, vector<256x8xbf16>
    %c0_1 = arith.constant 0 : index
    %c0_2 = arith.constant 0 : index
    %1 = vector.load %arg2[%c0_1, %c0_2] : memref<8x32xbf16, #tpu.memory_space<vmem>>, vector<8x32xbf16>
    %cst = arith.constant dense<0.000000e+00> : vector<256x32xf32>
    %2 = tpu.matmul %0, %1, %cst {dimension_numbers = #tpu.dot_dimension_numbers<[1], [0], [0], [1], [0, 0, 1, 1], [], []>} : vector<256x8xbf16>, vector<8x32xbf16>, vector<256x32xf32> -> vector<256x32xf32>
    %c0_3 = arith.constant 0 : index
    %c0_4 = arith.constant 0 : index
    %3 = vector.load %arg3[%c0_3, %c0_4] : memref<1x32xf32, #tpu.memory_space<vmem>>, vector<1x32xf32>
    %4 = vector.broadcast %3 : vector<1x32xf32> to vector<256x32xf32>
    %5 = arith.addf %2, %4 : vector<256x32xf32>
    %c0_5 = arith.constant 0 : index
    %c0_6 = arith.constant 0 : index
    %6 = vector.load %arg4[%c0_5, %c0_6] : memref<1x32xf32, #tpu.memory_space<vmem>>, vector<1x32xf32>
    %c0_7 = arith.constant 0 : index
    %c0_8 = arith.constant 0 : index
    %7 = vector.load %arg5[%c0_7, %c0_8] : memref<1x32xf32, #tpu.memory_space<vmem>>, vector<1x32xf32>
    %cst_9 = arith.constant dense<0.000000e+00> : vector<256xf32>
    %8 = vector.multi_reduction <add>, %5, %cst_9 [1] : vector<256x32xf32> to vector<256xf32>
    %9 = vector.shape_cast %8 : vector<256xf32> to vector<256x1xf32>
    %cst_10 = arith.constant 3.200000e+01 : f32
    %10 = vector.broadcast %cst_10 : f32 to vector<256x1xf32>
    %11 = arith.divf %9, %10 : vector<256x1xf32>
    %12 = vector.broadcast %11 : vector<256x1xf32> to vector<256x32xf32>
    %13 = arith.subf %5, %12 : vector<256x32xf32>
    %14 = arith.mulf %13, %13 : vector<256x32xf32>
    %cst_11 = arith.constant dense<0.000000e+00> : vector<256xf32>
    %15 = vector.multi_reduction <add>, %14, %cst_11 [1] : vector<256x32xf32> to vector<256xf32>
    %16 = vector.shape_cast %15 : vector<256xf32> to vector<256x1xf32>
    %cst_12 = arith.constant 3.200000e+01 : f32
    %17 = vector.broadcast %cst_12 : f32 to vector<256x1xf32>
    %18 = arith.divf %16, %17 : vector<256x1xf32>
    %19 = vector.broadcast %11 : vector<256x1xf32> to vector<256x32xf32>
    %20 = arith.subf %5, %19 : vector<256x32xf32>
    %cst_13 = arith.constant 9.99999974E-6 : f32
    %21 = vector.broadcast %cst_13 : f32 to vector<256x1xf32>
    %22 = arith.addf %18, %21 : vector<256x1xf32>
    %23 = math.rsqrt %22 : vector<256x1xf32>
    %24 = vector.broadcast %23 : vector<256x1xf32> to vector<256x32xf32>
    %25 = arith.mulf %20, %24 : vector<256x32xf32>
    %26 = vector.broadcast %6 : vector<1x32xf32> to vector<256x32xf32>
    %27 = arith.mulf %25, %26 : vector<256x32xf32>
    %28 = vector.broadcast %7 : vector<1x32xf32> to vector<256x32xf32>
    %29 = arith.addf %27, %28 : vector<256x32xf32>
    %cst_14 = arith.constant 0.000000e+00 : f32
    %30 = vector.broadcast %cst_14 : f32 to vector<256x32xf32>
    %31 = arith.maximumf %29, %30 : vector<256x32xf32>
    %c0_15 = arith.constant 0 : index
    %c0_16 = arith.constant 0 : index
    %32 = vector.load %arg7[%c0_15, %c0_16] : memref<8x64xbf16, #tpu.memory_space<vmem>>, vector<8x64xbf16>
    %cst_17 = arith.constant dense<0.000000e+00> : vector<256x64xf32>
    %33 = tpu.matmul %0, %32, %cst_17 {dimension_numbers = #tpu.dot_dimension_numbers<[1], [0], [0], [1], [0, 0, 1, 1], [], []>} : vector<256x8xbf16>, vector<8x64xbf16>, vector<256x64xf32> -> vector<256x64xf32>
    %34 = arith.truncf %31 : vector<256x32xf32> to vector<256x32xbf16>
    %c0_18 = arith.constant 0 : index
    %c0_19 = arith.constant 0 : index
    %c0_20 = arith.constant 0 : index
    %35 = vector.load %arg6[%c0_18, %c0_19, %c0_20] : memref<2x32x32xbf16, #tpu.memory_space<vmem>>, vector<1x32x32xbf16>
    %36 = vector.shape_cast %35 : vector<1x32x32xbf16> to vector<32x32xbf16>
    %cst_21 = arith.constant dense<0.000000e+00> : vector<256x32xf32>
    %37 = tpu.matmul %34, %36, %cst_21 {dimension_numbers = #tpu.dot_dimension_numbers<[1], [0], [0], [1], [0, 0, 1, 1], [], []>} : vector<256x32xbf16>, vector<32x32xbf16>, vector<256x32xf32> -> vector<256x32xf32>
    %38 = vector.extract_strided_slice %33 {offsets = [0, 0], sizes = [256, 32], strides = [1, 1]} : vector<256x64xf32> to vector<256x32xf32>
    %39 = arith.addf %37, %38 : vector<256x32xf32>
    %c0_22 = arith.constant 0 : index
    %c0_23 = arith.constant 0 : index
    %c0_24 = arith.constant 0 : index
    %40 = vector.load %arg8[%c0_22, %c0_23, %c0_24] : memref<2x1x32xf32, #tpu.memory_space<vmem>>, vector<1x1x32xf32>
    %41 = vector.shape_cast %40 : vector<1x1x32xf32> to vector<1x32xf32>
    %42 = vector.broadcast %41 : vector<1x32xf32> to vector<256x32xf32>
    %43 = arith.addf %39, %42 : vector<256x32xf32>
    %c0_25 = arith.constant 0 : index
    %c0_26 = arith.constant 0 : index
    %c0_27 = arith.constant 0 : index
    %44 = vector.load %arg9[%c0_25, %c0_26, %c0_27] : memref<2x1x32xf32, #tpu.memory_space<vmem>>, vector<1x1x32xf32>
    %45 = vector.shape_cast %44 : vector<1x1x32xf32> to vector<1x32xf32>
    %c0_28 = arith.constant 0 : index
    %c0_29 = arith.constant 0 : index
    %c0_30 = arith.constant 0 : index
    %46 = vector.load %arg10[%c0_28, %c0_29, %c0_30] : memref<2x1x32xf32, #tpu.memory_space<vmem>>, vector<1x1x32xf32>
    %47 = vector.shape_cast %46 : vector<1x1x32xf32> to vector<1x32xf32>
    %cst_31 = arith.constant dense<0.000000e+00> : vector<256xf32>
    %48 = vector.multi_reduction <add>, %43, %cst_31 [1] : vector<256x32xf32> to vector<256xf32>
    %49 = vector.shape_cast %48 : vector<256xf32> to vector<256x1xf32>
    %cst_32 = arith.constant 3.200000e+01 : f32
    %50 = vector.broadcast %cst_32 : f32 to vector<256x1xf32>
    %51 = arith.divf %49, %50 : vector<256x1xf32>
    %52 = vector.broadcast %51 : vector<256x1xf32> to vector<256x32xf32>
    %53 = arith.subf %43, %52 : vector<256x32xf32>
    %54 = arith.mulf %53, %53 : vector<256x32xf32>
    %cst_33 = arith.constant dense<0.000000e+00> : vector<256xf32>
    %55 = vector.multi_reduction <add>, %54, %cst_33 [1] : vector<256x32xf32> to vector<256xf32>
    %56 = vector.shape_cast %55 : vector<256xf32> to vector<256x1xf32>
    %cst_34 = arith.constant 3.200000e+01 : f32
    %57 = vector.broadcast %cst_34 : f32 to vector<256x1xf32>
    %58 = arith.divf %56, %57 : vector<256x1xf32>
    %59 = vector.broadcast %51 : vector<256x1xf32> to vector<256x32xf32>
    %60 = arith.subf %43, %59 : vector<256x32xf32>
    %cst_35 = arith.constant 9.99999974E-6 : f32
    %61 = vector.broadcast %cst_35 : f32 to vector<256x1xf32>
    %62 = arith.addf %58, %61 : vector<256x1xf32>
    %63 = math.rsqrt %62 : vector<256x1xf32>
    %64 = vector.broadcast %63 : vector<256x1xf32> to vector<256x32xf32>
    %65 = arith.mulf %60, %64 : vector<256x32xf32>
    %66 = vector.broadcast %45 : vector<1x32xf32> to vector<256x32xf32>
    %67 = arith.mulf %65, %66 : vector<256x32xf32>
    %68 = vector.broadcast %47 : vector<1x32xf32> to vector<256x32xf32>
    %69 = arith.addf %67, %68 : vector<256x32xf32>
    %cst_36 = arith.constant 0.000000e+00 : f32
    %70 = vector.broadcast %cst_36 : f32 to vector<256x32xf32>
    %71 = arith.maximumf %69, %70 : vector<256x32xf32>
    %72 = arith.truncf %71 : vector<256x32xf32> to vector<256x32xbf16>
    %c1 = arith.constant 1 : index
    %c0_37 = arith.constant 0 : index
    %c0_38 = arith.constant 0 : index
    %73 = vector.load %arg6[%c1, %c0_37, %c0_38] : memref<2x32x32xbf16, #tpu.memory_space<vmem>>, vector<1x32x32xbf16>
    %74 = vector.shape_cast %73 : vector<1x32x32xbf16> to vector<32x32xbf16>
    %cst_39 = arith.constant dense<0.000000e+00> : vector<256x32xf32>
    %75 = tpu.matmul %72, %74, %cst_39 {dimension_numbers = #tpu.dot_dimension_numbers<[1], [0], [0], [1], [0, 0, 1, 1], [], []>} : vector<256x32xbf16>, vector<32x32xbf16>, vector<256x32xf32> -> vector<256x32xf32>
    %76 = vector.extract_strided_slice %33 {offsets = [0, 32], sizes = [256, 32], strides = [1, 1]} : vector<256x64xf32> to vector<256x32xf32>
    %77 = arith.addf %75, %76 : vector<256x32xf32>
    %c1_40 = arith.constant 1 : index
    %c0_41 = arith.constant 0 : index
    %c0_42 = arith.constant 0 : index
    %78 = vector.load %arg8[%c1_40, %c0_41, %c0_42] : memref<2x1x32xf32, #tpu.memory_space<vmem>>, vector<1x1x32xf32>
    %79 = vector.shape_cast %78 : vector<1x1x32xf32> to vector<1x32xf32>
    %80 = vector.broadcast %79 : vector<1x32xf32> to vector<256x32xf32>
    %81 = arith.addf %77, %80 : vector<256x32xf32>
    %c1_43 = arith.constant 1 : index
    %c0_44 = arith.constant 0 : index
    %c0_45 = arith.constant 0 : index
    %82 = vector.load %arg9[%c1_43, %c0_44, %c0_45] : memref<2x1x32xf32, #tpu.memory_space<vmem>>, vector<1x1x32xf32>
    %83 = vector.shape_cast %82 : vector<1x1x32xf32> to vector<1x32xf32>
    %c1_46 = arith.constant 1 : index
    %c0_47 = arith.constant 0 : index
    %c0_48 = arith.constant 0 : index
    %84 = vector.load %arg10[%c1_46, %c0_47, %c0_48] : memref<2x1x32xf32, #tpu.memory_space<vmem>>, vector<1x1x32xf32>
    %85 = vector.shape_cast %84 : vector<1x1x32xf32> to vector<1x32xf32>
    %cst_49 = arith.constant dense<0.000000e+00> : vector<256xf32>
    %86 = vector.multi_reduction <add>, %81, %cst_49 [1] : vector<256x32xf32> to vector<256xf32>
    %87 = vector.shape_cast %86 : vector<256xf32> to vector<256x1xf32>
    %cst_50 = arith.constant 3.200000e+01 : f32
    %88 = vector.broadcast %cst_50 : f32 to vector<256x1xf32>
    %89 = arith.divf %87, %88 : vector<256x1xf32>
    %90 = vector.broadcast %89 : vector<256x1xf32> to vector<256x32xf32>
    %91 = arith.subf %81, %90 : vector<256x32xf32>
    %92 = arith.mulf %91, %91 : vector<256x32xf32>
    %cst_51 = arith.constant dense<0.000000e+00> : vector<256xf32>
    %93 = vector.multi_reduction <add>, %92, %cst_51 [1] : vector<256x32xf32> to vector<256xf32>
    %94 = vector.shape_cast %93 : vector<256xf32> to vector<256x1xf32>
    %cst_52 = arith.constant 3.200000e+01 : f32
    %95 = vector.broadcast %cst_52 : f32 to vector<256x1xf32>
    %96 = arith.divf %94, %95 : vector<256x1xf32>
    %97 = vector.broadcast %89 : vector<256x1xf32> to vector<256x32xf32>
    %98 = arith.subf %81, %97 : vector<256x32xf32>
    %cst_53 = arith.constant 9.99999974E-6 : f32
    %99 = vector.broadcast %cst_53 : f32 to vector<256x1xf32>
    %100 = arith.addf %96, %99 : vector<256x1xf32>
    %101 = math.rsqrt %100 : vector<256x1xf32>
    %102 = vector.broadcast %101 : vector<256x1xf32> to vector<256x32xf32>
    %103 = arith.mulf %98, %102 : vector<256x32xf32>
    %104 = vector.broadcast %83 : vector<1x32xf32> to vector<256x32xf32>
    %105 = arith.mulf %103, %104 : vector<256x32xf32>
    %106 = vector.broadcast %85 : vector<1x32xf32> to vector<256x32xf32>
    %107 = arith.addf %105, %106 : vector<256x32xf32>
    %cst_54 = arith.constant 0.000000e+00 : f32
    %108 = vector.broadcast %cst_54 : f32 to vector<256x32xf32>
    %109 = arith.maximumf %107, %108 : vector<256x32xf32>
    %110 = arith.truncf %109 : vector<256x32xf32> to vector<256x32xbf16>
    %c0_55 = arith.constant 0 : index
    %c0_56 = arith.constant 0 : index
    %111 = vector.load %arg11[%c0_55, %c0_56] : memref<32x128xbf16, #tpu.memory_space<vmem>>, vector<32x128xbf16>
    %cst_57 = arith.constant dense<0.000000e+00> : vector<256x128xf32>
    %112 = tpu.matmul %110, %111, %cst_57 {dimension_numbers = #tpu.dot_dimension_numbers<[1], [0], [0], [1], [0, 0, 1, 1], [], []>} : vector<256x32xbf16>, vector<32x128xbf16>, vector<256x128xf32> -> vector<256x128xf32>
    %c0_58 = arith.constant 0 : index
    %c0_59 = arith.constant 0 : index
    %113 = vector.load %arg12[%c0_58, %c0_59] : memref<1x128xf32, #tpu.memory_space<vmem>>, vector<1x128xf32>
    %114 = vector.broadcast %113 : vector<1x128xf32> to vector<256x128xf32>
    %115 = arith.addf %112, %114 : vector<256x128xf32>
    %cst_60 = arith.constant 0.000000e+00 : f32
    %116 = vector.broadcast %cst_60 : f32 to vector<256x128xf32>
    %117 = arith.maximumf %115, %116 : vector<256x128xf32>
    %c0_61 = arith.constant 0 : index
    %c0_62 = arith.constant 0 : index
    %118 = vector.load %arg13[%c0_61, %c0_62] : memref<256x128xf32, #tpu.memory_space<vmem>>, vector<256x128xf32>
    tpu.vector_store %arg13[%c0_61, %c0_62], %117 {strides = array<i32>} : memref<256x128xf32, #tpu.memory_space<vmem>>, vector<256x128xf32>,
    return
  }
  func.func @transform_0(%arg0: i32) -> (i32, i32) {
    %c0_i32 = arith.constant 0 : i32
    %c0_i32_0 = arith.constant 0 : i32
    return %arg0, %c0_i32 : i32, i32
  }
  func.func @transform_1(%arg0: i32) -> (i32, i32) {
    %c0_i32 = arith.constant 0 : i32
    %c0_i32_0 = arith.constant 0 : i32
    %c0_i32_1 = arith.constant 0 : i32
    return %c0_i32, %c0_i32_0 : i32, i32
  }
  func.func @transform_2(%arg0: i32) -> (i32, i32) {
    %c0_i32 = arith.constant 0 : i32
    %c0_i32_0 = arith.constant 0 : i32
    %c0_i32_1 = arith.constant 0 : i32
    return %c0_i32, %c0_i32_0 : i32, i32
  }
  func.func @transform_3(%arg0: i32) -> (i32, i32) {
    %c0_i32 = arith.constant 0 : i32
    %c0_i32_0 = arith.constant 0 : i32
    %c0_i32_1 = arith.constant 0 : i32
    return %c0_i32, %c0_i32_0 : i32, i32
  }
  func.func @transform_4(%arg0: i32) -> (i32, i32) {
    %c0_i32 = arith.constant 0 : i32
    %c0_i32_0 = arith.constant 0 : i32
    %c0_i32_1 = arith.constant 0 : i32
    return %c0_i32, %c0_i32_0 : i32, i32
  }
  func.func @transform_5(%arg0: i32) -> (i32, i32, i32) {
    %c0_i32 = arith.constant 0 : i32
    %c0_i32_0 = arith.constant 0 : i32
    %c0_i32_1 = arith.constant 0 : i32
    %c0_i32_2 = arith.constant 0 : i32
    return %c0_i32, %c0_i32_0, %c0_i32_1 : i32, i32, i32
  }
  func.func @transform_6(%arg0: i32) -> (i32, i32) {
    %c0_i32 = arith.constant 0 : i32
    %c0_i32_0 = arith.constant 0 : i32
    %c0_i32_1 = arith.constant 0 : i32
    return %c0_i32, %c0_i32_0 : i32, i32
  }
  func.func @transform_7(%arg0: i32) -> (i32, i32, i32) {
    %c0_i32 = arith.constant 0 : i32
    %c0_i32_0 = arith.constant 0 : i32
    %c0_i32_1 = arith.constant 0 : i32
    %c0_i32_2 = arith.constant 0 : i32
    return %c0_i32, %c0_i32_0, %c0_i32_1 : i32, i32, i32
  }
  func.func @transform_8(%arg0: i32) -> (i32, i32, i32) {
    %c0_i32 = arith.constant 0 : i32
    %c0_i32_0 = arith.constant 0 : i32
    %c0_i32_1 = arith.constant 0 : i32
    %c0_i32_2 = arith.constant 0 : i32
    return %c0_i32, %c0_i32_0, %c0_i32_1 : i32, i32, i32
  }
  func.func @transform_9(%arg0: i32) -> (i32, i32, i32) {
    %c0_i32 = arith.constant 0 : i32
    %c0_i32_0 = arith.constant 0 : i32
    %c0_i32_1 = arith.constant 0 : i32
    %c0_i32_2 = arith.constant 0 : i32
    return %c0_i32, %c0_i32_0, %c0_i32_1 : i32, i32, i32
  }
  func.func @transform_10(%arg0: i32) -> (i32, i32) {
    %c0_i32 = arith.constant 0 : i32
    %c0_i32_0 = arith.constant 0 : i32
    %c0_i32_1 = arith.constant 0 : i32
    return %c0_i32, %c0_i32_0 : i32, i32
  }
  func.func @transform_11(%arg0: i32) -> (i32, i32) {
    %c0_i32 = arith.constant 0 : i32
    %c0_i32_0 = arith.constant 0 : i32
    %c0_i32_1 = arith.constant 0 : i32
    return %c0_i32, %c0_i32_0 : i32, i32
  }
  func.func @transform_12(%arg0: i32) -> (i32, i32) {
    %c0_i32 = arith.constant 0 : i32
    %c0_i32_0 = arith.constant 0 : i32
    return %arg0, %c0_i32 : i32, i32
  }
}

</mosaic_0001>

<llo_original>
// kernel: tpu_custom_call.1
$region0: #{tpu_custom_call.1}
  #allocation0 [shape = 'u32[]', space=smem, size = 0x4, offset = 0x4, fixed_abs, tag = 'smem constant byte address 0x4 - core index']
  #allocation1 [shape = 'u32[144,128]{1,0:T(1,128)}', space=vmem, size = 0x12000, scoped, tag = 'internal scratch']
  %s0 = inlined_call_operand.vmem [shape: bf16[1024,8], index: 0, kind: input, shape index: {}]
  %s1 = inlined_call_operand.vmem [shape: bf16[8,32], index: 1, kind: input, shape index: {}]
  %s2 = inlined_call_operand.vmem [shape: f32[1,32], index: 2, kind: input, shape index: {}]
  %s3 = inlined_call_operand.vmem [shape: f32[1,32], index: 3, kind: input, shape index: {}]
  %s4 = inlined_call_operand.vmem [shape: f32[1,32], index: 4, kind: input, shape index: {}]
  %s5 = inlined_call_operand.vmem [shape: bf16[2,32,32], index: 5, kind: input, shape index: {}]
  %s6 = inlined_call_operand.vmem [shape: bf16[8,64], index: 6, kind: input, shape index: {}]
  %s7 = inlined_call_operand.vmem [shape: f32[2,1,32], index: 7, kind: input, shape index: {}]
  %s8 = inlined_call_operand.vmem [shape: f32[2,1,32], index: 8, kind: input, shape index: {}]
  %s9 = inlined_call_operand.vmem [shape: f32[2,1,32], index: 9, kind: input, shape index: {}]
  %s10 = inlined_call_operand.vmem [shape: bf16[32,128], index: 10, kind: input, shape index: {}]
  %s11 = inlined_call_operand.vmem [shape: f32[1,128], index: 11, kind: input, shape index: {}]
  %s12 = inlined_call_operand.hbm [shape: f32[1024,128], index: 12, kind: output, shape index: {}]
  %s13 = sld [smem:[#allocation0]]
  $region81: #{tpu_custom_call.1} parent=0
    _
  %s15 = ssub.s32 1, %s13
  %s16 = scalar_select 0, %s15, %s13
  $region1: #{tpu_custom_call.1} parent=0
    #allocation2 [shape = 'u8[262144]{0}', space=vmem, size = 0x40000, scoped, tag = 'output window, operand 0']
    #allocation3 [shape = 's32[2]{0}', space=sflag, size = 0x8, scoped, tag = 'scoped memory for tpu_custom_call.1']
    %17 = vsyncpa [#allocation3], 0
    %s18 = scalar_lea.sflag [#allocation3], 1
    %19 = vsyncpa %s18, 0
    loop: start=0, step=1, limit=6
    $region2: #{tpu_custom_call.1} parent=1 // loop_pre_header
      _
    $region3: #{tpu_custom_call.1} parent=1 // loop_header
      %s21 = sphi 0, %s25
      %p22 = scmp.ge.s32.totalorder %s21, 6
      %s31 = sphi 0, %s33
      %s34 = sphi 0, %s31
      %s35 = sphi 0, %s34
      %s51 = sphi 0, %s35
      %s55 = sphi 0, %s55
      %s57 = sphi 0, %s55
      %s58 = sphi 0, %s57
      %s72 = sphi 0, %s58
      %s76 = sphi 0, %s76
      %s78 = sphi 0, %s76
      %s79 = sphi 0, %s78
      %s93 = sphi 0, %s79
      %s97 = sphi 0, %s97
      %s99 = sphi 0, %s97
      %s100 = sphi 0, %s99
      %s114 = sphi 0, %s100
      %s118 = sphi 0, %s118
      %s120 = sphi 0, %s118
      %s121 = sphi 0, %s120
      %s135 = sphi 0, %s121
      %s139 = sphi 0, %s139
      %s141 = sphi 0, %s139
      %s142 = sphi 0, %s141
      %s156 = sphi 0, %s142
      %s160 = sphi 0, %s160
      %s162 = sphi 0, %s160
      %s163 = sphi 0, %s162
      %s177 = sphi 0, %s163
      %s181 = sphi 0, %s181
      %s183 = sphi 0, %s181
      %s184 = sphi 0, %s183
      %s198 = sphi 0, %s184
      %s202 = sphi 0, %s202
      %s204 = sphi 0, %s202
      %s205 = sphi 0, %s204
      %s219 = sphi 0, %s205
      %s223 = sphi 0, %s223
      %s225 = sphi 0, %s223
      %s226 = sphi 0, %s225
      %s240 = sphi 0, %s226
      %s244 = sphi 0, %s244
      %s246 = sphi 0, %s244
      %s247 = sphi 0, %s246
      %s261 = sphi 0, %s247
      %s265 = sphi 0, %s265
      %s267 = sphi 0, %s265
      %s268 = sphi 0, %s267
      %s282 = sphi 0, %s268
      %s288 = sphi 0, %s290
      %s291 = sphi 0, %s288
      %s292 = sphi 0, %s291
      %s308 = sphi 0, %s292
    $region4: #{tpu_custom_call.1} parent=1 // loop_header_branch
      %24 = sbr.rel (%p22) target = $region8
    $region5: #{tpu_custom_call.1} parent=1 // loop_body
      %s26 = ssub.s32 %s21, 1
      %s27 = ssub.s32 %s21, 2
      %s28 = sadd.s32 %s21, 1
      %s29 = ssub.s32 %s21, %s28
      %p30 = scmp.eq.s32.totalorder %s29, 0
      %s32 = sadd.s32 %s31, 1
      %s33 = scalar_select %p30, %s31, %s32
      %p36 = pneg %p30
      %p37 = scmp.eq.s32.totalorder %s21, 3
      %p38 = por %p36, %p37
      %p39 = scmp.ne.s32.totalorder %s31, %s34
      %p40 = scmp.eq.s32.totalorder %s21, 0
      %p41 = por %p39, %p40
      %p42 = scmp.ne.s32.totalorder %s31, %s34
      %p43 = scmp.eq.s32.totalorder %s26, 3
      %p44 = por %p42, %p43
      %p45 = scmp.ne.s32.totalorder %s34, %s35
      %p46 = scmp.eq.s32.totalorder %s26, 0
      %p47 = por %p45, %p46
      %p48 = scmp.ne.s32.totalorder %s34, %s35
      %p49 = scmp.eq.s32.totalorder %s27, 3
      %p50 = por %p48, %p49
      %p52 = scmp.ne.s32.totalorder %s35, %s51
      %p53 = scmp.eq.s32.totalorder %s27, 0
      %p54 = por %p52, %p53
      %s56 = sadd.s32 %s55, 1
      %p59 = scmp.eq.s32.totalorder %s21, 3
      %p60 = scmp.ne.s32.totalorder %s55, %s57
      %p61 = scmp.eq.s32.totalorder %s21, 0
      %p62 = por %p60, %p61
      %p63 = scmp.ne.s32.totalorder %s55, %s57
      %p64 = scmp.eq.s32.totalorder %s26, 3
      %p65 = por %p63, %p64
      %p66 = scmp.ne.s32.totalorder %s57, %s58
      %p67 = scmp.eq.s32.totalorder %s26, 0
      %p68 = por %p66, %p67
      %p69 = scmp.ne.s32.totalorder %s57, %s58
      %p70 = scmp.eq.s32.totalorder %s27, 3
      %p71 = por %p69, %p70
      %p73 = scmp.ne.s32.totalorder %s58, %s72
      %p74 = scmp.eq.s32.totalorder %s27, 0
      %p75 = por %p73, %p74
      %s77 = sadd.s32 %s76, 1
      %p80 = scmp.eq.s32.totalorder %s21, 3
      %p81 = scmp.ne.s32.totalorder %s76, %s78
      %p82 = scmp.eq.s32.totalorder %s21, 0
      %p83 = por %p81, %p82
      %p84 = scmp.ne.s32.totalorder %s76, %s78
      %p85 = scmp.eq.s32.totalorder %s26, 3
      %p86 = por %p84, %p85
      %p87 = scmp.ne.s32.totalorder %s78, %s79
      %p88 = scmp.eq.s32.totalorder %s26, 0
      %p89 = por %p87, %p88
      %p90 = scmp.ne.s32.totalorder %s78, %s79
      %p91 = scmp.eq.s32.totalorder %s27, 3
      %p92 = por %p90, %p91
      %p94 = scmp.ne.s32.totalorder %s79, %s93
      %p95 = scmp.eq.s32.totalorder %s27, 0
      %p96 = por %p94, %p95
      %s98 = sadd.s32 %s97, 1
      %p101 = scmp.eq.s32.totalorder %s21, 3
      %p102 = scmp.ne.s32.totalorder %s97, %s99
      %p103 = scmp.eq.s32.totalorder %s21, 0
      %p104 = por %p102, %p103
      %p105 = scmp.ne.s32.totalorder %s97, %s99
      %p106 = scmp.eq.s32.totalorder %s26, 3
      %p107 = por %p105, %p106
      %p108 = scmp.ne.s32.totalorder %s99, %s100
      %p109 = scmp.eq.s32.totalorder %s26, 0
      %p110 = por %p108, %p109
      %p111 = scmp.ne.s32.totalorder %s99, %s100
      %p112 = scmp.eq.s32.totalorder %s27, 3
      %p113 = por %p111, %p112
      %p115 = scmp.ne.s32.totalorder %s100, %s114
      %p116 = scmp.eq.s32.totalorder %s27, 0
      %p117 = por %p115, %p116
      %s119 = sadd.s32 %s118, 1
      %p122 = scmp.eq.s32.totalorder %s21, 3
      %p123 = scmp.ne.s32.totalorder %s118, %s120
      %p124 = scmp.eq.s32.totalorder %s21, 0
      %p125 = por %p123, %p124
      %p126 = scmp.ne.s32.totalorder %s118, %s120
      %p127 = scmp.eq.s32.totalorder %s26, 3
      %p128 = por %p126, %p127
      %p129 = scmp.ne.s32.totalorder %s120, %s121
      %p130 = scmp.eq.s32.totalorder %s26, 0
      %p131 = por %p129, %p130
      %p132 = scmp.ne.s32.totalorder %s120, %s121
      %p133 = scmp.eq.s32.totalorder %s27, 3
      %p134 = por %p132, %p133
      %p136 = scmp.ne.s32.totalorder %s121, %s135
      %p137 = scmp.eq.s32.totalorder %s27, 0
      %p138 = por %p136, %p137
      %s140 = sadd.s32 %s139, 1
      %p143 = scmp.eq.s32.totalorder %s21, 3
      %p144 = scmp.ne.s32.totalorder %s139, %s141
      %p145 = scmp.eq.s32.totalorder %s21, 0
      %p146 = por %p144, %p145
      %p147 = scmp.ne.s32.totalorder %s139, %s141
      %p148 = scmp.eq.s32.totalorder %s26, 3
      %p149 = por %p147, %p148
      %p150 = scmp.ne.s32.totalorder %s141, %s142
      %p151 = scmp.eq.s32.totalorder %s26, 0
      %p152 = por %p150, %p151
      %p153 = scmp.ne.s32.totalorder %s141, %s142
      %p154 = scmp.eq.s32.totalorder %s27, 3
      %p155 = por %p153, %p154
      %p157 = scmp.ne.s32.totalorder %s142, %s156
      %p158 = scmp.eq.s32.totalorder %s27, 0
      %p159 = por %p157, %p158
      %s161 = sadd.s32 %s160, 1
      %p164 = scmp.eq.s32.totalorder %s21, 3
      %p165 = scmp.ne.s32.totalorder %s160, %s162
      %p166 = scmp.eq.s32.totalorder %s21, 0
      %p167 = por %p165, %p166
      %p168 = scmp.ne.s32.totalorder %s160, %s162
      %p169 = scmp.eq.s32.totalorder %s26, 3
      %p170 = por %p168, %p169
      %p171 = scmp.ne.s32.totalorder %s162, %s163
      %p172 = scmp.eq.s32.totalorder %s26, 0
      %p173 = por %p171, %p172
      %p174 = scmp.ne.s32.totalorder %s162, %s163
      %p175 = scmp.eq.s32.totalorder %s27, 3
      %p176 = por %p174, %p175
      %p178 = scmp.ne.s32.totalorder %s163, %s177
      %p179 = scmp.eq.s32.totalorder %s27, 0
      %p180 = por %p178, %p179
      %s182 = sadd.s32 %s181, 1
      %p185 = scmp.eq.s32.totalorder %s21, 3
      %p186 = scmp.ne.s32.totalorder %s181, %s183
      %p187 = scmp.eq.s32.totalorder %s21, 0
      %p188 = por %p186, %p187
      %p189 = scmp.ne.s32.totalorder %s181, %s183
      %p190 = scmp.eq.s32.totalorder %s26, 3
      %p191 = por %p189, %p190
      %p192 = scmp.ne.s32.totalorder %s183, %s184
      %p193 = scmp.eq.s32.totalorder %s26, 0
      %p194 = por %p192, %p193
      %p195 = scmp.ne.s32.totalorder %s183, %s184
      %p196 = scmp.eq.s32.totalorder %s27, 3
      %p197 = por %p195, %p196
      %p199 = scmp.ne.s32.totalorder %s184, %s198
      %p200 = scmp.eq.s32.totalorder %s27, 0
      %p201 = por %p199, %p200
      %s203 = sadd.s32 %s202, 1
      %p206 = scmp.eq.s32.totalorder %s21, 3
      %p207 = scmp.ne.s32.totalorder %s202, %s204
      %p208 = scmp.eq.s32.totalorder %s21, 0
      %p209 = por %p207, %p208
      %p210 = scmp.ne.s32.totalorder %s202, %s204
      %p211 = scmp.eq.s32.totalorder %s26, 3
      %p212 = por %p210, %p211
      %p213 = scmp.ne.s32.totalorder %s204, %s205
      %p214 = scmp.eq.s32.totalorder %s26, 0
      %p215 = por %p213, %p214
      %p216 = scmp.ne.s32.totalorder %s204, %s205
      %p217 = scmp.eq.s32.totalorder %s27, 3
      %p218 = por %p216, %p217
      %p220 = scmp.ne.s32.totalorder %s205, %s219
      %p221 = scmp.eq.s32.totalorder %s27, 0
      %p222 = por %p220, %p221
      %s224 = sadd.s32 %s223, 1
      %p227 = scmp.eq.s32.totalorder %s21, 3
      %p228 = scmp.ne.s32.totalorder %s223, %s225
      %p229 = scmp.eq.s32.totalorder %s21, 0
      %p230 = por %p228, %p229
      %p231 = scmp.ne.s32.totalorder %s223, %s225
      %p232 = scmp.eq.s32.totalorder %s26, 3
      %p233 = por %p231, %p232
      %p234 = scmp.ne.s32.totalorder %s225, %s226
      %p235 = scmp.eq.s32.totalorder %s26, 0
      %p236 = por %p234, %p235
      %p237 = scmp.ne.s32.totalorder %s225, %s226
      %p238 = scmp.eq.s32.totalorder %s27, 3
      %p239 = por %p237, %p238
      %p241 = scmp.ne.s32.totalorder %s226, %s240
      %p242 = scmp.eq.s32.totalorder %s27, 0
      %p243 = por %p241, %p242
      %s245 = sadd.s32 %s244, 1
      %p248 = scmp.eq.s32.totalorder %s21, 3
      %p249 = scmp.ne.s32.totalorder %s244, %s246
      %p250 = scmp.eq.s32.totalorder %s21, 0
      %p251 = por %p249, %p250
      %p252 = scmp.ne.s32.totalorder %s244, %s246
      %p253 = scmp.eq.s32.totalorder %s26, 3
      %p254 = por %p252, %p253
      %p255 = scmp.ne.s32.totalorder %s246, %s247
      %p256 = scmp.eq.s32.totalorder %s26, 0
      %p257 = por %p255, %p256
      %p258 = scmp.ne.s32.totalorder %s246, %s247
      %p259 = scmp.eq.s32.totalorder %s27, 3
      %p260 = por %p258, %p259
      %p262 = scmp.ne.s32.totalorder %s247, %s261
      %p263 = scmp.eq.s32.totalorder %s27, 0
      %p264 = por %p262, %p263
      %s266 = sadd.s32 %s265, 1
      %p269 = scmp.eq.s32.totalorder %s21, 3
      %p270 = scmp.ne.s32.totalorder %s265, %s267
      %p271 = scmp.eq.s32.totalorder %s21, 0
      %p272 = por %p270, %p271
      %p273 = scmp.ne.s32.totalorder %s265, %s267
      %p274 = scmp.eq.s32.totalorder %s26, 3
      %p275 = por %p273, %p274
      %p276 = scmp.ne.s32.totalorder %s267, %s268
      %p277 = scmp.eq.s32.totalorder %s26, 0
      %p278 = por %p276, %p277
      %p279 = scmp.ne.s32.totalorder %s267, %s268
      %p280 = scmp.eq.s32.totalorder %s27, 3
      %p281 = por %p279, %p280
      %p283 = scmp.ne.s32.totalorder %s268, %s282
      %p284 = scmp.eq.s32.totalorder %s27, 0
      %p285 = por %p283, %p284
      %s286 = ssub.s32 %s21, %s28
      %p287 = scmp.eq.s32.totalorder %s286, 0
      %s289 = sadd.s32 %s288, 1
      %s290 = scalar_select %p287, %s288, %s289
      %p293 = pneg %p287
      %p294 = scmp.eq.s32.totalorder %s21, 3
      %p295 = por %p293, %p294
      %p296 = scmp.ne.s32.totalorder %s288, %s291
      %p297 = scmp.eq.s32.totalorder %s21, 0
      %p298 = por %p296, %p297
      %p299 = scmp.ne.s32.totalorder %s288, %s291
      %p300 = scmp.eq.s32.totalorder %s26, 3
      %p301 = por %p299, %p300
      %p302 = scmp.ne.s32.totalorder %s291, %s292
      %p303 = scmp.eq.s32.totalorder %s26, 0
      %p304 = por %p302, %p303
      %p305 = scmp.ne.s32.totalorder %s291, %s292
      %p306 = scmp.eq.s32.totalorder %s27, 3
      %p307 = por %p305, %p306
      %p309 = scmp.ne.s32.totalorder %s292, %s308
      %p310 = scmp.eq.s32.totalorder %s27, 0
      %p311 = por %p309, %p310
      %p312 = scmp.le.s32.totalorder 1, %s21
      %p313 = scmp.lt.s32.totalorder %s21, 5
      %p314 = pnand %p312, %p313
      %p315 = pneg %p314
      // Predicated region
      $region9: #{tpu_custom_call.1} parent=5 // pred_check
        _
      $region10: #{tpu_custom_call.1} parent=5 // pred_check_branch
        %317 = sbr.rel (%p314) target = $region12
      $region11: #{tpu_custom_call.1} parent=5 // pred_region
        %s318 = ssub.s32 %s21, 1
        // Predicated region
        $region13: #{tpu_custom_call.1} parent=11 // pred_check
          %p319 = pneg %p68
        $region14: #{tpu_custom_call.1} parent=11 // pred_check_branch
          %321 = sbr.rel (%p319) target = $region16
        $region15: #{tpu_custom_call.1} parent=11 // pred_region
          _
        $region16: #{tpu_custom_call.1} parent=11 // pred_fallthru
          _
        // Predicated region
        $region17: #{tpu_custom_call.1} parent=11 // pred_check
          %p322 = pneg %p89
        $region18: #{tpu_custom_call.1} parent=11 // pred_check_branch
          %324 = sbr.rel (%p322) target = $region20
        $region19: #{tpu_custom_call.1} parent=11 // pred_region
          _
        $region20: #{tpu_custom_call.1} parent=11 // pred_fallthru
          _
        // Predicated region
        $region21: #{tpu_custom_call.1} parent=11 // pred_check
          %p325 = pneg %p110
        $region22: #{tpu_custom_call.1} parent=11 // pred_check_branch
          %327 = sbr.rel (%p325) target = $region24
        $region23: #{tpu_custom_call.1} parent=11 // pred_region
          _
        $region24: #{tpu_custom_call.1} parent=11 // pred_fallthru
          _
        // Predicated region
        $region25: #{tpu_custom_call.1} parent=11 // pred_check
          %p328 = pneg %p131
        $region26: #{tpu_custom_call.1} parent=11 // pred_check_branch
          %330 = sbr.rel (%p328) target = $region28
        $region27: #{tpu_custom_call.1} parent=11 // pred_region
          _
        $region28: #{tpu_custom_call.1} parent=11 // pred_fallthru
          _
        // Predicated region
        $region29: #{tpu_custom_call.1} parent=11 // pred_check
          %p331 = pneg %p152
        $region30: #{tpu_custom_call.1} parent=11 // pred_check_branch
          %333 = sbr.rel (%p331) target = $region32
        $region31: #{tpu_custom_call.1} parent=11 // pred_region
          _
        $region32: #{tpu_custom_call.1} parent=11 // pred_fallthru
          _
        // Predicated region
        $region33: #{tpu_custom_call.1} parent=11 // pred_check
          %p334 = pneg %p173
        $region34: #{tpu_custom_call.1} parent=11 // pred_check_branch
          %336 = sbr.rel (%p334) target = $region36
        $region35: #{tpu_custom_call.1} parent=11 // pred_region
          _
        $region36: #{tpu_custom_call.1} parent=11 // pred_fallthru
          _
        // Predicated region
        $region37: #{tpu_custom_call.1} parent=11 // pred_check
          %p337 = pneg %p194
        $region38: #{tpu_custom_call.1} parent=11 // pred_check_branch
          %339 = sbr.rel (%p337) target = $region40
        $region39: #{tpu_custom_call.1} parent=11 // pred_region
          _
        $region40: #{tpu_custom_call.1} parent=11 // pred_fallthru
          _
        // Predicated region
        $region41: #{tpu_custom_call.1} parent=11 // pred_check
          %p340 = pneg %p215
        $region42: #{tpu_custom_call.1} parent=11 // pred_check_branch
          %342 = sbr.rel (%p340) target = $region44
        $region43: #{tpu_custom_call.1} parent=11 // pred_region
          _
        $region44: #{tpu_custom_call.1} parent=11 // pred_fallthru
          _
        // Predicated region
        $region45: #{tpu_custom_call.1} parent=11 // pred_check
          %p343 = pneg %p236
        $region46: #{tpu_custom_call.1} parent=11 // pred_check_branch
          %345 = sbr.rel (%p343) target = $region48
        $region47: #{tpu_custom_call.1} parent=11 // pred_region
          _
        $region48: #{tpu_custom_call.1} parent=11 // pred_fallthru
          _
        // Predicated region
        $region49: #{tpu_custom_call.1} parent=11 // pred_check
          %p346 = pneg %p257
        $region50: #{tpu_custom_call.1} parent=11 // pred_check_branch
          %348 = sbr.rel (%p346) target = $region52
        $region51: #{tpu_custom_call.1} parent=11 // pred_region
          _
        $region52: #{tpu_custom_call.1} parent=11 // pred_fallthru
          _
        // Predicated region
        $region53: #{tpu_custom_call.1} parent=11 // pred_check
          %p349 = pneg %p278
        $region54: #{tpu_custom_call.1} parent=11 // pred_check_branch
          %351 = sbr.rel (%p349) target = $region56
        $region55: #{tpu_custom_call.1} parent=11 // pred_region
          _
        $region56: #{tpu_custom_call.1} parent=11 // pred_fallthru
          _
      $region12: #{tpu_custom_call.1} parent=5 // pred_fallthru
        _
      %p352 = scmp.lt.s32.totalorder %s21, 4
      // Predicated region
      $region57: #{tpu_custom_call.1} parent=5 // pred_check
        %p353 = pneg %p352
      $region58: #{tpu_custom_call.1} parent=5 // pred_check_branch
        %355 = sbr.rel (%p353) target = $region60
      $region59: #{tpu_custom_call.1} parent=5 // pred_region
        // Predicated region
        $region61: #{tpu_custom_call.1} parent=59 // pred_check
          %p356 = pneg %p41
        $region62: #{tpu_custom_call.1} parent=59 // pred_check_branch
          %358 = sbr.rel (%p356) target = $region64
        $region63: #{tpu_custom_call.1} parent=59 // pred_region
          %s359 = smul.u32 32, %s21
          %p360 = scmp.lt.s32.totalorder %s359, 127
          %s361 = scalar_select %p360, %s359, 127
          %s362 = smul.addr %s361, 4
          %s363 = scalar_lea.vmem %s0, %s362
          %s364 = smul.u32 32, %s21
        $region64: #{tpu_custom_call.1} parent=59 // pred_fallthru
          _
      $region60: #{tpu_custom_call.1} parent=5 // pred_fallthru
        _
      %p365 = scmp.le.s32.totalorder 1, %s21
      %p366 = scmp.lt.s32.totalorder %s21, 5
      %p367 = pnand %p365, %p366
      %p368 = pneg %p367
      // Predicated region
      $region65: #{tpu_custom_call.1} parent=5 // pred_check
        _
      $region66: #{tpu_custom_call.1} parent=5 // pred_check_branch
        %370 = sbr.rel (%p367) target = $region68
      $region67: #{tpu_custom_call.1} parent=5 // pred_region
        %s371 = ssub.s32 %s21, 1
        %s372 = smul.u32 32, %s26
        %p373 = scmp.lt.s32.totalorder %s372, 127
        %s374 = scalar_select %p373, %s372, 127
        %s375 = smul.addr %s374, 4
        %s376 = scalar_lea.vmem %s0, %s375
        %p377 = pneg %p47
        %p378 = pneg %p44
        %p379 = pneg %p68
        %p380 = pneg %p65
        %p381 = pneg %p89
        %p382 = pneg %p86
        %p383 = pneg %p110
        %p384 = pneg %p107
        %p385 = pneg %p131
        %p386 = pneg %p128
        %p387 = pneg %p152
        %p388 = pneg %p149
        %p389 = pneg %p173
        %p390 = pneg %p170
        %p391 = pneg %p194
        %p392 = pneg %p191
        %p393 = pneg %p215
        %p394 = pneg %p212
        %p395 = pneg %p236
        %p396 = pneg %p233
        %p397 = pneg %p257
        %p398 = pneg %p254
        %p399 = pneg %p278
        %p400 = pneg %p275
        %p401 = pneg %p304
        %p402 = pneg %p301
        %s403 = sand.u32 %s291, 1
        %s404 = scalar_lea.sflag [#allocation3], %s403
        %s405 = sand.u32 %s291, 1
        %s406 = smul.addr %s405, 256
        %s407 = scalar_lea.vmem [#allocation2], %s406
        %s408 = smul.u32 32, %s26
        %p409 = scmp.lt.s32.totalorder %s408, 127
        %s410 = scalar_select %p409, %s408, 127
        %s411 = smul.addr %s410, 4
        %s412 = scalar_lea.vmem %s0, %s411
        %s413 = smul.u32 32, %s26
        %s414 = smul.u32 32, %s26
        %v416 = vld [vmem:[%s412] sm:$0xf]
        %v417 = vld [vmem:[%s412 + $0x4] sm:$0xf]
        %v418 = vld [vmem:[%s412 + $0x8] sm:$0xf]
        %v419 = vld [vmem:[%s412 + $0xc] sm:$0xf]
        %v420 = vld [vmem:[%s412 + $0x10] sm:$0xf]
        %v421 = vld [vmem:[%s412 + $0x14] sm:$0xf]
        %v422 = vld [vmem:[%s412 + $0x18] sm:$0xf]
        %v423 = vld [vmem:[%s412 + $0x1c] sm:$0xf]
        %v424 = vld [vmem:[%s412 + $0x20] sm:$0xf]
        %v425 = vld [vmem:[%s412 + $0x24] sm:$0xf]
        %v426 = vld [vmem:[%s412 + $0x28] sm:$0xf]
        %v427 = vld [vmem:[%s412 + $0x2c] sm:$0xf]
        %v428 = vld [vmem:[%s412 + $0x30] sm:$0xf]
        %v429 = vld [vmem:[%s412 + $0x34] sm:$0xf]
        %v430 = vld [vmem:[%s412 + $0x38] sm:$0xf]
        %v431 = vld [vmem:[%s412 + $0x3c] sm:$0xf]
        %v432 = vld [vmem:[%s412 + $0x40] sm:$0xf]
        %v433 = vld [vmem:[%s412 + $0x44] sm:$0xf]
        %v434 = vld [vmem:[%s412 + $0x48] sm:$0xf]
        %v435 = vld [vmem:[%s412 + $0x4c] sm:$0xf]
        %v436 = vld [vmem:[%s412 + $0x50] sm:$0xf]
        %v437 = vld [vmem:[%s412 + $0x54] sm:$0xf]
        %v438 = vld [vmem:[%s412 + $0x58] sm:$0xf]
        %v439 = vld [vmem:[%s412 + $0x5c] sm:$0xf]
        %v440 = vld [vmem:[%s412 + $0x60] sm:$0xf]
        %v441 = vld [vmem:[%s412 + $0x64] sm:$0xf]
        %v442 = vld [vmem:[%s412 + $0x68] sm:$0xf]
        %v443 = vld [vmem:[%s412 + $0x6c] sm:$0xf]
        %v444 = vld [vmem:[%s412 + $0x70] sm:$0xf]
        %v445 = vld [vmem:[%s412 + $0x74] sm:$0xf]
        %v446 = vld [vmem:[%s412 + $0x78] sm:$0xf]
        %v447 = vld [vmem:[%s412 + $0x7c] sm:$0xf]
        %v448 = vld [vmem:[%s1] sm:$0xf]
        %v449 = vld [vmem:[%s2] sm:$0x1]
        %v451 = vlaneseq
        %v452 = vshrl.u32 %v451, 7
        %v453 = vsub.s32 0, %v452
        %v454 = vrot.slane %v449, %v453
        %v488 = vunpack.c.l.b16 %v416
        %v489 = vunpack.c.l.b16 %v417
        %v490 = vunpack.c.l.b16 %v418
        %v491 = vunpack.c.l.b16 %v419
        %v492 = vunpack.c.l.b16 %v420
        %v493 = vunpack.c.l.b16 %v421
        %v494 = vunpack.c.l.b16 %v422
        %v495 = vunpack.c.l.b16 %v423
        %v496 = vunpack.c.l.b16 %v424
        %v497 = vunpack.c.l.b16 %v425
        %v498 = vunpack.c.l.b16 %v426
        %v499 = vunpack.c.l.b16 %v427
        %v500 = vunpack.c.l.b16 %v428
        %v501 = vunpack.c.l.b16 %v429
        %v502 = vunpack.c.l.b16 %v430
        %v503 = vunpack.c.l.b16 %v431
        %v504 = vunpack.c.l.b16 %v432
        %v505 = vunpack.c.l.b16 %v433
        %v506 = vunpack.c.l.b16 %v434
        %v507 = vunpack.c.l.b16 %v435
        %v508 = vunpack.c.l.b16 %v436
        %v509 = vunpack.c.l.b16 %v437
        %v510 = vunpack.c.l.b16 %v438
        %v511 = vunpack.c.l.b16 %v439
        %v512 = vunpack.c.l.b16 %v440
        %v513 = vunpack.c.l.b16 %v441
        %v514 = vunpack.c.l.b16 %v442
        %v515 = vunpack.c.l.b16 %v443
        %v516 = vunpack.c.l.b16 %v444
        %v517 = vunpack.c.l.b16 %v445
        %v518 = vunpack.c.l.b16 %v446
        %v519 = vunpack.c.l.b16 %v447
        %v520 = vpack.c.b16 %v489, %v488
        %v521 = vpack.c.b16 %v491, %v490
        %v522 = vpack.c.b16 %v493, %v492
        %v523 = vpack.c.b16 %v495, %v494
        %v524 = vpack.c.b16 %v497, %v496
        %v525 = vpack.c.b16 %v499, %v498
        %v526 = vpack.c.b16 %v501, %v500
        %v527 = vpack.c.b16 %v503, %v502
        %v528 = vpack.c.b16 %v505, %v504
        %v529 = vpack.c.b16 %v507, %v506
        %v530 = vpack.c.b16 %v509, %v508
        %v531 = vpack.c.b16 %v511, %v510
        %v532 = vpack.c.b16 %v513, %v512
        %v533 = vpack.c.b16 %v515, %v514
        %v534 = vpack.c.b16 %v517, %v516
        %v535 = vpack.c.b16 %v519, %v518
        %vm536 = vcmask 64512
        %v538 = vsel %vm536, %v520, 0
        %v541 = vsel %vm536, %v521, 0
        %v544 = vsel %vm536, %v522, 0
        %v547 = vsel %vm536, %v523, 0
        %v550 = vsel %vm536, %v524, 0
        %v553 = vsel %vm536, %v525, 0
        %v556 = vsel %vm536, %v526, 0
        %v559 = vsel %vm536, %v527, 0
        %v562 = vsel %vm536, %v528, 0
        %v565 = vsel %vm536, %v529, 0
        %v568 = vsel %vm536, %v530, 0
        %v571 = vsel %vm536, %v531, 0
        %v574 = vsel %vm536, %v532, 0
        %v577 = vsel %vm536, %v533, 0
        %v580 = vsel %vm536, %v534, 0
        %v583 = vsel %vm536, %v535, 0
        %vm585 = vcmask 1043456
        %v587 = vsel %vm585, %v448, 0
        %589 = vmatprep.subr.bf16.mxu0 0
        %590 = vmatpush1.bf16.msra.mxu0 0
        %591 = vmatprep.subr.bf16.mxu0 0
        %592 = vmatpush1.bf16.msra.mxu0 0
        %593 = vmatprep.subr.bf16.mxu0 0
        %594 = vmatpush1.bf16.msra.mxu0 0
        %595 = vmatprep.subr.bf16.mxu0 0
        %596 = vmatpush1.bf16.msra.mxu0 0
        %597 = vmatprep.subr.bf16.mxu0 0
        %598 = vmatpush1.bf16.msra.mxu0 0
        %599 = vmatprep.subr.bf16.mxu0 0
        %600 = vmatpush1.bf16.msra.mxu0 0
        %601 = vmatprep.subr.bf16.mxu0 0
        %602 = vmatpush1.bf16.msra.mxu0 0
        %603 = vmatprep.subr.bf16.mxu0 0
        %604 = vmatpush1.bf16.msra.mxu0 %v587
        %605 = vmatprep.subr.bf16.mxu0 0
        %606 = vmatpush2.bf16.msra.mxu0 0
        %607 = vmatprep.subr.bf16.mxu0 0
        %608 = vmatpush2.bf16.msra.mxu0 0
        %609 = vmatprep.subr.bf16.mxu0 0
        %610 = vmatpush2.bf16.msra.mxu0 0
        %611 = vmatprep.subr.bf16.mxu0 0
        %612 = vmatpush2.bf16.msra.mxu0 0
        %613 = vmatprep.subr.bf16.mxu0 0
        %614 = vmatpush2.bf16.msra.mxu0 0
        %615 = vmatprep.subr.bf16.mxu0 0
        %616 = vmatpush2.bf16.msra.mxu0 0
        %617 = vmatprep.subr.bf16.mxu0 0
        %618 = vmatpush2.bf16.msra.mxu0 0
        %619 = vmatprep.subr.bf16.mxu0 0
        %620 = vmatpush2.bf16.msra.mxu0 0
        %621 = vmatprep.mubr.bf16.mxu0 0
        %622 = vmatmul.mubr.bf16.gmra.mxu0 %v538
        %v623 = vpop.f32.mrf.mxu0
        %v624 = vadd.f32 %v454, %v623
        %v625 = vpop.f32.mrf.mxu0
        %v626 = vpop.f32.mrf.mxu0
        %v627 = vadd.f32 %v454, %v626
        %v628 = vpop.f32.mrf.mxu0
        %629 = vmatprep.mubr.bf16.mxu0 0
        %630 = vmatmul.mubr.bf16.gmra.mxu0 %v541
        %v631 = vpop.f32.mrf.mxu0
        %v632 = vadd.f32 %v454, %v631
        %v633 = vpop.f32.mrf.mxu0
        %v634 = vpop.f32.mrf.mxu0
        %v635 = vadd.f32 %v454, %v634
        %v636 = vpop.f32.mrf.mxu0
        %637 = vmatprep.mubr.bf16.mxu0 0
        %638 = vmatmul.mubr.bf16.gmra.mxu0 %v544
        %v639 = vpop.f32.mrf.mxu0
        %v640 = vadd.f32 %v454, %v639
        %v641 = vpop.f32.mrf.mxu0
        %v642 = vpop.f32.mrf.mxu0
        %v643 = vadd.f32 %v454, %v642
        %v644 = vpop.f32.mrf.mxu0
        %645 = vmatprep.mubr.bf16.mxu0 0
        %646 = vmatmul.mubr.bf16.gmra.mxu0 %v547
        %v647 = vpop.f32.mrf.mxu0
        %v648 = vadd.f32 %v454, %v647
        %v649 = vpop.f32.mrf.mxu0
        %v650 = vpop.f32.mrf.mxu0
        %v651 = vadd.f32 %v454, %v650
        %v652 = vpop.f32.mrf.mxu0
        %653 = vmatprep.mubr.bf16.mxu0 0
        %654 = vmatmul.mubr.bf16.gmra.mxu0 %v550
        %v655 = vpop.f32.mrf.mxu0
        %v656 = vadd.f32 %v454, %v655
        %v657 = vpop.f32.mrf.mxu0
        %v658 = vpop.f32.mrf.mxu0
        %v659 = vadd.f32 %v454, %v658
        %v660 = vpop.f32.mrf.mxu0
        %661 = vmatprep.mubr.bf16.mxu0 0
        %662 = vmatmul.mubr.bf16.gmra.mxu0 %v553
        %v663 = vpop.f32.mrf.mxu0
        %v664 = vadd.f32 %v454, %v663
        %v665 = vpop.f32.mrf.mxu0
        %v666 = vpop.f32.mrf.mxu0
        %v667 = vadd.f32 %v454, %v666
        %v668 = vpop.f32.mrf.mxu0
        %669 = vmatprep.mubr.bf16.mxu0 0
        %670 = vmatmul.mubr.bf16.gmra.mxu0 %v556
        %v671 = vpop.f32.mrf.mxu0
        %v672 = vadd.f32 %v454, %v671
        %v673 = vpop.f32.mrf.mxu0
        %v674 = vpop.f32.mrf.mxu0
        %v675 = vadd.f32 %v454, %v674
        %v676 = vpop.f32.mrf.mxu0
        %677 = vmatprep.mubr.bf16.mxu0 0
        %678 = vmatmul.mubr.bf16.gmra.mxu0 %v559
        %v679 = vpop.f32.mrf.mxu0
        %v680 = vadd.f32 %v454, %v679
        %v681 = vpop.f32.mrf.mxu0
        %v682 = vpop.f32.mrf.mxu0
        %v683 = vadd.f32 %v454, %v682
        %v684 = vpop.f32.mrf.mxu0
        %685 = vmatprep.mubr.bf16.mxu0 0
        %686 = vmatmul.mubr.bf16.gmra.mxu0 %v562
        %v687 = vpop.f32.mrf.mxu0
        %v688 = vadd.f32 %v454, %v687
        %v689 = vpop.f32.mrf.mxu0
        %v690 = vpop.f32.mrf.mxu0
        %v691 = vadd.f32 %v454, %v690
        %v692 = vpop.f32.mrf.mxu0
        %693 = vmatprep.mubr.bf16.mxu0 0
        %694 = vmatmul.mubr.bf16.gmra.mxu0 %v565
        %v695 = vpop.f32.mrf.mxu0
        %v696 = vadd.f32 %v454, %v695
        %v697 = vpop.f32.mrf.mxu0
        %v698 = vpop.f32.mrf.mxu0
        %v699 = vadd.f32 %v454, %v698
        %v700 = vpop.f32.mrf.mxu0
        %701 = vmatprep.mubr.bf16.mxu0 0
        %702 = vmatmul.mubr.bf16.gmra.mxu0 %v568
        %v703 = vpop.f32.mrf.mxu0
        %v704 = vadd.f32 %v454, %v703
        %v705 = vpop.f32.mrf.mxu0
        %v706 = vpop.f32.mrf.mxu0
        %v707 = vadd.f32 %v454, %v706
        %v708 = vpop.f32.mrf.mxu0
        %709 = vmatprep.mubr.bf16.mxu0 0
        %710 = vmatmul.mubr.bf16.gmra.mxu0 %v571
        %v711 = vpop.f32.mrf.mxu0
        %v712 = vadd.f32 %v454, %v711
        %v713 = vpop.f32.mrf.mxu0
        %v714 = vpop.f32.mrf.mxu0
        %v715 = vadd.f32 %v454, %v714
        %v716 = vpop.f32.mrf.mxu0
        %717 = vmatprep.mubr.bf16.mxu0 0
        %718 = vmatmul.mubr.bf16.gmra.mxu0 %v574
        %v719 = vpop.f32.mrf.mxu0
        %v720 = vadd.f32 %v454, %v719
        %v721 = vpop.f32.mrf.mxu0
        %v722 = vpop.f32.mrf.mxu0
        %v723 = vadd.f32 %v454, %v722
        %v724 = vpop.f32.mrf.mxu0
        %725 = vmatprep.mubr.bf16.mxu0 0
        %726 = vmatmul.mubr.bf16.gmra.mxu0 %v577
        %v727 = vpop.f32.mrf.mxu0
        %v728 = vadd.f32 %v454, %v727
        %v729 = vpop.f32.mrf.mxu0
        %v730 = vpop.f32.mrf.mxu0
        %v731 = vadd.f32 %v454, %v730
        %v732 = vpop.f32.mrf.mxu0
        %733 = vmatprep.mubr.bf16.mxu0 0
        %734 = vmatmul.mubr.bf16.gmra.mxu0 %v580
        %v735 = vpop.f32.mrf.mxu0
        %v736 = vadd.f32 %v454, %v735
        %v737 = vpop.f32.mrf.mxu0
        %v738 = vpop.f32.mrf.mxu0
        %v739 = vadd.f32 %v454, %v738
        %v740 = vpop.f32.mrf.mxu0
        %741 = vmatprep.mubr.bf16.mxu0 0
        %742 = vmatmul.mubr.bf16.gmra.mxu0 %v583
        %v743 = vpop.f32.mrf.mxu0
        %v744 = vadd.f32 %v454, %v743
        %v745 = vpop.f32.mrf.mxu0
        %v746 = vpop.f32.mrf.mxu0
        %v747 = vadd.f32 %v454, %v746
        %v748 = vpop.f32.mrf.mxu0
        %749 = vdwg.mxu0
        %v750 = vld [vmem:[%s3] sm:$0x1]
        %v751 = vld [vmem:[%s4] sm:$0x1]
        %vm752 = vcmask 261120
        %v753 = vsel %vm752, %v624, 0.0
        %754 = vadd.xlane.f32.xlu0 %v753
        %v755 = vpop.xlane.xlu0 %754
        %v756 = vsel %vm752, %v627, 0.0
        %757 = vadd.xlane.f32.xlu0 %v756
        %v758 = vpop.xlane.xlu0 %757
        %v759 = vsel %vm752, %v632, 0.0
        %760 = vadd.xlane.f32.xlu0 %v759
        %v761 = vpop.xlane.xlu0 %760
        %v762 = vsel %vm752, %v635, 0.0
        %763 = vadd.xlane.f32.xlu0 %v762
        %v764 = vpop.xlane.xlu0 %763
        %v765 = vsel %vm752, %v640, 0.0
        %766 = vadd.xlane.f32.xlu0 %v765
        %v767 = vpop.xlane.xlu0 %766
        %v768 = vsel %vm752, %v643, 0.0
        %769 = vadd.xlane.f32.xlu0 %v768
        %v770 = vpop.xlane.xlu0 %769
        %v771 = vsel %vm752, %v648, 0.0
        %772 = vadd.xlane.f32.xlu0 %v771
        %v773 = vpop.xlane.xlu0 %772
        %v774 = vsel %vm752, %v651, 0.0
        %775 = vadd.xlane.f32.xlu0 %v774
        %v776 = vpop.xlane.xlu0 %775
        %v777 = vsel %vm752, %v656, 0.0
        %778 = vadd.xlane.f32.xlu0 %v777
        %v779 = vpop.xlane.xlu0 %778
        %v780 = vsel %vm752, %v659, 0.0
        %781 = vadd.xlane.f32.xlu0 %v780
        %v782 = vpop.xlane.xlu0 %781
        %v783 = vsel %vm752, %v664, 0.0
        %784 = vadd.xlane.f32.xlu0 %v783
        %v785 = vpop.xlane.xlu0 %784
        %v786 = vsel %vm752, %v667, 0.0
        %787 = vadd.xlane.f32.xlu0 %v786
        %v788 = vpop.xlane.xlu0 %787
        %v789 = vsel %vm752, %v672, 0.0
        %790 = vadd.xlane.f32.xlu0 %v789
        %v791 = vpop.xlane.xlu0 %790
        %v792 = vsel %vm752, %v675, 0.0
        %793 = vadd.xlane.f32.xlu0 %v792
        %v794 = vpop.xlane.xlu0 %793
        %v795 = vsel %vm752, %v680, 0.0
        %796 = vadd.xlane.f32.xlu0 %v795
        %v797 = vpop.xlane.xlu0 %796
        %v798 = vsel %vm752, %v683, 0.0
        %799 = vadd.xlane.f32.xlu0 %v798
        %v800 = vpop.xlane.xlu0 %799
        %v801 = vsel %vm752, %v688, 0.0
        %802 = vadd.xlane.f32.xlu0 %v801
        %v803 = vpop.xlane.xlu0 %802
        %v804 = vsel %vm752, %v691, 0.0
        %805 = vadd.xlane.f32.xlu0 %v804
        %v806 = vpop.xlane.xlu0 %805
        %v807 = vsel %vm752, %v696, 0.0
        %808 = vadd.xlane.f32.xlu0 %v807
        %v809 = vpop.xlane.xlu0 %808
        %v810 = vsel %vm752, %v699, 0.0
        %811 = vadd.xlane.f32.xlu0 %v810
        %v812 = vpop.xlane.xlu0 %811
        %v813 = vsel %vm752, %v704, 0.0
        %814 = vadd.xlane.f32.xlu0 %v813
        %v815 = vpop.xlane.xlu0 %814
        %v816 = vsel %vm752, %v707, 0.0
        %817 = vadd.xlane.f32.xlu0 %v816
        %v818 = vpop.xlane.xlu0 %817
        %v819 = vsel %vm752, %v712, 0.0
        %820 = vadd.xlane.f32.xlu0 %v819
        %v821 = vpop.xlane.xlu0 %820
        %v822 = vsel %vm752, %v715, 0.0
        %823 = vadd.xlane.f32.xlu0 %v822
        %v824 = vpop.xlane.xlu0 %823
        %v825 = vsel %vm752, %v720, 0.0
        %826 = vadd.xlane.f32.xlu0 %v825
        %v827 = vpop.xlane.xlu0 %826
        %v828 = vsel %vm752, %v723, 0.0
        %829 = vadd.xlane.f32.xlu0 %v828
        %v830 = vpop.xlane.xlu0 %829
        %v831 = vsel %vm752, %v728, 0.0
        %832 = vadd.xlane.f32.xlu0 %v831
        %v833 = vpop.xlane.xlu0 %832
        %v834 = vsel %vm752, %v731, 0.0
        %835 = vadd.xlane.f32.xlu0 %v834
        %v836 = vpop.xlane.xlu0 %835
        %v837 = vsel %vm752, %v736, 0.0
        %838 = vadd.xlane.f32.xlu0 %v837
        %v839 = vpop.xlane.xlu0 %838
        %v840 = vsel %vm752, %v739, 0.0
        %841 = vadd.xlane.f32.xlu0 %v840
        %v842 = vpop.xlane.xlu0 %841
        %v843 = vsel %vm752, %v744, 0.0
        %844 = vadd.xlane.f32.xlu0 %v843
        %v845 = vpop.xlane.xlu0 %844
        %v846 = vsel %vm752, %v747, 0.0
        %847 = vadd.xlane.f32.xlu0 %v846
        %v848 = vpop.xlane.xlu0 %847
        %v849 = vrcp.pop 32.0
        %v850 = vmul.f32 %v755, %v849
        %v851 = vmul.f32 %v758, %v849
        %v852 = vmul.f32 %v761, %v849
        %v853 = vmul.f32 %v764, %v849
        %v854 = vmul.f32 %v767, %v849
        %v855 = vmul.f32 %v770, %v849
        %v856 = vmul.f32 %v773, %v849
        %v857 = vmul.f32 %v776, %v849
        %v858 = vmul.f32 %v779, %v849
        %v859 = vmul.f32 %v782, %v849
        %v860 = vmul.f32 %v785, %v849
        %v861 = vmul.f32 %v788, %v849
        %v862 = vmul.f32 %v791, %v849
        %v863 = vmul.f32 %v794, %v849
        %v864 = vmul.f32 %v797, %v849
        %v865 = vmul.f32 %v800, %v849
        %v866 = vmul.f32 %v803, %v849
        %v867 = vmul.f32 %v806, %v849
        %v868 = vmul.f32 %v809, %v849
        %v869 = vmul.f32 %v812, %v849
        %v870 = vmul.f32 %v815, %v849
        %v871 = vmul.f32 %v818, %v849
        %v872 = vmul.f32 %v821, %v849
        %v873 = vmul.f32 %v824, %v849
        %v874 = vmul.f32 %v827, %v849
        %v875 = vmul.f32 %v830, %v849
        %v876 = vmul.f32 %v833, %v849
        %v877 = vmul.f32 %v836, %v849
        %v878 = vmul.f32 %v839, %v849
        %v879 = vmul.f32 %v842, %v849
        %v880 = vmul.f32 %v845, %v849
        %v881 = vmul.f32 %v848, %v849
        %v882 = vsub.f32 %v624, %v850
        %v883 = vsub.f32 %v627, %v851
        %v884 = vsub.f32 %v632, %v852
        %v885 = vsub.f32 %v635, %v853
        %v886 = vsub.f32 %v640, %v854
        %v887 = vsub.f32 %v643, %v855
        %v888 = vsub.f32 %v648, %v856
        %v889 = vsub.f32 %v651, %v857
        %v890 = vsub.f32 %v656, %v858
        %v891 = vsub.f32 %v659, %v859
        %v892 = vsub.f32 %v664, %v860
        %v893 = vsub.f32 %v667, %v861
        %v894 = vsub.f32 %v672, %v862
        %v895 = vsub.f32 %v675, %v863
        %v896 = vsub.f32 %v680, %v864
        %v897 = vsub.f32 %v683, %v865
        %v898 = vsub.f32 %v688, %v866
        %v899 = vsub.f32 %v691, %v867
        %v900 = vsub.f32 %v696, %v868
        %v901 = vsub.f32 %v699, %v869
        %v902 = vsub.f32 %v704, %v870
        %v903 = vsub.f32 %v707, %v871
        %v904 = vsub.f32 %v712, %v872
        %v905 = vsub.f32 %v715, %v873
        %v906 = vsub.f32 %v720, %v874
        %v907 = vsub.f32 %v723, %v875
        %v908 = vsub.f32 %v728, %v876
        %v909 = vsub.f32 %v731, %v877
        %v910 = vsub.f32 %v736, %v878
        %v911 = vsub.f32 %v739, %v879
        %v912 = vsub.f32 %v744, %v880
        %v913 = vsub.f32 %v747, %v881
        %v914 = vmul.f32 %v882, %v882
        %v915 = vmul.f32 %v883, %v883
        %v916 = vmul.f32 %v884, %v884
        %v917 = vmul.f32 %v885, %v885
        %v918 = vmul.f32 %v886, %v886
        %v919 = vmul.f32 %v887, %v887
        %v920 = vmul.f32 %v888, %v888
        %v921 = vmul.f32 %v889, %v889
        %v922 = vmul.f32 %v890, %v890
        %v923 = vmul.f32 %v891, %v891
        %v924 = vmul.f32 %v892, %v892
        %v925 = vmul.f32 %v893, %v893
        %v926 = vmul.f32 %v894, %v894
        %v927 = vmul.f32 %v895, %v895
        %v928 = vmul.f32 %v896, %v896
        %v929 = vmul.f32 %v897, %v897
        %v930 = vmul.f32 %v898, %v898
        %v931 = vmul.f32 %v899, %v899
        %v932 = vmul.f32 %v900, %v900
        %v933 = vmul.f32 %v901, %v901
        %v934 = vmul.f32 %v902, %v902
        %v935 = vmul.f32 %v903, %v903
        %v936 = vmul.f32 %v904, %v904
        %v937 = vmul.f32 %v905, %v905
        %v938 = vmul.f32 %v906, %v906
        %v939 = vmul.f32 %v907, %v907
        %v940 = vmul.f32 %v908, %v908
        %v941 = vmul.f32 %v909, %v909
        %v942 = vmul.f32 %v910, %v910
        %v943 = vmul.f32 %v911, %v911
        %v944 = vmul.f32 %v912, %v912
        %v945 = vmul.f32 %v913, %v913
        %v946 = vsel %vm752, %v914, 0.0
        %947 = vadd.xlane.f32.xlu0 %v946
        %v948 = vpop.xlane.xlu0 %947
        %v949 = vsel %vm752, %v915, 0.0
        %950 = vadd.xlane.f32.xlu0 %v949
        %v951 = vpop.xlane.xlu0 %950
        %v952 = vsel %vm752, %v916, 0.0
        %953 = vadd.xlane.f32.xlu0 %v952
        %v954 = vpop.xlane.xlu0 %953
        %v955 = vsel %vm752, %v917, 0.0
        %956 = vadd.xlane.f32.xlu0 %v955
        %v957 = vpop.xlane.xlu0 %956
        %v958 = vsel %vm752, %v918, 0.0
        %959 = vadd.xlane.f32.xlu0 %v958
        %v960 = vpop.xlane.xlu0 %959
        %v961 = vsel %vm752, %v919, 0.0
        %962 = vadd.xlane.f32.xlu0 %v961
        %v963 = vpop.xlane.xlu0 %962
        %v964 = vsel %vm752, %v920, 0.0
        %965 = vadd.xlane.f32.xlu0 %v964
        %v966 = vpop.xlane.xlu0 %965
        %v967 = vsel %vm752, %v921, 0.0
        %968 = vadd.xlane.f32.xlu0 %v967
        %v969 = vpop.xlane.xlu0 %968
        %v970 = vsel %vm752, %v922, 0.0
        %971 = vadd.xlane.f32.xlu0 %v970
        %v972 = vpop.xlane.xlu0 %971
        %v973 = vsel %vm752, %v923, 0.0
        %974 = vadd.xlane.f32.xlu0 %v973
        %v975 = vpop.xlane.xlu0 %974
        %v976 = vsel %vm752, %v924, 0.0
        %977 = vadd.xlane.f32.xlu0 %v976
        %v978 = vpop.xlane.xlu0 %977
        %v979 = vsel %vm752, %v925, 0.0
        %980 = vadd.xlane.f32.xlu0 %v979
        %v981 = vpop.xlane.xlu0 %980
        %v982 = vsel %vm752, %v926, 0.0
        %983 = vadd.xlane.f32.xlu0 %v982
        %v984 = vpop.xlane.xlu0 %983
        %v985 = vsel %vm752, %v927, 0.0
        %986 = vadd.xlane.f32.xlu0 %v985
        %v987 = vpop.xlane.xlu0 %986
        %v988 = vsel %vm752, %v928, 0.0
        %989 = vadd.xlane.f32.xlu0 %v988
        %v990 = vpop.xlane.xlu0 %989
        %v991 = vsel %vm752, %v929, 0.0
        %992 = vadd.xlane.f32.xlu0 %v991
        %v993 = vpop.xlane.xlu0 %992
        %v994 = vsel %vm752, %v930, 0.0
        %995 = vadd.xlane.f32.xlu0 %v994
        %v996 = vpop.xlane.xlu0 %995
        %v997 = vsel %vm752, %v931, 0.0
        %998 = vadd.xlane.f32.xlu0 %v997
        %v999 = vpop.xlane.xlu0 %998
        %v1000 = vsel %vm752, %v932, 0.0
        %1001 = vadd.xlane.f32.xlu0 %v1000
        %v1002 = vpop.xlane.xlu0 %1001
        %v1003 = vsel %vm752, %v933, 0.0
        %1004 = vadd.xlane.f32.xlu0 %v1003
        %v1005 = vpop.xlane.xlu0 %1004
        %v1006 = vsel %vm752, %v934, 0.0
        %1007 = vadd.xlane.f32.xlu0 %v1006
        %v1008 = vpop.xlane.xlu0 %1007
        %v1009 = vsel %vm752, %v935, 0.0
        %1010 = vadd.xlane.f32.xlu0 %v1009
        %v1011 = vpop.xlane.xlu0 %1010
        %v1012 = vsel %vm752, %v936, 0.0
        %1013 = vadd.xlane.f32.xlu0 %v1012
        %v1014 = vpop.xlane.xlu0 %1013
        %v1015 = vsel %vm752, %v937, 0.0
        %1016 = vadd.xlane.f32.xlu0 %v1015
        %v1017 = vpop.xlane.xlu0 %1016
        %v1018 = vsel %vm752, %v938, 0.0
        %1019 = vadd.xlane.f32.xlu0 %v1018
        %v1020 = vpop.xlane.xlu0 %1019
        %v1021 = vsel %vm752, %v939, 0.0
        %1022 = vadd.xlane.f32.xlu0 %v1021
        %v1023 = vpop.xlane.xlu0 %1022
        %v1024 = vsel %vm752, %v940, 0.0
        %1025 = vadd.xlane.f32.xlu0 %v1024
        %v1026 = vpop.xlane.xlu0 %1025
        %v1027 = vsel %vm752, %v941, 0.0
        %1028 = vadd.xlane.f32.xlu0 %v1027
        %v1029 = vpop.xlane.xlu0 %1028
        %v1030 = vsel %vm752, %v942, 0.0
        %1031 = vadd.xlane.f32.xlu0 %v1030
        %v1032 = vpop.xlane.xlu0 %1031
        %v1033 = vsel %vm752, %v943, 0.0
        %1034 = vadd.xlane.f32.xlu0 %v1033
        %v1035 = vpop.xlane.xlu0 %1034
        %v1036 = vsel %vm752, %v944, 0.0
        %1037 = vadd.xlane.f32.xlu0 %v1036
        %v1038 = vpop.xlane.xlu0 %1037
        %v1039 = vsel %vm752, %v945, 0.0
        %1040 = vadd.xlane.f32.xlu0 %v1039
        %v1041 = vpop.xlane.xlu0 %1040
        %v1042 = vmul.f32 %v948, %v849
        %v1043 = vmul.f32 %v951, %v849
        %v1044 = vmul.f32 %v954, %v849
        %v1045 = vmul.f32 %v957, %v849
        %v1046 = vmul.f32 %v960, %v849
        %v1047 = vmul.f32 %v963, %v849
        %v1048 = vmul.f32 %v966, %v849
        %v1049 = vmul.f32 %v969, %v849
        %v1050 = vmul.f32 %v972, %v849
        %v1051 = vmul.f32 %v975, %v849
        %v1052 = vmul.f32 %v978, %v849
        %v1053 = vmul.f32 %v981, %v849
        %v1054 = vmul.f32 %v984, %v849
        %v1055 = vmul.f32 %v987, %v849
        %v1056 = vmul.f32 %v990, %v849
        %v1057 = vmul.f32 %v993, %v849
        %v1058 = vmul.f32 %v996, %v849
        %v1059 = vmul.f32 %v999, %v849
        %v1060 = vmul.f32 %v1002, %v849
        %v1061 = vmul.f32 %v1005, %v849
        %v1062 = vmul.f32 %v1008, %v849
        %v1063 = vmul.f32 %v1011, %v849
        %v1064 = vmul.f32 %v1014, %v849
        %v1065 = vmul.f32 %v1017, %v849
        %v1066 = vmul.f32 %v1020, %v849
        %v1067 = vmul.f32 %v1023, %v849
        %v1068 = vmul.f32 %v1026, %v849
        %v1069 = vmul.f32 %v1029, %v849
        %v1070 = vmul.f32 %v1032, %v849
        %v1071 = vmul.f32 %v1035, %v849
        %v1072 = vmul.f32 %v1038, %v849
        %v1073 = vmul.f32 %v1041, %v849
        %v1074 = vadd.f32 %v1042, 1e-05
        %v1075 = vadd.f32 %v1043, 1e-05
        %v1076 = vadd.f32 %v1044, 1e-05
        %v1077 = vadd.f32 %v1045, 1e-05
        %v1078 = vadd.f32 %v1046, 1e-05
        %v1079 = vadd.f32 %v1047, 1e-05
        %v1080 = vadd.f32 %v1048, 1e-05
        %v1081 = vadd.f32 %v1049, 1e-05
        %v1082 = vadd.f32 %v1050, 1e-05
        %v1083 = vadd.f32 %v1051, 1e-05
        %v1084 = vadd.f32 %v1052, 1e-05
        %v1085 = vadd.f32 %v1053, 1e-05
        %v1086 = vadd.f32 %v1054, 1e-05
        %v1087 = vadd.f32 %v1055, 1e-05
        %v1088 = vadd.f32 %v1056, 1e-05
        %v1089 = vadd.f32 %v1057, 1e-05
        %v1090 = vadd.f32 %v1058, 1e-05
        %v1091 = vadd.f32 %v1059, 1e-05
        %v1092 = vadd.f32 %v1060, 1e-05
        %v1093 = vadd.f32 %v1061, 1e-05
        %v1094 = vadd.f32 %v1062, 1e-05
        %v1095 = vadd.f32 %v1063, 1e-05
        %v1096 = vadd.f32 %v1064, 1e-05
        %v1097 = vadd.f32 %v1065, 1e-05
        %v1098 = vadd.f32 %v1066, 1e-05
        %v1099 = vadd.f32 %v1067, 1e-05
        %v1100 = vadd.f32 %v1068, 1e-05
        %v1101 = vadd.f32 %v1069, 1e-05
        %v1102 = vadd.f32 %v1070, 1e-05
        %v1103 = vadd.f32 %v1071, 1e-05
        %v1104 = vadd.f32 %v1072, 1e-05
        %v1105 = vadd.f32 %v1073, 1e-05
        %v1106 = vrsqrt.pop %v1074
        %v1107 = vrsqrt.pop %v1075
        %v1108 = vrsqrt.pop %v1076
        %v1109 = vrsqrt.pop %v1077
        %v1110 = vrsqrt.pop %v1078
        %v1111 = vrsqrt.pop %v1079
        %v1112 = vrsqrt.pop %v1080
        %v1113 = vrsqrt.pop %v1081
        %v1114 = vrsqrt.pop %v1082
        %v1115 = vrsqrt.pop %v1083
        %v1116 = vrsqrt.pop %v1084
        %v1117 = vrsqrt.pop %v1085
        %v1118 = vrsqrt.pop %v1086
        %v1119 = vrsqrt.pop %v1087
        %v1120 = vrsqrt.pop %v1088
        %v1121 = vrsqrt.pop %v1089
        %v1122 = vrsqrt.pop %v1090
        %v1123 = vrsqrt.pop %v1091
        %v1124 = vrsqrt.pop %v1092
        %v1125 = vrsqrt.pop %v1093
        %v1126 = vrsqrt.pop %v1094
        %v1127 = vrsqrt.pop %v1095
        %v1128 = vrsqrt.pop %v1096
        %v1129 = vrsqrt.pop %v1097
        %v1130 = vrsqrt.pop %v1098
        %v1131 = vrsqrt.pop %v1099
        %v1132 = vrsqrt.pop %v1100
        %v1133 = vrsqrt.pop %v1101
        %v1134 = vrsqrt.pop %v1102
        %v1135 = vrsqrt.pop %v1103
        %v1136 = vrsqrt.pop %v1104
        %v1137 = vrsqrt.pop %v1105
        %v1138 = vmul.f32 %v882, %v1106
        %v1139 = vmul.f32 %v883, %v1107
        %v1140 = vmul.f32 %v884, %v1108
        %v1141 = vmul.f32 %v885, %v1109
        %v1142 = vmul.f32 %v886, %v1110
        %v1143 = vmul.f32 %v887, %v1111
        %v1144 = vmul.f32 %v888, %v1112
        %v1145 = vmul.f32 %v889, %v1113
        %v1146 = vmul.f32 %v890, %v1114
        %v1147 = vmul.f32 %v891, %v1115
        %v1148 = vmul.f32 %v892, %v1116
        %v1149 = vmul.f32 %v893, %v1117
        %v1150 = vmul.f32 %v894, %v1118
        %v1151 = vmul.f32 %v895, %v1119
        %v1152 = vmul.f32 %v896, %v1120
        %v1153 = vmul.f32 %v897, %v1121
        %v1154 = vmul.f32 %v898, %v1122
        %v1155 = vmul.f32 %v899, %v1123
        %v1156 = vmul.f32 %v900, %v1124
        %v1157 = vmul.f32 %v901, %v1125
        %v1158 = vmul.f32 %v902, %v1126
        %v1159 = vmul.f32 %v903, %v1127
        %v1160 = vmul.f32 %v904, %v1128
        %v1161 = vmul.f32 %v905, %v1129
        %v1162 = vmul.f32 %v906, %v1130
        %v1163 = vmul.f32 %v907, %v1131
        %v1164 = vmul.f32 %v908, %v1132
        %v1165 = vmul.f32 %v909, %v1133
        %v1166 = vmul.f32 %v910, %v1134
        %v1167 = vmul.f32 %v911, %v1135
        %v1168 = vmul.f32 %v912, %v1136
        %v1169 = vmul.f32 %v913, %v1137
        %v1171 = vlaneseq
        %v1172 = vshrl.u32 %v1171, 7
        %v1173 = vsub.s32 0, %v1172
        %v1174 = vrot.slane %v750, %v1173
        %v1176 = vmul.f32 %v1138, %v1174
        %v1177 = vmul.f32 %v1139, %v1174
        %v1178 = vmul.f32 %v1140, %v1174
        %v1179 = vmul.f32 %v1141, %v1174
        %v1180 = vmul.f32 %v1142, %v1174
        %v1181 = vmul.f32 %v1143, %v1174
        %v1182 = vmul.f32 %v1144, %v1174
        %v1183 = vmul.f32 %v1145, %v1174
        %v1184 = vmul.f32 %v1146, %v1174
        %v1185 = vmul.f32 %v1147, %v1174
        %v1186 = vmul.f32 %v1148, %v1174
        %v1187 = vmul.f32 %v1149, %v1174
        %v1188 = vmul.f32 %v1150, %v1174
        %v1189 = vmul.f32 %v1151, %v1174
        %v1190 = vmul.f32 %v1152, %v1174
        %v1191 = vmul.f32 %v1153, %v1174
        %v1192 = vmul.f32 %v1154, %v1174
        %v1193 = vmul.f32 %v1155, %v1174
        %v1194 = vmul.f32 %v1156, %v1174
        %v1195 = vmul.f32 %v1157, %v1174
        %v1196 = vmul.f32 %v1158, %v1174
        %v1197 = vmul.f32 %v1159, %v1174
        %v1198 = vmul.f32 %v1160, %v1174
        %v1199 = vmul.f32 %v1161, %v1174
        %v1200 = vmul.f32 %v1162, %v1174
        %v1201 = vmul.f32 %v1163, %v1174
        %v1202 = vmul.f32 %v1164, %v1174
        %v1203 = vmul.f32 %v1165, %v1174
        %v1204 = vmul.f32 %v1166, %v1174
        %v1205 = vmul.f32 %v1167, %v1174
        %v1206 = vmul.f32 %v1168, %v1174
        %v1207 = vmul.f32 %v1169, %v1174
        %v1209 = vlaneseq
        %v1210 = vshrl.u32 %v1209, 7
        %v1211 = vsub.s32 0, %v1210
        %v1212 = vrot.slane %v751, %v1211
        %v1214 = vadd.f32 %v1176, %v1212
        %v1215 = vadd.f32 %v1177, %v1212
        %v1216 = vadd.f32 %v1178, %v1212
        %v1217 = vadd.f32 %v1179, %v1212
        %v1218 = vadd.f32 %v1180, %v1212
        %v1219 = vadd.f32 %v1181, %v1212
        %v1220 = vadd.f32 %v1182, %v1212
        %v1221 = vadd.f32 %v1183, %v1212
        %v1222 = vadd.f32 %v1184, %v1212
        %v1223 = vadd.f32 %v1185, %v1212
        %v1224 = vadd.f32 %v1186, %v1212
        %v1225 = vadd.f32 %v1187, %v1212
        %v1226 = vadd.f32 %v1188, %v1212
        %v1227 = vadd.f32 %v1189, %v1212
        %v1228 = vadd.f32 %v1190, %v1212
        %v1229 = vadd.f32 %v1191, %v1212
        %v1230 = vadd.f32 %v1192, %v1212
        %v1231 = vadd.f32 %v1193, %v1212
        %v1232 = vadd.f32 %v1194, %v1212
        %v1233 = vadd.f32 %v1195, %v1212
        %v1234 = vadd.f32 %v1196, %v1212
        %v1235 = vadd.f32 %v1197, %v1212
        %v1236 = vadd.f32 %v1198, %v1212
        %v1237 = vadd.f32 %v1199, %v1212
        %v1238 = vadd.f32 %v1200, %v1212
        %v1239 = vadd.f32 %v1201, %v1212
        %v1240 = vadd.f32 %v1202, %v1212
        %v1241 = vadd.f32 %v1203, %v1212
        %v1242 = vadd.f32 %v1204, %v1212
        %v1243 = vadd.f32 %v1205, %v1212
        %v1244 = vadd.f32 %v1206, %v1212
        %v1245 = vadd.f32 %v1207, %v1212
        %v1246 = vmax.f32 %v1214, 0.0
        %v1247 = vmax.f32 %v1215, 0.0
        %v1248 = vmax.f32 %v1216, 0.0
        %v1249 = vmax.f32 %v1217, 0.0
        %v1250 = vmax.f32 %v1218, 0.0
        %v1251 = vmax.f32 %v1219, 0.0
        %v1252 = vmax.f32 %v1220, 0.0
        %v1253 = vmax.f32 %v1221, 0.0
        %v1254 = vmax.f32 %v1222, 0.0
        %v1255 = vmax.f32 %v1223, 0.0
        %v1256 = vmax.f32 %v1224, 0.0
        %v1257 = vmax.f32 %v1225, 0.0
        %v1258 = vmax.f32 %v1226, 0.0
        %v1259 = vmax.f32 %v1227, 0.0
        %v1260 = vmax.f32 %v1228, 0.0
        %v1261 = vmax.f32 %v1229, 0.0
        %v1262 = vmax.f32 %v1230, 0.0
        %v1263 = vmax.f32 %v1231, 0.0
        %v1264 = vmax.f32 %v1232, 0.0
        %v1265 = vmax.f32 %v1233, 0.0
        %v1266 = vmax.f32 %v1234, 0.0
        %v1267 = vmax.f32 %v1235, 0.0
        %v1268 = vmax.f32 %v1236, 0.0
        %v1269 = vmax.f32 %v1237, 0.0
        %v1270 = vmax.f32 %v1238, 0.0
        %v1271 = vmax.f32 %v1239, 0.0
        %v1272 = vmax.f32 %v1240, 0.0
        %v1273 = vmax.f32 %v1241, 0.0
        %v1274 = vmax.f32 %v1242, 0.0
        %v1275 = vmax.f32 %v1243, 0.0
        %v1276 = vmax.f32 %v1244, 0.0
        %v1277 = vmax.f32 %v1245, 0.0
        %v1278 = vld [vmem:[%s6] sm:$0xf]
        %v1280 = vsel %vm585, %v1278, 0
        %1282 = vmatprep.subr.bf16.mxu0 0
        %1283 = vmatpush1.bf16.msra.mxu0 0
        %1284 = vmatprep.subr.bf16.mxu0 0
        %1285 = vmatpush1.bf16.msra.mxu0 0
        %1286 = vmatprep.subr.bf16.mxu0 0
        %1287 = vmatpush1.bf16.msra.mxu0 0
        %1288 = vmatprep.subr.bf16.mxu0 0
        %1289 = vmatpush1.bf16.msra.mxu0 0
        %1290 = vmatprep.subr.bf16.mxu0 0
        %1291 = vmatpush1.bf16.msra.mxu0 0
        %1292 = vmatprep.subr.bf16.mxu0 0
        %1293 = vmatpush1.bf16.msra.mxu0 0
        %1294 = vmatprep.subr.bf16.mxu0 0
        %1295 = vmatpush1.bf16.msra.mxu0 0
        %1296 = vmatprep.subr.bf16.mxu0 0
        %1297 = vmatpush1.bf16.msra.mxu0 %v1280
        %1298 = vmatprep.subr.bf16.mxu0 0
        %1299 = vmatpush2.bf16.msra.mxu0 0
        %1300 = vmatprep.subr.bf16.mxu0 0
        %1301 = vmatpush2.bf16.msra.mxu0 0
        %1302 = vmatprep.subr.bf16.mxu0 0
        %1303 = vmatpush2.bf16.msra.mxu0 0
        %1304 = vmatprep.subr.bf16.mxu0 0
        %1305 = vmatpush2.bf16.msra.mxu0 0
        %1306 = vmatprep.subr.bf16.mxu0 0
        %1307 = vmatpush2.bf16.msra.mxu0 0
        %1308 = vmatprep.subr.bf16.mxu0 0
        %1309 = vmatpush2.bf16.msra.mxu0 0
        %1310 = vmatprep.subr.bf16.mxu0 0
        %1311 = vmatpush2.bf16.msra.mxu0 0
        %1312 = vmatprep.subr.bf16.mxu0 0
        %1313 = vmatpush2.bf16.msra.mxu0 0
        %1314 = vmatprep.mubr.bf16.mxu0 0
        %1315 = vmatmul.mubr.bf16.gmra.mxu0 %v538
        %v1316 = vpop.f32.mrf.mxu0
        %v1317 = vadd.f32 0.0, %v1316
        %v1318 = vpop.f32.mrf.mxu0
        %v1319 = vpop.f32.mrf.mxu0
        %v1320 = vadd.f32 0.0, %v1319
        %v1321 = vpop.f32.mrf.mxu0
        %1322 = vmatprep.mubr.bf16.mxu0 0
        %1323 = vmatmul.mubr.bf16.gmra.mxu0 %v541
        %v1324 = vpop.f32.mrf.mxu0
        %v1325 = vadd.f32 0.0, %v1324
        %v1326 = vpop.f32.mrf.mxu0
        %v1327 = vpop.f32.mrf.mxu0
        %v1328 = vadd.f32 0.0, %v1327
        %v1329 = vpop.f32.mrf.mxu0
        %1330 = vmatprep.mubr.bf16.mxu0 0
        %1331 = vmatmul.mubr.bf16.gmra.mxu0 %v544
        %v1332 = vpop.f32.mrf.mxu0
        %v1333 = vadd.f32 0.0, %v1332
        %v1334 = vpop.f32.mrf.mxu0
        %v1335 = vpop.f32.mrf.mxu0
        %v1336 = vadd.f32 0.0, %v1335
        %v1337 = vpop.f32.mrf.mxu0
        %1338 = vmatprep.mubr.bf16.mxu0 0
        %1339 = vmatmul.mubr.bf16.gmra.mxu0 %v547
        %v1340 = vpop.f32.mrf.mxu0
        %v1341 = vadd.f32 0.0, %v1340
        %v1342 = vpop.f32.mrf.mxu0
        %v1343 = vpop.f32.mrf.mxu0
        %v1344 = vadd.f32 0.0, %v1343
        %v1345 = vpop.f32.mrf.mxu0
        %1346 = vmatprep.mubr.bf16.mxu0 0
        %1347 = vmatmul.mubr.bf16.gmra.mxu0 %v550
        %v1348 = vpop.f32.mrf.mxu0
        %v1349 = vadd.f32 0.0, %v1348
        %v1350 = vpop.f32.mrf.mxu0
        %v1351 = vpop.f32.mrf.mxu0
        %v1352 = vadd.f32 0.0, %v1351
        %v1353 = vpop.f32.mrf.mxu0
        %1354 = vmatprep.mubr.bf16.mxu0 0
        %1355 = vmatmul.mubr.bf16.gmra.mxu0 %v553
        %v1356 = vpop.f32.mrf.mxu0
        %v1357 = vadd.f32 0.0, %v1356
        %v1358 = vpop.f32.mrf.mxu0
        %v1359 = vpop.f32.mrf.mxu0
        %v1360 = vadd.f32 0.0, %v1359
        %v1361 = vpop.f32.mrf.mxu0
        %1362 = vmatprep.mubr.bf16.mxu0 0
        %1363 = vmatmul.mubr.bf16.gmra.mxu0 %v556
        %v1364 = vpop.f32.mrf.mxu0
        %v1365 = vadd.f32 0.0, %v1364
        %v1366 = vpop.f32.mrf.mxu0
        %v1367 = vpop.f32.mrf.mxu0
        %v1368 = vadd.f32 0.0, %v1367
        %v1369 = vpop.f32.mrf.mxu0
        %1370 = vmatprep.mubr.bf16.mxu0 0
        %1371 = vmatmul.mubr.bf16.gmra.mxu0 %v559
        %v1372 = vpop.f32.mrf.mxu0
        %v1373 = vadd.f32 0.0, %v1372
        %v1374 = vpop.f32.mrf.mxu0
        %v1375 = vpop.f32.mrf.mxu0
        %v1376 = vadd.f32 0.0, %v1375
        %v1377 = vpop.f32.mrf.mxu0
        %1378 = vmatprep.mubr.bf16.mxu0 0
        %1379 = vmatmul.mubr.bf16.gmra.mxu0 %v562
        %v1380 = vpop.f32.mrf.mxu0
        %v1381 = vadd.f32 0.0, %v1380
        %v1382 = vpop.f32.mrf.mxu0
        %v1383 = vpop.f32.mrf.mxu0
        %v1384 = vadd.f32 0.0, %v1383
        %v1385 = vpop.f32.mrf.mxu0
        %1386 = vmatprep.mubr.bf16.mxu0 0
        %1387 = vmatmul.mubr.bf16.gmra.mxu0 %v565
        %v1388 = vpop.f32.mrf.mxu0
        %v1389 = vadd.f32 0.0, %v1388
        %v1390 = vpop.f32.mrf.mxu0
        %v1391 = vpop.f32.mrf.mxu0
        %v1392 = vadd.f32 0.0, %v1391
        %v1393 = vpop.f32.mrf.mxu0
        %1394 = vmatprep.mubr.bf16.mxu0 0
        %1395 = vmatmul.mubr.bf16.gmra.mxu0 %v568
        %v1396 = vpop.f32.mrf.mxu0
        %v1397 = vadd.f32 0.0, %v1396
        %v1398 = vpop.f32.mrf.mxu0
        %v1399 = vpop.f32.mrf.mxu0
        %v1400 = vadd.f32 0.0, %v1399
        %v1401 = vpop.f32.mrf.mxu0
        %1402 = vmatprep.mubr.bf16.mxu0 0
        %1403 = vmatmul.mubr.bf16.gmra.mxu0 %v571
        %v1404 = vpop.f32.mrf.mxu0
        %v1405 = vadd.f32 0.0, %v1404
        %v1406 = vpop.f32.mrf.mxu0
        %v1407 = vpop.f32.mrf.mxu0
        %v1408 = vadd.f32 0.0, %v1407
        %v1409 = vpop.f32.mrf.mxu0
        %1410 = vmatprep.mubr.bf16.mxu0 0
        %1411 = vmatmul.mubr.bf16.gmra.mxu0 %v574
        %v1412 = vpop.f32.mrf.mxu0
        %v1413 = vadd.f32 0.0, %v1412
        %v1414 = vpop.f32.mrf.mxu0
        %v1415 = vpop.f32.mrf.mxu0
        %v1416 = vadd.f32 0.0, %v1415
        %v1417 = vpop.f32.mrf.mxu0
        %1418 = vmatprep.mubr.bf16.mxu0 0
        %1419 = vmatmul.mubr.bf16.gmra.mxu0 %v577
        %v1420 = vpop.f32.mrf.mxu0
        %v1421 = vadd.f32 0.0, %v1420
        %v1422 = vpop.f32.mrf.mxu0
        %v1423 = vpop.f32.mrf.mxu0
        %v1424 = vadd.f32 0.0, %v1423
        %v1425 = vpop.f32.mrf.mxu0
        %1426 = vmatprep.mubr.bf16.mxu0 0
        %1427 = vmatmul.mubr.bf16.gmra.mxu0 %v580
        %v1428 = vpop.f32.mrf.mxu0
        %v1429 = vadd.f32 0.0, %v1428
        %v1430 = vpop.f32.mrf.mxu0
        %v1431 = vpop.f32.mrf.mxu0
        %v1432 = vadd.f32 0.0, %v1431
        %v1433 = vpop.f32.mrf.mxu0
        %1434 = vmatprep.mubr.bf16.mxu0 0
        %1435 = vmatmul.mubr.bf16.gmra.mxu0 %v583
        %v1436 = vpop.f32.mrf.mxu0
        %v1437 = vadd.f32 0.0, %v1436
        %v1438 = vpop.f32.mrf.mxu0
        %v1439 = vpop.f32.mrf.mxu0
        %v1440 = vadd.f32 0.0, %v1439
        %v1441 = vpop.f32.mrf.mxu0
        %1442 = vdwg.mxu0
        %v1443 = vpack.c.bf16 %v1247, %v1246
        %v1444 = vpack.c.bf16 %v1249, %v1248
        %v1445 = vpack.c.bf16 %v1251, %v1250
        %v1446 = vpack.c.bf16 %v1253, %v1252
        %v1447 = vpack.c.bf16 %v1255, %v1254
        %v1448 = vpack.c.bf16 %v1257, %v1256
        %v1449 = vpack.c.bf16 %v1259, %v1258
        %v1450 = vpack.c.bf16 %v1261, %v1260
        %v1451 = vpack.c.bf16 %v1263, %v1262
        %v1452 = vpack.c.bf16 %v1265, %v1264
        %v1453 = vpack.c.bf16 %v1267, %v1266
        %v1454 = vpack.c.bf16 %v1269, %v1268
        %v1455 = vpack.c.bf16 %v1271, %v1270
        %v1456 = vpack.c.bf16 %v1273, %v1272
        %v1457 = vpack.c.bf16 %v1275, %v1274
        %v1458 = vpack.c.bf16 %v1277, %v1276
        %v1459 = vld [vmem:[%s5] sm:$0xf]
        %v1460 = vld [vmem:[%s5 + $0x4] sm:$0xf]
        %v1461 = vld [vmem:[%s5 + $0x8] sm:$0xf]
        %v1462 = vld [vmem:[%s5 + $0xc] sm:$0xf]
        %v1467 = vunpack.c.l.b16 %v1459
        %v1468 = vunpack.c.l.b16 %v1460
        %v1469 = vunpack.c.l.b16 %v1461
        %v1470 = vunpack.c.l.b16 %v1462
        %v1471 = vpack.c.b16 %v1468, %v1467
        %v1472 = vpack.c.b16 %v1470, %v1469
        %v1476 = vsel %vm752, %v1443, 0
        %v1479 = vsel %vm752, %v1444, 0
        %v1482 = vsel %vm752, %v1445, 0
        %v1485 = vsel %vm752, %v1446, 0
        %v1488 = vsel %vm752, %v1447, 0
        %v1491 = vsel %vm752, %v1448, 0
        %v1494 = vsel %vm752, %v1449, 0
        %v1497 = vsel %vm752, %v1450, 0
        %v1500 = vsel %vm752, %v1451, 0
        %v1503 = vsel %vm752, %v1452, 0
        %v1506 = vsel %vm752, %v1453, 0
        %v1509 = vsel %vm752, %v1454, 0
        %v1512 = vsel %vm752, %v1455, 0
        %v1515 = vsel %vm752, %v1456, 0
        %v1518 = vsel %vm752, %v1457, 0
        %v1521 = vsel %vm752, %v1458, 0
        %1523 = vmatprep.subr.bf16.mxu0 0
        %1524 = vmatpush1.bf16.msra.mxu0 0
        %1525 = vmatprep.subr.bf16.mxu0 0
        %1526 = vmatpush1.bf16.msra.mxu0 0
        %1527 = vmatprep.subr.bf16.mxu0 0
        %1528 = vmatpush1.bf16.msra.mxu0 0
        %1529 = vmatprep.subr.bf16.mxu0 0
        %1530 = vmatpush1.bf16.msra.mxu0 0
        %1531 = vmatprep.subr.bf16.mxu0 0
        %1532 = vmatpush1.bf16.msra.mxu0 0
        %1533 = vmatprep.subr.bf16.mxu0 0
        %1534 = vmatpush1.bf16.msra.mxu0 0
        %1535 = vmatprep.subr.bf16.mxu0 0
        %1536 = vmatpush1.bf16.msra.mxu0 %v1472
        %1537 = vmatprep.subr.bf16.mxu0 0
        %1538 = vmatpush1.bf16.msra.mxu0 %v1471
        %1539 = vmatprep.subr.bf16.mxu0 0
        %1540 = vmatpush2.bf16.msra.mxu0 0
        %1541 = vmatprep.subr.bf16.mxu0 0
        %1542 = vmatpush2.bf16.msra.mxu0 0
        %1543 = vmatprep.subr.bf16.mxu0 0
        %1544 = vmatpush2.bf16.msra.mxu0 0
        %1545 = vmatprep.subr.bf16.mxu0 0
        %1546 = vmatpush2.bf16.msra.mxu0 0
        %1547 = vmatprep.subr.bf16.mxu0 0
        %1548 = vmatpush2.bf16.msra.mxu0 0
        %1549 = vmatprep.subr.bf16.mxu0 0
        %1550 = vmatpush2.bf16.msra.mxu0 0
        %1551 = vmatprep.subr.bf16.mxu0 0
        %1552 = vmatpush2.bf16.msra.mxu0 0
        %1553 = vmatprep.subr.bf16.mxu0 0
        %1554 = vmatpush2.bf16.msra.mxu0 0
        %1555 = vmatprep.mubr.bf16.mxu0 0
        %1556 = vmatmul.mubr.bf16.gmra.mxu0 %v1476
        %v1557 = vpop.f32.mrf.mxu0
        %v1558 = vadd.f32 %v1317, %v1557
        %v1559 = vpop.f32.mrf.mxu0
        %v1560 = vpop.f32.mrf.mxu0
        %v1561 = vadd.f32 %v1320, %v1560
        %v1562 = vpop.f32.mrf.mxu0
        %1563 = vmatprep.mubr.bf16.mxu0 0
        %1564 = vmatmul.mubr.bf16.gmra.mxu0 %v1479
        %v1565 = vpop.f32.mrf.mxu0
        %v1566 = vadd.f32 %v1325, %v1565
        %v1567 = vpop.f32.mrf.mxu0
        %v1568 = vpop.f32.mrf.mxu0
        %v1569 = vadd.f32 %v1328, %v1568
        %v1570 = vpop.f32.mrf.mxu0
        %1571 = vmatprep.mubr.bf16.mxu0 0
        %1572 = vmatmul.mubr.bf16.gmra.mxu0 %v1482
        %v1573 = vpop.f32.mrf.mxu0
        %v1574 = vadd.f32 %v1333, %v1573
        %v1575 = vpop.f32.mrf.mxu0
        %v1576 = vpop.f32.mrf.mxu0
        %v1577 = vadd.f32 %v1336, %v1576
        %v1578 = vpop.f32.mrf.mxu0
        %1579 = vmatprep.mubr.bf16.mxu0 0
        %1580 = vmatmul.mubr.bf16.gmra.mxu0 %v1485
        %v1581 = vpop.f32.mrf.mxu0
        %v1582 = vadd.f32 %v1341, %v1581
        %v1583 = vpop.f32.mrf.mxu0
        %v1584 = vpop.f32.mrf.mxu0
        %v1585 = vadd.f32 %v1344, %v1584
        %v1586 = vpop.f32.mrf.mxu0
        %1587 = vmatprep.mubr.bf16.mxu0 0
        %1588 = vmatmul.mubr.bf16.gmra.mxu0 %v1488
        %v1589 = vpop.f32.mrf.mxu0
        %v1590 = vadd.f32 %v1349, %v1589
        %v1591 = vpop.f32.mrf.mxu0
        %v1592 = vpop.f32.mrf.mxu0
        %v1593 = vadd.f32 %v1352, %v1592
        %v1594 = vpop.f32.mrf.mxu0
        %1595 = vmatprep.mubr.bf16.mxu0 0
        %1596 = vmatmul.mubr.bf16.gmra.mxu0 %v1491
        %v1597 = vpop.f32.mrf.mxu0
        %v1598 = vadd.f32 %v1357, %v1597
        %v1599 = vpop.f32.mrf.mxu0
        %v1600 = vpop.f32.mrf.mxu0
        %v1601 = vadd.f32 %v1360, %v1600
        %v1602 = vpop.f32.mrf.mxu0
        %1603 = vmatprep.mubr.bf16.mxu0 0
        %1604 = vmatmul.mubr.bf16.gmra.mxu0 %v1494
        %v1605 = vpop.f32.mrf.mxu0
        %v1606 = vadd.f32 %v1365, %v1605
        %v1607 = vpop.f32.mrf.mxu0
        %v1608 = vpop.f32.mrf.mxu0
        %v1609 = vadd.f32 %v1368, %v1608
        %v1610 = vpop.f32.mrf.mxu0
        %1611 = vmatprep.mubr.bf16.mxu0 0
        %1612 = vmatmul.mubr.bf16.gmra.mxu0 %v1497
        %v1613 = vpop.f32.mrf.mxu0
        %v1614 = vadd.f32 %v1373, %v1613
        %v1615 = vpop.f32.mrf.mxu0
        %v1616 = vpop.f32.mrf.mxu0
        %v1617 = vadd.f32 %v1376, %v1616
        %v1618 = vpop.f32.mrf.mxu0
        %1619 = vmatprep.mubr.bf16.mxu0 0
        %1620 = vmatmul.mubr.bf16.gmra.mxu0 %v1500
        %v1621 = vpop.f32.mrf.mxu0
        %v1622 = vadd.f32 %v1381, %v1621
        %v1623 = vpop.f32.mrf.mxu0
        %v1624 = vpop.f32.mrf.mxu0
        %v1625 = vadd.f32 %v1384, %v1624
        %v1626 = vpop.f32.mrf.mxu0
        %1627 = vmatprep.mubr.bf16.mxu0 0
        %1628 = vmatmul.mubr.bf16.gmra.mxu0 %v1503
        %v1629 = vpop.f32.mrf.mxu0
        %v1630 = vadd.f32 %v1389, %v1629
        %v1631 = vpop.f32.mrf.mxu0
        %v1632 = vpop.f32.mrf.mxu0
        %v1633 = vadd.f32 %v1392, %v1632
        %v1634 = vpop.f32.mrf.mxu0
        %1635 = vmatprep.mubr.bf16.mxu0 0
        %1636 = vmatmul.mubr.bf16.gmra.mxu0 %v1506
        %v1637 = vpop.f32.mrf.mxu0
        %v1638 = vadd.f32 %v1397, %v1637
        %v1639 = vpop.f32.mrf.mxu0
        %v1640 = vpop.f32.mrf.mxu0
        %v1641 = vadd.f32 %v1400, %v1640
        %v1642 = vpop.f32.mrf.mxu0
        %1643 = vmatprep.mubr.bf16.mxu0 0
        %1644 = vmatmul.mubr.bf16.gmra.mxu0 %v1509
        %v1645 = vpop.f32.mrf.mxu0
        %v1646 = vadd.f32 %v1405, %v1645
        %v1647 = vpop.f32.mrf.mxu0
        %v1648 = vpop.f32.mrf.mxu0
        %v1649 = vadd.f32 %v1408, %v1648
        %v1650 = vpop.f32.mrf.mxu0
        %1651 = vmatprep.mubr.bf16.mxu0 0
        %1652 = vmatmul.mubr.bf16.gmra.mxu0 %v1512
        %v1653 = vpop.f32.mrf.mxu0
        %v1654 = vadd.f32 %v1413, %v1653
        %v1655 = vpop.f32.mrf.mxu0
        %v1656 = vpop.f32.mrf.mxu0
        %v1657 = vadd.f32 %v1416, %v1656
        %v1658 = vpop.f32.mrf.mxu0
        %1659 = vmatprep.mubr.bf16.mxu0 0
        %1660 = vmatmul.mubr.bf16.gmra.mxu0 %v1515
        %v1661 = vpop.f32.mrf.mxu0
        %v1662 = vadd.f32 %v1421, %v1661
        %v1663 = vpop.f32.mrf.mxu0
        %v1664 = vpop.f32.mrf.mxu0
        %v1665 = vadd.f32 %v1424, %v1664
        %v1666 = vpop.f32.mrf.mxu0
        %1667 = vmatprep.mubr.bf16.mxu0 0
        %1668 = vmatmul.mubr.bf16.gmra.mxu0 %v1518
        %v1669 = vpop.f32.mrf.mxu0
        %v1670 = vadd.f32 %v1429, %v1669
        %v1671 = vpop.f32.mrf.mxu0
        %v1672 = vpop.f32.mrf.mxu0
        %v1673 = vadd.f32 %v1432, %v1672
        %v1674 = vpop.f32.mrf.mxu0
        %1675 = vmatprep.mubr.bf16.mxu0 0
        %1676 = vmatmul.mubr.bf16.gmra.mxu0 %v1521
        %v1677 = vpop.f32.mrf.mxu0
        %v1678 = vadd.f32 %v1437, %v1677
        %v1679 = vpop.f32.mrf.mxu0
        %v1680 = vpop.f32.mrf.mxu0
        %v1681 = vadd.f32 %v1440, %v1680
        %v1682 = vpop.f32.mrf.mxu0
        %1683 = vdwg.mxu0
        %v1684 = vld [vmem:[%s7] sm:$0x1]
        %v1686 = vlaneseq
        %v1687 = vshrl.u32 %v1686, 7
        %v1688 = vsub.s32 0, %v1687
        %v1689 = vrot.slane %v1684, %v1688
        %v1691 = vadd.f32 %v1558, %v1689
        %v1692 = vadd.f32 %v1561, %v1689
        %v1693 = vadd.f32 %v1566, %v1689
        %v1694 = vadd.f32 %v1569, %v1689
        %v1695 = vadd.f32 %v1574, %v1689
        %v1696 = vadd.f32 %v1577, %v1689
        %v1697 = vadd.f32 %v1582, %v1689
        %v1698 = vadd.f32 %v1585, %v1689
        %v1699 = vadd.f32 %v1590, %v1689
        %v1700 = vadd.f32 %v1593, %v1689
        %v1701 = vadd.f32 %v1598, %v1689
        %v1702 = vadd.f32 %v1601, %v1689
        %v1703 = vadd.f32 %v1606, %v1689
        %v1704 = vadd.f32 %v1609, %v1689
        %v1705 = vadd.f32 %v1614, %v1689
        %v1706 = vadd.f32 %v1617, %v1689
        %v1707 = vadd.f32 %v1622, %v1689
        %v1708 = vadd.f32 %v1625, %v1689
        %v1709 = vadd.f32 %v1630, %v1689
        %v1710 = vadd.f32 %v1633, %v1689
        %v1711 = vadd.f32 %v1638, %v1689
        %v1712 = vadd.f32 %v1641, %v1689
        %v1713 = vadd.f32 %v1646, %v1689
        %v1714 = vadd.f32 %v1649, %v1689
        %v1715 = vadd.f32 %v1654, %v1689
        %v1716 = vadd.f32 %v1657, %v1689
        %v1717 = vadd.f32 %v1662, %v1689
        %v1718 = vadd.f32 %v1665, %v1689
        %v1719 = vadd.f32 %v1670, %v1689
        %v1720 = vadd.f32 %v1673, %v1689
        %v1721 = vadd.f32 %v1678, %v1689
        %v1722 = vadd.f32 %v1681, %v1689
        %v1723 = vld [vmem:[%s8] sm:$0x1]
        %v1724 = vld [vmem:[%s9] sm:$0x1]
        %v1725 = vsel %vm752, %v1691, 0.0
        %1726 = vadd.xlane.f32.xlu0 %v1725
        %v1727 = vpop.xlane.xlu0 %1726
        %v1728 = vsel %vm752, %v1692, 0.0
        %1729 = vadd.xlane.f32.xlu0 %v1728
        %v1730 = vpop.xlane.xlu0 %1729
        %v1731 = vsel %vm752, %v1693, 0.0
        %1732 = vadd.xlane.f32.xlu0 %v1731
        %v1733 = vpop.xlane.xlu0 %1732
        %v1734 = vsel %vm752, %v1694, 0.0
        %1735 = vadd.xlane.f32.xlu0 %v1734
        %v1736 = vpop.xlane.xlu0 %1735
        %v1737 = vsel %vm752, %v1695, 0.0
        %1738 = vadd.xlane.f32.xlu0 %v1737
        %v1739 = vpop.xlane.xlu0 %1738
        %v1740 = vsel %vm752, %v1696, 0.0
        %1741 = vadd.xlane.f32.xlu0 %v1740
        %v1742 = vpop.xlane.xlu0 %1741
        %v1743 = vsel %vm752, %v1697, 0.0
        %1744 = vadd.xlane.f32.xlu0 %v1743
        %v1745 = vpop.xlane.xlu0 %1744
        %v1746 = vsel %vm752, %v1698, 0.0
        %1747 = vadd.xlane.f32.xlu0 %v1746
        %v1748 = vpop.xlane.xlu0 %1747
        %v1749 = vsel %vm752, %v1699, 0.0
        %1750 = vadd.xlane.f32.xlu0 %v1749
        %v1751 = vpop.xlane.xlu0 %1750
        %v1752 = vsel %vm752, %v1700, 0.0
        %1753 = vadd.xlane.f32.xlu0 %v1752
        %v1754 = vpop.xlane.xlu0 %1753
        %v1755 = vsel %vm752, %v1701, 0.0
        %1756 = vadd.xlane.f32.xlu0 %v1755
        %v1757 = vpop.xlane.xlu0 %1756
        %v1758 = vsel %vm752, %v1702, 0.0
        %1759 = vadd.xlane.f32.xlu0 %v1758
        %v1760 = vpop.xlane.xlu0 %1759
        %v1761 = vsel %vm752, %v1703, 0.0
        %1762 = vadd.xlane.f32.xlu0 %v1761
        %v1763 = vpop.xlane.xlu0 %1762
        %v1764 = vsel %vm752, %v1704, 0.0
        %1765 = vadd.xlane.f32.xlu0 %v1764
        %v1766 = vpop.xlane.xlu0 %1765
        %v1767 = vsel %vm752, %v1705, 0.0
        %1768 = vadd.xlane.f32.xlu0 %v1767
        %v1769 = vpop.xlane.xlu0 %1768
        %v1770 = vsel %vm752, %v1706, 0.0
        %1771 = vadd.xlane.f32.xlu0 %v1770
        %v1772 = vpop.xlane.xlu0 %1771
        %v1773 = vsel %vm752, %v1707, 0.0
        %1774 = vadd.xlane.f32.xlu0 %v1773
        %v1775 = vpop.xlane.xlu0 %1774
        %v1776 = vsel %vm752, %v1708, 0.0
        %1777 = vadd.xlane.f32.xlu0 %v1776
        %v1778 = vpop.xlane.xlu0 %1777
        %v1779 = vsel %vm752, %v1709, 0.0
        %1780 = vadd.xlane.f32.xlu0 %v1779
        %v1781 = vpop.xlane.xlu0 %1780
        %v1782 = vsel %vm752, %v1710, 0.0
        %1783 = vadd.xlane.f32.xlu0 %v1782
        %v1784 = vpop.xlane.xlu0 %1783
        %v1785 = vsel %vm752, %v1711, 0.0
        %1786 = vadd.xlane.f32.xlu0 %v1785
        %v1787 = vpop.xlane.xlu0 %1786
        %v1788 = vsel %vm752, %v1712, 0.0
        %1789 = vadd.xlane.f32.xlu0 %v1788
        %v1790 = vpop.xlane.xlu0 %1789
        %v1791 = vsel %vm752, %v1713, 0.0
        %1792 = vadd.xlane.f32.xlu0 %v1791
        %v1793 = vpop.xlane.xlu0 %1792
        %v1794 = vsel %vm752, %v1714, 0.0
        %1795 = vadd.xlane.f32.xlu0 %v1794
        %v1796 = vpop.xlane.xlu0 %1795
        %v1797 = vsel %vm752, %v1715, 0.0
        %1798 = vadd.xlane.f32.xlu0 %v1797
        %v1799 = vpop.xlane.xlu0 %1798
        %v1800 = vsel %vm752, %v1716, 0.0
        %1801 = vadd.xlane.f32.xlu0 %v1800
        %v1802 = vpop.xlane.xlu0 %1801
        %v1803 = vsel %vm752, %v1717, 0.0
        %1804 = vadd.xlane.f32.xlu0 %v1803
        %v1805 = vpop.xlane.xlu0 %1804
        %v1806 = vsel %vm752, %v1718, 0.0
        %1807 = vadd.xlane.f32.xlu0 %v1806
        %v1808 = vpop.xlane.xlu0 %1807
        %v1809 = vsel %vm752, %v1719, 0.0
        %1810 = vadd.xlane.f32.xlu0 %v1809
        %v1811 = vpop.xlane.xlu0 %1810
        %v1812 = vsel %vm752, %v1720, 0.0
        %1813 = vadd.xlane.f32.xlu0 %v1812
        %v1814 = vpop.xlane.xlu0 %1813
        %v1815 = vsel %vm752, %v1721, 0.0
        %1816 = vadd.xlane.f32.xlu0 %v1815
        %v1817 = vpop.xlane.xlu0 %1816
        %v1818 = vsel %vm752, %v1722, 0.0
        %1819 = vadd.xlane.f32.xlu0 %v1818
        %v1820 = vpop.xlane.xlu0 %1819
        %v1821 = vmul.f32 %v1727, %v849
        %v1822 = vmul.f32 %v1730, %v849
        %v1823 = vmul.f32 %v1733, %v849
        %v1824 = vmul.f32 %v1736, %v849
        %v1825 = vmul.f32 %v1739, %v849
        %v1826 = vmul.f32 %v1742, %v849
        %v1827 = vmul.f32 %v1745, %v849
        %v1828 = vmul.f32 %v1748, %v849
        %v1829 = vmul.f32 %v1751, %v849
        %v1830 = vmul.f32 %v1754, %v849
        %v1831 = vmul.f32 %v1757, %v849
        %v1832 = vmul.f32 %v1760, %v849
        %v1833 = vmul.f32 %v1763, %v849
        %v1834 = vmul.f32 %v1766, %v849
        %v1835 = vmul.f32 %v1769, %v849
        %v1836 = vmul.f32 %v1772, %v849
        %v1837 = vmul.f32 %v1775, %v849
        %v1838 = vmul.f32 %v1778, %v849
        %v1839 = vmul.f32 %v1781, %v849
        %v1840 = vmul.f32 %v1784, %v849
        %v1841 = vmul.f32 %v1787, %v849
        %v1842 = vmul.f32 %v1790, %v849
        %v1843 = vmul.f32 %v1793, %v849
        %v1844 = vmul.f32 %v1796, %v849
        %v1845 = vmul.f32 %v1799, %v849
        %v1846 = vmul.f32 %v1802, %v849
        %v1847 = vmul.f32 %v1805, %v849
        %v1848 = vmul.f32 %v1808, %v849
        %v1849 = vmul.f32 %v1811, %v849
        %v1850 = vmul.f32 %v1814, %v849
        %v1851 = vmul.f32 %v1817, %v849
        %v1852 = vmul.f32 %v1820, %v849
        %v1853 = vsub.f32 %v1691, %v1821
        %v1854 = vsub.f32 %v1692, %v1822
        %v1855 = vsub.f32 %v1693, %v1823
        %v1856 = vsub.f32 %v1694, %v1824
        %v1857 = vsub.f32 %v1695, %v1825
        %v1858 = vsub.f32 %v1696, %v1826
        %v1859 = vsub.f32 %v1697, %v1827
        %v1860 = vsub.f32 %v1698, %v1828
        %v1861 = vsub.f32 %v1699, %v1829
        %v1862 = vsub.f32 %v1700, %v1830
        %v1863 = vsub.f32 %v1701, %v1831
        %v1864 = vsub.f32 %v1702, %v1832
        %v1865 = vsub.f32 %v1703, %v1833
        %v1866 = vsub.f32 %v1704, %v1834
        %v1867 = vsub.f32 %v1705, %v1835
        %v1868 = vsub.f32 %v1706, %v1836
        %v1869 = vsub.f32 %v1707, %v1837
        %v1870 = vsub.f32 %v1708, %v1838
        %v1871 = vsub.f32 %v1709, %v1839
        %v1872 = vsub.f32 %v1710, %v1840
        %v1873 = vsub.f32 %v1711, %v1841
        %v1874 = vsub.f32 %v1712, %v1842
        %v1875 = vsub.f32 %v1713, %v1843
        %v1876 = vsub.f32 %v1714, %v1844
        %v1877 = vsub.f32 %v1715, %v1845
        %v1878 = vsub.f32 %v1716, %v1846
        %v1879 = vsub.f32 %v1717, %v1847
        %v1880 = vsub.f32 %v1718, %v1848
        %v1881 = vsub.f32 %v1719, %v1849
        %v1882 = vsub.f32 %v1720, %v1850
        %v1883 = vsub.f32 %v1721, %v1851
        %v1884 = vsub.f32 %v1722, %v1852
        %v1885 = vmul.f32 %v1853, %v1853
        %v1886 = vmul.f32 %v1854, %v1854
        %v1887 = vmul.f32 %v1855, %v1855
        %v1888 = vmul.f32 %v1856, %v1856
        %v1889 = vmul.f32 %v1857, %v1857
        %v1890 = vmul.f32 %v1858, %v1858
        %v1891 = vmul.f32 %v1859, %v1859
        %v1892 = vmul.f32 %v1860, %v1860
        %v1893 = vmul.f32 %v1861, %v1861
        %v1894 = vmul.f32 %v1862, %v1862
        %v1895 = vmul.f32 %v1863, %v1863
        %v1896 = vmul.f32 %v1864, %v1864
        %v1897 = vmul.f32 %v1865, %v1865
        %v1898 = vmul.f32 %v1866, %v1866
        %v1899 = vmul.f32 %v1867, %v1867
        %v1900 = vmul.f32 %v1868, %v1868
        %v1901 = vmul.f32 %v1869, %v1869
        %v1902 = vmul.f32 %v1870, %v1870
        %v1903 = vmul.f32 %v1871, %v1871
        %v1904 = vmul.f32 %v1872, %v1872
        %v1905 = vmul.f32 %v1873, %v1873
        %v1906 = vmul.f32 %v1874, %v1874
        %v1907 = vmul.f32 %v1875, %v1875
        %v1908 = vmul.f32 %v1876, %v1876
        %v1909 = vmul.f32 %v1877, %v1877
        %v1910 = vmul.f32 %v1878, %v1878
        %v1911 = vmul.f32 %v1879, %v1879
        %v1912 = vmul.f32 %v1880, %v1880
        %v1913 = vmul.f32 %v1881, %v1881
        %v1914 = vmul.f32 %v1882, %v1882
        %v1915 = vmul.f32 %v1883, %v1883
        %v1916 = vmul.f32 %v1884, %v1884
        %v1917 = vsel %vm752, %v1885, 0.0
        %1918 = vadd.xlane.f32.xlu0 %v1917
        %v1919 = vpop.xlane.xlu0 %1918
        %v1920 = vsel %vm752, %v1886, 0.0
        %1921 = vadd.xlane.f32.xlu0 %v1920
        %v1922 = vpop.xlane.xlu0 %1921
        %v1923 = vsel %vm752, %v1887, 0.0
        %1924 = vadd.xlane.f32.xlu0 %v1923
        %v1925 = vpop.xlane.xlu0 %1924
        %v1926 = vsel %vm752, %v1888, 0.0
        %1927 = vadd.xlane.f32.xlu0 %v1926
        %v1928 = vpop.xlane.xlu0 %1927
        %v1929 = vsel %vm752, %v1889, 0.0
        %1930 = vadd.xlane.f32.xlu0 %v1929
        %v1931 = vpop.xlane.xlu0 %1930
        %v1932 = vsel %vm752, %v1890, 0.0
        %1933 = vadd.xlane.f32.xlu0 %v1932
        %v1934 = vpop.xlane.xlu0 %1933
        %v1935 = vsel %vm752, %v1891, 0.0
        %1936 = vadd.xlane.f32.xlu0 %v1935
        %v1937 = vpop.xlane.xlu0 %1936
        %v1938 = vsel %vm752, %v1892, 0.0
        %1939 = vadd.xlane.f32.xlu0 %v1938
        %v1940 = vpop.xlane.xlu0 %1939
        %v1941 = vsel %vm752, %v1893, 0.0
        %1942 = vadd.xlane.f32.xlu0 %v1941
        %v1943 = vpop.xlane.xlu0 %1942
        %v1944 = vsel %vm752, %v1894, 0.0
        %1945 = vadd.xlane.f32.xlu0 %v1944
        %v1946 = vpop.xlane.xlu0 %1945
        %v1947 = vsel %vm752, %v1895, 0.0
        %1948 = vadd.xlane.f32.xlu0 %v1947
        %v1949 = vpop.xlane.xlu0 %1948
        %v1950 = vsel %vm752, %v1896, 0.0
        %1951 = vadd.xlane.f32.xlu0 %v1950
        %v1952 = vpop.xlane.xlu0 %1951
        %v1953 = vsel %vm752, %v1897, 0.0
        %1954 = vadd.xlane.f32.xlu0 %v1953
        %v1955 = vpop.xlane.xlu0 %1954
        %v1956 = vsel %vm752, %v1898, 0.0
        %1957 = vadd.xlane.f32.xlu0 %v1956
        %v1958 = vpop.xlane.xlu0 %1957
        %v1959 = vsel %vm752, %v1899, 0.0
        %1960 = vadd.xlane.f32.xlu0 %v1959
        %v1961 = vpop.xlane.xlu0 %1960
        %v1962 = vsel %vm752, %v1900, 0.0
        %1963 = vadd.xlane.f32.xlu0 %v1962
        %v1964 = vpop.xlane.xlu0 %1963
        %v1965 = vsel %vm752, %v1901, 0.0
        %1966 = vadd.xlane.f32.xlu0 %v1965
        %v1967 = vpop.xlane.xlu0 %1966
        %v1968 = vsel %vm752, %v1902, 0.0
        %1969 = vadd.xlane.f32.xlu0 %v1968
        %v1970 = vpop.xlane.xlu0 %1969
        %v1971 = vsel %vm752, %v1903, 0.0
        %1972 = vadd.xlane.f32.xlu0 %v1971
        %v1973 = vpop.xlane.xlu0 %1972
        %v1974 = vsel %vm752, %v1904, 0.0
        %1975 = vadd.xlane.f32.xlu0 %v1974
        %v1976 = vpop.xlane.xlu0 %1975
        %v1977 = vsel %vm752, %v1905, 0.0
        %1978 = vadd.xlane.f32.xlu0 %v1977
        %v1979 = vpop.xlane.xlu0 %1978
        %v1980 = vsel %vm752, %v1906, 0.0
        %1981 = vadd.xlane.f32.xlu0 %v1980
        %v1982 = vpop.xlane.xlu0 %1981
        %v1983 = vsel %vm752, %v1907, 0.0
        %1984 = vadd.xlane.f32.xlu0 %v1983
        %v1985 = vpop.xlane.xlu0 %1984
        %v1986 = vsel %vm752, %v1908, 0.0
        %1987 = vadd.xlane.f32.xlu0 %v1986
        %v1988 = vpop.xlane.xlu0 %1987
        %v1989 = vsel %vm752, %v1909, 0.0
        %1990 = vadd.xlane.f32.xlu0 %v1989
        %v1991 = vpop.xlane.xlu0 %1990
        %v1992 = vsel %vm752, %v1910, 0.0
        %1993 = vadd.xlane.f32.xlu0 %v1992
        %v1994 = vpop.xlane.xlu0 %1993
        %v1995 = vsel %vm752, %v1911, 0.0
        %1996 = vadd.xlane.f32.xlu0 %v1995
        %v1997 = vpop.xlane.xlu0 %1996
        %v1998 = vsel %vm752, %v1912, 0.0
        %1999 = vadd.xlane.f32.xlu0 %v1998
        %v2000 = vpop.xlane.xlu0 %1999
        %v2001 = vsel %vm752, %v1913, 0.0
        %2002 = vadd.xlane.f32.xlu0 %v2001
        %v2003 = vpop.xlane.xlu0 %2002
        %v2004 = vsel %vm752, %v1914, 0.0
        %2005 = vadd.xlane.f32.xlu0 %v2004
        %v2006 = vpop.xlane.xlu0 %2005
        %v2007 = vsel %vm752, %v1915, 0.0
        %2008 = vadd.xlane.f32.xlu0 %v2007
        %v2009 = vpop.xlane.xlu0 %2008
        %v2010 = vsel %vm752, %v1916, 0.0
        %2011 = vadd.xlane.f32.xlu0 %v2010
        %v2012 = vpop.xlane.xlu0 %2011
        %v2013 = vmul.f32 %v1919, %v849
        %v2014 = vmul.f32 %v1922, %v849
        %v2015 = vmul.f32 %v1925, %v849
        %v2016 = vmul.f32 %v1928, %v849
        %v2017 = vmul.f32 %v1931, %v849
        %v2018 = vmul.f32 %v1934, %v849
        %v2019 = vmul.f32 %v1937, %v849
        %v2020 = vmul.f32 %v1940, %v849
        %v2021 = vmul.f32 %v1943, %v849
        %v2022 = vmul.f32 %v1946, %v849
        %v2023 = vmul.f32 %v1949, %v849
        %v2024 = vmul.f32 %v1952, %v849
        %v2025 = vmul.f32 %v1955, %v849
        %v2026 = vmul.f32 %v1958, %v849
        %v2027 = vmul.f32 %v1961, %v849
        %v2028 = vmul.f32 %v1964, %v849
        %v2029 = vmul.f32 %v1967, %v849
        %v2030 = vmul.f32 %v1970, %v849
        %v2031 = vmul.f32 %v1973, %v849
        %v2032 = vmul.f32 %v1976, %v849
        %v2033 = vmul.f32 %v1979, %v849
        %v2034 = vmul.f32 %v1982, %v849
        %v2035 = vmul.f32 %v1985, %v849
        %v2036 = vmul.f32 %v1988, %v849
        %v2037 = vmul.f32 %v1991, %v849
        %v2038 = vmul.f32 %v1994, %v849
        %v2039 = vmul.f32 %v1997, %v849
        %v2040 = vmul.f32 %v2000, %v849
        %v2041 = vmul.f32 %v2003, %v849
        %v2042 = vmul.f32 %v2006, %v849
        %v2043 = vmul.f32 %v2009, %v849
        %v2044 = vmul.f32 %v2012, %v849
        %v2045 = vadd.f32 %v2013, 1e-05
        %v2046 = vadd.f32 %v2014, 1e-05
        %v2047 = vadd.f32 %v2015, 1e-05
        %v2048 = vadd.f32 %v2016, 1e-05
        %v2049 = vadd.f32 %v2017, 1e-05
        %v2050 = vadd.f32 %v2018, 1e-05
        %v2051 = vadd.f32 %v2019, 1e-05
        %v2052 = vadd.f32 %v2020, 1e-05
        %v2053 = vadd.f32 %v2021, 1e-05
        %v2054 = vadd.f32 %v2022, 1e-05
        %v2055 = vadd.f32 %v2023, 1e-05
        %v2056 = vadd.f32 %v2024, 1e-05
        %v2057 = vadd.f32 %v2025, 1e-05
        %v2058 = vadd.f32 %v2026, 1e-05
        %v2059 = vadd.f32 %v2027, 1e-05
        %v2060 = vadd.f32 %v2028, 1e-05
        %v2061 = vadd.f32 %v2029, 1e-05
        %v2062 = vadd.f32 %v2030, 1e-05
        %v2063 = vadd.f32 %v2031, 1e-05
        %v2064 = vadd.f32 %v2032, 1e-05
        %v2065 = vadd.f32 %v2033, 1e-05
        %v2066 = vadd.f32 %v2034, 1e-05
        %v2067 = vadd.f32 %v2035, 1e-05
        %v2068 = vadd.f32 %v2036, 1e-05
        %v2069 = vadd.f32 %v2037, 1e-05
        %v2070 = vadd.f32 %v2038, 1e-05
        %v2071 = vadd.f32 %v2039, 1e-05
        %v2072 = vadd.f32 %v2040, 1e-05
        %v2073 = vadd.f32 %v2041, 1e-05
        %v2074 = vadd.f32 %v2042, 1e-05
        %v2075 = vadd.f32 %v2043, 1e-05
        %v2076 = vadd.f32 %v2044, 1e-05
        %v2077 = vrsqrt.pop %v2045
        %v2078 = vrsqrt.pop %v2046
        %v2079 = vrsqrt.pop %v2047
        %v2080 = vrsqrt.pop %v2048
        %v2081 = vrsqrt.pop %v2049
        %v2082 = vrsqrt.pop %v2050
        %v2083 = vrsqrt.pop %v2051
        %v2084 = vrsqrt.pop %v2052
        %v2085 = vrsqrt.pop %v2053
        %v2086 = vrsqrt.pop %v2054
        %v2087 = vrsqrt.pop %v2055
        %v2088 = vrsqrt.pop %v2056
        %v2089 = vrsqrt.pop %v2057
        %v2090 = vrsqrt.pop %v2058
        %v2091 = vrsqrt.pop %v2059
        %v2092 = vrsqrt.pop %v2060
        %v2093 = vrsqrt.pop %v2061
        %v2094 = vrsqrt.pop %v2062
        %v2095 = vrsqrt.pop %v2063
        %v2096 = vrsqrt.pop %v2064
        %v2097 = vrsqrt.pop %v2065
        %v2098 = vrsqrt.pop %v2066
        %v2099 = vrsqrt.pop %v2067
        %v2100 = vrsqrt.pop %v2068
        %v2101 = vrsqrt.pop %v2069
        %v2102 = vrsqrt.pop %v2070
        %v2103 = vrsqrt.pop %v2071
        %v2104 = vrsqrt.pop %v2072
        %v2105 = vrsqrt.pop %v2073
        %v2106 = vrsqrt.pop %v2074
        %v2107 = vrsqrt.pop %v2075
        %v2108 = vrsqrt.pop %v2076
        %v2109 = vmul.f32 %v1853, %v2077
        %v2110 = vmul.f32 %v1854, %v2078
        %v2111 = vmul.f32 %v1855, %v2079
        %v2112 = vmul.f32 %v1856, %v2080
        %v2113 = vmul.f32 %v1857, %v2081
        %v2114 = vmul.f32 %v1858, %v2082
        %v2115 = vmul.f32 %v1859, %v2083
        %v2116 = vmul.f32 %v1860, %v2084
        %v2117 = vmul.f32 %v1861, %v2085
        %v2118 = vmul.f32 %v1862, %v2086
        %v2119 = vmul.f32 %v1863, %v2087
        %v2120 = vmul.f32 %v1864, %v2088
        %v2121 = vmul.f32 %v1865, %v2089
        %v2122 = vmul.f32 %v1866, %v2090
        %v2123 = vmul.f32 %v1867, %v2091
        %v2124 = vmul.f32 %v1868, %v2092
        %v2125 = vmul.f32 %v1869, %v2093
        %v2126 = vmul.f32 %v1870, %v2094
        %v2127 = vmul.f32 %v1871, %v2095
        %v2128 = vmul.f32 %v1872, %v2096
        %v2129 = vmul.f32 %v1873, %v2097
        %v2130 = vmul.f32 %v1874, %v2098
        %v2131 = vmul.f32 %v1875, %v2099
        %v2132 = vmul.f32 %v1876, %v2100
        %v2133 = vmul.f32 %v1877, %v2101
        %v2134 = vmul.f32 %v1878, %v2102
        %v2135 = vmul.f32 %v1879, %v2103
        %v2136 = vmul.f32 %v1880, %v2104
        %v2137 = vmul.f32 %v1881, %v2105
        %v2138 = vmul.f32 %v1882, %v2106
        %v2139 = vmul.f32 %v1883, %v2107
        %v2140 = vmul.f32 %v1884, %v2108
        %v2142 = vlaneseq
        %v2143 = vshrl.u32 %v2142, 7
        %v2144 = vsub.s32 0, %v2143
        %v2145 = vrot.slane %v1723, %v2144
        %v2147 = vmul.f32 %v2109, %v2145
        %v2148 = vmul.f32 %v2110, %v2145
        %v2149 = vmul.f32 %v2111, %v2145
        %v2150 = vmul.f32 %v2112, %v2145
        %v2151 = vmul.f32 %v2113, %v2145
        %v2152 = vmul.f32 %v2114, %v2145
        %v2153 = vmul.f32 %v2115, %v2145
        %v2154 = vmul.f32 %v2116, %v2145
        %v2155 = vmul.f32 %v2117, %v2145
        %v2156 = vmul.f32 %v2118, %v2145
        %v2157 = vmul.f32 %v2119, %v2145
        %v2158 = vmul.f32 %v2120, %v2145
        %v2159 = vmul.f32 %v2121, %v2145
        %v2160 = vmul.f32 %v2122, %v2145
        %v2161 = vmul.f32 %v2123, %v2145
        %v2162 = vmul.f32 %v2124, %v2145
        %v2163 = vmul.f32 %v2125, %v2145
        %v2164 = vmul.f32 %v2126, %v2145
        %v2165 = vmul.f32 %v2127, %v2145
        %v2166 = vmul.f32 %v2128, %v2145
        %v2167 = vmul.f32 %v2129, %v2145
        %v2168 = vmul.f32 %v2130, %v2145
        %v2169 = vmul.f32 %v2131, %v2145
        %v2170 = vmul.f32 %v2132, %v2145
        %v2171 = vmul.f32 %v2133, %v2145
        %v2172 = vmul.f32 %v2134, %v2145
        %v2173 = vmul.f32 %v2135, %v2145
        %v2174 = vmul.f32 %v2136, %v2145
        %v2175 = vmul.f32 %v2137, %v2145
        %v2176 = vmul.f32 %v2138, %v2145
        %v2177 = vmul.f32 %v2139, %v2145
        %v2178 = vmul.f32 %v2140, %v2145
        %v2180 = vlaneseq
        %v2181 = vshrl.u32 %v2180, 7
        %v2182 = vsub.s32 0, %v2181
        %v2183 = vrot.slane %v1724, %v2182
        %v2185 = vadd.f32 %v2147, %v2183
        %v2186 = vadd.f32 %v2148, %v2183
        %v2187 = vadd.f32 %v2149, %v2183
        %v2188 = vadd.f32 %v2150, %v2183
        %v2189 = vadd.f32 %v2151, %v2183
        %v2190 = vadd.f32 %v2152, %v2183
        %v2191 = vadd.f32 %v2153, %v2183
        %v2192 = vadd.f32 %v2154, %v2183
        %v2193 = vadd.f32 %v2155, %v2183
        %v2194 = vadd.f32 %v2156, %v2183
        %v2195 = vadd.f32 %v2157, %v2183
        %v2196 = vadd.f32 %v2158, %v2183
        %v2197 = vadd.f32 %v2159, %v2183
        %v2198 = vadd.f32 %v2160, %v2183
        %v2199 = vadd.f32 %v2161, %v2183
        %v2200 = vadd.f32 %v2162, %v2183
        %v2201 = vadd.f32 %v2163, %v2183
        %v2202 = vadd.f32 %v2164, %v2183
        %v2203 = vadd.f32 %v2165, %v2183
        %v2204 = vadd.f32 %v2166, %v2183
        %v2205 = vadd.f32 %v2167, %v2183
        %v2206 = vadd.f32 %v2168, %v2183
        %v2207 = vadd.f32 %v2169, %v2183
        %v2208 = vadd.f32 %v2170, %v2183
        %v2209 = vadd.f32 %v2171, %v2183
        %v2210 = vadd.f32 %v2172, %v2183
        %v2211 = vadd.f32 %v2173, %v2183
        %v2212 = vadd.f32 %v2174, %v2183
        %v2213 = vadd.f32 %v2175, %v2183
        %v2214 = vadd.f32 %v2176, %v2183
        %v2215 = vadd.f32 %v2177, %v2183
        %v2216 = vadd.f32 %v2178, %v2183
        %v2217 = vmax.f32 %v2185, 0.0
        %v2218 = vmax.f32 %v2186, 0.0
        %v2219 = vmax.f32 %v2187, 0.0
        %v2220 = vmax.f32 %v2188, 0.0
        %v2221 = vmax.f32 %v2189, 0.0
        %v2222 = vmax.f32 %v2190, 0.0
        %v2223 = vmax.f32 %v2191, 0.0
        %v2224 = vmax.f32 %v2192, 0.0
        %v2225 = vmax.f32 %v2193, 0.0
        %v2226 = vmax.f32 %v2194, 0.0
        %v2227 = vmax.f32 %v2195, 0.0
        %v2228 = vmax.f32 %v2196, 0.0
        %v2229 = vmax.f32 %v2197, 0.0
        %v2230 = vmax.f32 %v2198, 0.0
        %v2231 = vmax.f32 %v2199, 0.0
        %v2232 = vmax.f32 %v2200, 0.0
        %v2233 = vmax.f32 %v2201, 0.0
        %v2234 = vmax.f32 %v2202, 0.0
        %v2235 = vmax.f32 %v2203, 0.0
        %v2236 = vmax.f32 %v2204, 0.0
        %v2237 = vmax.f32 %v2205, 0.0
        %v2238 = vmax.f32 %v2206, 0.0
        %v2239 = vmax.f32 %v2207, 0.0
        %v2240 = vmax.f32 %v2208, 0.0
        %v2241 = vmax.f32 %v2209, 0.0
        %v2242 = vmax.f32 %v2210, 0.0
        %v2243 = vmax.f32 %v2211, 0.0
        %v2244 = vmax.f32 %v2212, 0.0
        %v2245 = vmax.f32 %v2213, 0.0
        %v2246 = vmax.f32 %v2214, 0.0
        %v2247 = vmax.f32 %v2215, 0.0
        %v2248 = vmax.f32 %v2216, 0.0
        %v2249 = vpack.c.bf16 %v2218, %v2217
        %v2250 = vpack.c.bf16 %v2220, %v2219
        %v2251 = vpack.c.bf16 %v2222, %v2221
        %v2252 = vpack.c.bf16 %v2224, %v2223
        %v2253 = vpack.c.bf16 %v2226, %v2225
        %v2254 = vpack.c.bf16 %v2228, %v2227
        %v2255 = vpack.c.bf16 %v2230, %v2229
        %v2256 = vpack.c.bf16 %v2232, %v2231
        %v2257 = vpack.c.bf16 %v2234, %v2233
        %v2258 = vpack.c.bf16 %v2236, %v2235
        %v2259 = vpack.c.bf16 %v2238, %v2237
        %v2260 = vpack.c.bf16 %v2240, %v2239
        %v2261 = vpack.c.bf16 %v2242, %v2241
        %v2262 = vpack.c.bf16 %v2244, %v2243
        %v2263 = vpack.c.bf16 %v2246, %v2245
        %v2264 = vpack.c.bf16 %v2248, %v2247
        %s2265 = scalar_lea.vmem %s5, 16
        %v2266 = vld [vmem:[%s2265] sm:$0xf]
        %v2267 = vld [vmem:[%s2265 + $0x4] sm:$0xf]
        %v2268 = vld [vmem:[%s2265 + $0x8] sm:$0xf]
        %v2269 = vld [vmem:[%s2265 + $0xc] sm:$0xf]
        %v2274 = vunpack.c.l.b16 %v2266
        %v2275 = vunpack.c.l.b16 %v2267
        %v2276 = vunpack.c.l.b16 %v2268
        %v2277 = vunpack.c.l.b16 %v2269
        %v2278 = vpack.c.b16 %v2275, %v2274
        %v2279 = vpack.c.b16 %v2277, %v2276
        %2314 = vrot.lane.b32.xlu0 %v1317, 96
        %v2315 = vpop.permute.xlu0 %2314
        %2316 = vrot.lane.b32.xlu0 %v1320, 96
        %v2317 = vpop.permute.xlu0 %2316
        %2318 = vrot.lane.b32.xlu0 %v1325, 96
        %v2319 = vpop.permute.xlu0 %2318
        %2320 = vrot.lane.b32.xlu0 %v1328, 96
        %v2321 = vpop.permute.xlu0 %2320
        %2322 = vrot.lane.b32.xlu0 %v1333, 96
        %v2323 = vpop.permute.xlu0 %2322
        %2324 = vrot.lane.b32.xlu0 %v1336, 96
        %v2325 = vpop.permute.xlu0 %2324
        %2326 = vrot.lane.b32.xlu0 %v1341, 96
        %v2327 = vpop.permute.xlu0 %2326
        %2328 = vrot.lane.b32.xlu0 %v1344, 96
        %v2329 = vpop.permute.xlu0 %2328
        %2330 = vrot.lane.b32.xlu0 %v1349, 96
        %v2331 = vpop.permute.xlu0 %2330
        %2332 = vrot.lane.b32.xlu0 %v1352, 96
        %v2333 = vpop.permute.xlu0 %2332
        %2334 = vrot.lane.b32.xlu0 %v1357, 96
        %v2335 = vpop.permute.xlu0 %2334
        %2336 = vrot.lane.b32.xlu0 %v1360, 96
        %v2337 = vpop.permute.xlu0 %2336
        %2338 = vrot.lane.b32.xlu0 %v1365, 96
        %v2339 = vpop.permute.xlu0 %2338
        %2340 = vrot.lane.b32.xlu0 %v1368, 96
        %v2341 = vpop.permute.xlu0 %2340
        %2342 = vrot.lane.b32.xlu0 %v1373, 96
        %v2343 = vpop.permute.xlu0 %2342
        %2344 = vrot.lane.b32.xlu0 %v1376, 96
        %v2345 = vpop.permute.xlu0 %2344
        %2346 = vrot.lane.b32.xlu0 %v1381, 96
        %v2347 = vpop.permute.xlu0 %2346
        %2348 = vrot.lane.b32.xlu0 %v1384, 96
        %v2349 = vpop.permute.xlu0 %2348
        %2350 = vrot.lane.b32.xlu0 %v1389, 96
        %v2351 = vpop.permute.xlu0 %2350
        %2352 = vrot.lane.b32.xlu0 %v1392, 96
        %v2353 = vpop.permute.xlu0 %2352
        %2354 = vrot.lane.b32.xlu0 %v1397, 96
        %v2355 = vpop.permute.xlu0 %2354
        %2356 = vrot.lane.b32.xlu0 %v1400, 96
        %v2357 = vpop.permute.xlu0 %2356
        %2358 = vrot.lane.b32.xlu0 %v1405, 96
        %v2359 = vpop.permute.xlu0 %2358
        %2360 = vrot.lane.b32.xlu0 %v1408, 96
        %v2361 = vpop.permute.xlu0 %2360
        %2362 = vrot.lane.b32.xlu0 %v1413, 96
        %v2363 = vpop.permute.xlu0 %2362
        %2364 = vrot.lane.b32.xlu0 %v1416, 96
        %v2365 = vpop.permute.xlu0 %2364
        %2366 = vrot.lane.b32.xlu0 %v1421, 96
        %v2367 = vpop.permute.xlu0 %2366
        %2368 = vrot.lane.b32.xlu0 %v1424, 96
        %v2369 = vpop.permute.xlu0 %2368
        %2370 = vrot.lane.b32.xlu0 %v1429, 96
        %v2371 = vpop.permute.xlu0 %2370
        %2372 = vrot.lane.b32.xlu0 %v1432, 96
        %v2373 = vpop.permute.xlu0 %2372
        %2374 = vrot.lane.b32.xlu0 %v1437, 96
        %v2375 = vpop.permute.xlu0 %2374
        %2376 = vrot.lane.b32.xlu0 %v1440, 96
        %v2377 = vpop.permute.xlu0 %2376
        %v2411 = vsel %vm752, %v2249, 0
        %v2414 = vsel %vm752, %v2250, 0
        %v2417 = vsel %vm752, %v2251, 0
        %v2420 = vsel %vm752, %v2252, 0
        %v2423 = vsel %vm752, %v2253, 0
        %v2426 = vsel %vm752, %v2254, 0
        %v2429 = vsel %vm752, %v2255, 0
        %v2432 = vsel %vm752, %v2256, 0
        %v2435 = vsel %vm752, %v2257, 0
        %v2438 = vsel %vm752, %v2258, 0
        %v2441 = vsel %vm752, %v2259, 0
        %v2444 = vsel %vm752, %v2260, 0
        %v2447 = vsel %vm752, %v2261, 0
        %v2450 = vsel %vm752, %v2262, 0
        %v2453 = vsel %vm752, %v2263, 0
        %v2456 = vsel %vm752, %v2264, 0
        %2458 = vmatprep.subr.bf16.mxu0 0
        %2459 = vmatpush1.bf16.msra.mxu0 0
        %2460 = vmatprep.subr.bf16.mxu0 0
        %2461 = vmatpush1.bf16.msra.mxu0 0
        %2462 = vmatprep.subr.bf16.mxu0 0
        %2463 = vmatpush1.bf16.msra.mxu0 0
        %2464 = vmatprep.subr.bf16.mxu0 0
        %2465 = vmatpush1.bf16.msra.mxu0 0
        %2466 = vmatprep.subr.bf16.mxu0 0
        %2467 = vmatpush1.bf16.msra.mxu0 0
        %2468 = vmatprep.subr.bf16.mxu0 0
        %2469 = vmatpush1.bf16.msra.mxu0 0
        %2470 = vmatprep.subr.bf16.mxu0 0
        %2471 = vmatpush1.bf16.msra.mxu0 %v2279
        %2472 = vmatprep.subr.bf16.mxu0 0
        %2473 = vmatpush1.bf16.msra.mxu0 %v2278
        %2474 = vmatprep.subr.bf16.mxu0 0
        %2475 = vmatpush2.bf16.msra.mxu0 0
        %2476 = vmatprep.subr.bf16.mxu0 0
        %2477 = vmatpush2.bf16.msra.mxu0 0
        %2478 = vmatprep.subr.bf16.mxu0 0
        %2479 = vmatpush2.bf16.msra.mxu0 0
        %2480 = vmatprep.subr.bf16.mxu0 0
        %2481 = vmatpush2.bf16.msra.mxu0 0
        %2482 = vmatprep.subr.bf16.mxu0 0
        %2483 = vmatpush2.bf16.msra.mxu0 0
        %2484 = vmatprep.subr.bf16.mxu0 0
        %2485 = vmatpush2.bf16.msra.mxu0 0
        %2486 = vmatprep.subr.bf16.mxu0 0
        %2487 = vmatpush2.bf16.msra.mxu0 0
        %2488 = vmatprep.subr.bf16.mxu0 0
        %2489 = vmatpush2.bf16.msra.mxu0 0
        %2490 = vmatprep.mubr.bf16.mxu0 0
        %2491 = vmatmul.mubr.bf16.gmra.mxu0 %v2411
        %v2492 = vpop.f32.mrf.mxu0
        %v2493 = vadd.f32 %v2315, %v2492
        %v2494 = vpop.f32.mrf.mxu0
        %v2495 = vpop.f32.mrf.mxu0
        %v2496 = vadd.f32 %v2317, %v2495
        %v2497 = vpop.f32.mrf.mxu0
        %2498 = vmatprep.mubr.bf16.mxu0 0
        %2499 = vmatmul.mubr.bf16.gmra.mxu0 %v2414
        %v2500 = vpop.f32.mrf.mxu0
        %v2501 = vadd.f32 %v2319, %v2500
        %v2502 = vpop.f32.mrf.mxu0
        %v2503 = vpop.f32.mrf.mxu0
        %v2504 = vadd.f32 %v2321, %v2503
        %v2505 = vpop.f32.mrf.mxu0
        %2506 = vmatprep.mubr.bf16.mxu0 0
        %2507 = vmatmul.mubr.bf16.gmra.mxu0 %v2417
        %v2508 = vpop.f32.mrf.mxu0
        %v2509 = vadd.f32 %v2323, %v2508
        %v2510 = vpop.f32.mrf.mxu0
        %v2511 = vpop.f32.mrf.mxu0
        %v2512 = vadd.f32 %v2325, %v2511
        %v2513 = vpop.f32.mrf.mxu0
        %2514 = vmatprep.mubr.bf16.mxu0 0
        %2515 = vmatmul.mubr.bf16.gmra.mxu0 %v2420
        %v2516 = vpop.f32.mrf.mxu0
        %v2517 = vadd.f32 %v2327, %v2516
        %v2518 = vpop.f32.mrf.mxu0
        %v2519 = vpop.f32.mrf.mxu0
        %v2520 = vadd.f32 %v2329, %v2519
        %v2521 = vpop.f32.mrf.mxu0
        %2522 = vmatprep.mubr.bf16.mxu0 0
        %2523 = vmatmul.mubr.bf16.gmra.mxu0 %v2423
        %v2524 = vpop.f32.mrf.mxu0
        %v2525 = vadd.f32 %v2331, %v2524
        %v2526 = vpop.f32.mrf.mxu0
        %v2527 = vpop.f32.mrf.mxu0
        %v2528 = vadd.f32 %v2333, %v2527
        %v2529 = vpop.f32.mrf.mxu0
        %2530 = vmatprep.mubr.bf16.mxu0 0
        %2531 = vmatmul.mubr.bf16.gmra.mxu0 %v2426
        %v2532 = vpop.f32.mrf.mxu0
        %v2533 = vadd.f32 %v2335, %v2532
        %v2534 = vpop.f32.mrf.mxu0
        %v2535 = vpop.f32.mrf.mxu0
        %v2536 = vadd.f32 %v2337, %v2535
        %v2537 = vpop.f32.mrf.mxu0
        %2538 = vmatprep.mubr.bf16.mxu0 0
        %2539 = vmatmul.mubr.bf16.gmra.mxu0 %v2429
        %v2540 = vpop.f32.mrf.mxu0
        %v2541 = vadd.f32 %v2339, %v2540
        %v2542 = vpop.f32.mrf.mxu0
        %v2543 = vpop.f32.mrf.mxu0
        %v2544 = vadd.f32 %v2341, %v2543
        %v2545 = vpop.f32.mrf.mxu0
        %2546 = vmatprep.mubr.bf16.mxu0 0
        %2547 = vmatmul.mubr.bf16.gmra.mxu0 %v2432
        %v2548 = vpop.f32.mrf.mxu0
        %v2549 = vadd.f32 %v2343, %v2548
        %v2550 = vpop.f32.mrf.mxu0
        %v2551 = vpop.f32.mrf.mxu0
        %v2552 = vadd.f32 %v2345, %v2551
        %v2553 = vpop.f32.mrf.mxu0
        %2554 = vmatprep.mubr.bf16.mxu0 0
        %2555 = vmatmul.mubr.bf16.gmra.mxu0 %v2435
        %v2556 = vpop.f32.mrf.mxu0
        %v2557 = vadd.f32 %v2347, %v2556
        %v2558 = vpop.f32.mrf.mxu0
        %v2559 = vpop.f32.mrf.mxu0
        %v2560 = vadd.f32 %v2349, %v2559
        %v2561 = vpop.f32.mrf.mxu0
        %2562 = vmatprep.mubr.bf16.mxu0 0
        %2563 = vmatmul.mubr.bf16.gmra.mxu0 %v2438
        %v2564 = vpop.f32.mrf.mxu0
        %v2565 = vadd.f32 %v2351, %v2564
        %v2566 = vpop.f32.mrf.mxu0
        %v2567 = vpop.f32.mrf.mxu0
        %v2568 = vadd.f32 %v2353, %v2567
        %v2569 = vpop.f32.mrf.mxu0
        %2570 = vmatprep.mubr.bf16.mxu0 0
        %2571 = vmatmul.mubr.bf16.gmra.mxu0 %v2441
        %v2572 = vpop.f32.mrf.mxu0
        %v2573 = vadd.f32 %v2355, %v2572
        %v2574 = vpop.f32.mrf.mxu0
        %v2575 = vpop.f32.mrf.mxu0
        %v2576 = vadd.f32 %v2357, %v2575
        %v2577 = vpop.f32.mrf.mxu0
        %2578 = vmatprep.mubr.bf16.mxu0 0
        %2579 = vmatmul.mubr.bf16.gmra.mxu0 %v2444
        %v2580 = vpop.f32.mrf.mxu0
        %v2581 = vadd.f32 %v2359, %v2580
        %v2582 = vpop.f32.mrf.mxu0
        %v2583 = vpop.f32.mrf.mxu0
        %v2584 = vadd.f32 %v2361, %v2583
        %v2585 = vpop.f32.mrf.mxu0
        %2586 = vmatprep.mubr.bf16.mxu0 0
        %2587 = vmatmul.mubr.bf16.gmra.mxu0 %v2447
        %v2588 = vpop.f32.mrf.mxu0
        %v2589 = vadd.f32 %v2363, %v2588
        %v2590 = vpop.f32.mrf.mxu0
        %v2591 = vpop.f32.mrf.mxu0
        %v2592 = vadd.f32 %v2365, %v2591
        %v2593 = vpop.f32.mrf.mxu0
        %2594 = vmatprep.mubr.bf16.mxu0 0
        %2595 = vmatmul.mubr.bf16.gmra.mxu0 %v2450
        %v2596 = vpop.f32.mrf.mxu0
        %v2597 = vadd.f32 %v2367, %v2596
        %v2598 = vpop.f32.mrf.mxu0
        %v2599 = vpop.f32.mrf.mxu0
        %v2600 = vadd.f32 %v2369, %v2599
        %v2601 = vpop.f32.mrf.mxu0
        %2602 = vmatprep.mubr.bf16.mxu0 0
        %2603 = vmatmul.mubr.bf16.gmra.mxu0 %v2453
        %v2604 = vpop.f32.mrf.mxu0
        %v2605 = vadd.f32 %v2371, %v2604
        %v2606 = vpop.f32.mrf.mxu0
        %v2607 = vpop.f32.mrf.mxu0
        %v2608 = vadd.f32 %v2373, %v2607
        %v2609 = vpop.f32.mrf.mxu0
        %2610 = vmatprep.mubr.bf16.mxu0 0
        %2611 = vmatmul.mubr.bf16.gmra.mxu0 %v2456
        %v2612 = vpop.f32.mrf.mxu0
        %v2613 = vadd.f32 %v2375, %v2612
        %v2614 = vpop.f32.mrf.mxu0
        %v2615 = vpop.f32.mrf.mxu0
        %v2616 = vadd.f32 %v2377, %v2615
        %v2617 = vpop.f32.mrf.mxu0
        %2618 = vdwg.mxu0
        %s2619 = scalar_lea.vmem %s7, 1
        %v2620 = vld [vmem:[%s2619] sm:$0x1]
        %v2622 = vlaneseq
        %v2623 = vshrl.u32 %v2622, 7
        %v2624 = vsub.s32 0, %v2623
        %v2625 = vrot.slane %v2620, %v2624
        %v2627 = vadd.f32 %v2493, %v2625
        %v2628 = vadd.f32 %v2496, %v2625
        %v2629 = vadd.f32 %v2501, %v2625
        %v2630 = vadd.f32 %v2504, %v2625
        %v2631 = vadd.f32 %v2509, %v2625
        %v2632 = vadd.f32 %v2512, %v2625
        %v2633 = vadd.f32 %v2517, %v2625
        %v2634 = vadd.f32 %v2520, %v2625
        %v2635 = vadd.f32 %v2525, %v2625
        %v2636 = vadd.f32 %v2528, %v2625
        %v2637 = vadd.f32 %v2533, %v2625
        %v2638 = vadd.f32 %v2536, %v2625
        %v2639 = vadd.f32 %v2541, %v2625
        %v2640 = vadd.f32 %v2544, %v2625
        %v2641 = vadd.f32 %v2549, %v2625
        %v2642 = vadd.f32 %v2552, %v2625
        %v2643 = vadd.f32 %v2557, %v2625
        %v2644 = vadd.f32 %v2560, %v2625
        %v2645 = vadd.f32 %v2565, %v2625
        %v2646 = vadd.f32 %v2568, %v2625
        %v2647 = vadd.f32 %v2573, %v2625
        %v2648 = vadd.f32 %v2576, %v2625
        %v2649 = vadd.f32 %v2581, %v2625
        %v2650 = vadd.f32 %v2584, %v2625
        %v2651 = vadd.f32 %v2589, %v2625
        %v2652 = vadd.f32 %v2592, %v2625
        %v2653 = vadd.f32 %v2597, %v2625
        %v2654 = vadd.f32 %v2600, %v2625
        %v2655 = vadd.f32 %v2605, %v2625
        %v2656 = vadd.f32 %v2608, %v2625
        %v2657 = vadd.f32 %v2613, %v2625
        %v2658 = vadd.f32 %v2616, %v2625
        %s2659 = scalar_lea.vmem %s8, 1
        %v2660 = vld [vmem:[%s2659] sm:$0x1]
        %s2661 = scalar_lea.vmem %s9, 1
        %v2662 = vld [vmem:[%s2661] sm:$0x1]
        %v2663 = vsel %vm752, %v2627, 0.0
        %2664 = vadd.xlane.f32.xlu0 %v2663
        %v2665 = vpop.xlane.xlu0 %2664
        %v2666 = vsel %vm752, %v2628, 0.0
        %2667 = vadd.xlane.f32.xlu0 %v2666
        %v2668 = vpop.xlane.xlu0 %2667
        %v2669 = vsel %vm752, %v2629, 0.0
        %2670 = vadd.xlane.f32.xlu0 %v2669
        %v2671 = vpop.xlane.xlu0 %2670
        %v2672 = vsel %vm752, %v2630, 0.0
        %2673 = vadd.xlane.f32.xlu0 %v2672
        %v2674 = vpop.xlane.xlu0 %2673
        %v2675 = vsel %vm752, %v2631, 0.0
        %2676 = vadd.xlane.f32.xlu0 %v2675
        %v2677 = vpop.xlane.xlu0 %2676
        %v2678 = vsel %vm752, %v2632, 0.0
        %2679 = vadd.xlane.f32.xlu0 %v2678
        %v2680 = vpop.xlane.xlu0 %2679
        %v2681 = vsel %vm752, %v2633, 0.0
        %2682 = vadd.xlane.f32.xlu0 %v2681
        %v2683 = vpop.xlane.xlu0 %2682
        %v2684 = vsel %vm752, %v2634, 0.0
        %2685 = vadd.xlane.f32.xlu0 %v2684
        %v2686 = vpop.xlane.xlu0 %2685
        %v2687 = vsel %vm752, %v2635, 0.0
        %2688 = vadd.xlane.f32.xlu0 %v2687
        %v2689 = vpop.xlane.xlu0 %2688
        %v2690 = vsel %vm752, %v2636, 0.0
        %2691 = vadd.xlane.f32.xlu0 %v2690
        %v2692 = vpop.xlane.xlu0 %2691
        %v2693 = vsel %vm752, %v2637, 0.0
        %2694 = vadd.xlane.f32.xlu0 %v2693
        %v2695 = vpop.xlane.xlu0 %2694
        %v2696 = vsel %vm752, %v2638, 0.0
        %2697 = vadd.xlane.f32.xlu0 %v2696
        %v2698 = vpop.xlane.xlu0 %2697
        %v2699 = vsel %vm752, %v2639, 0.0
        %2700 = vadd.xlane.f32.xlu0 %v2699
        %v2701 = vpop.xlane.xlu0 %2700
        %v2702 = vsel %vm752, %v2640, 0.0
        %2703 = vadd.xlane.f32.xlu0 %v2702
        %v2704 = vpop.xlane.xlu0 %2703
        %v2705 = vsel %vm752, %v2641, 0.0
        %2706 = vadd.xlane.f32.xlu0 %v2705
        %v2707 = vpop.xlane.xlu0 %2706
        %v2708 = vsel %vm752, %v2642, 0.0
        %2709 = vadd.xlane.f32.xlu0 %v2708
        %v2710 = vpop.xlane.xlu0 %2709
        %v2711 = vsel %vm752, %v2643, 0.0
        %2712 = vadd.xlane.f32.xlu0 %v2711
        %v2713 = vpop.xlane.xlu0 %2712
        %v2714 = vsel %vm752, %v2644, 0.0
        %2715 = vadd.xlane.f32.xlu0 %v2714
        %v2716 = vpop.xlane.xlu0 %2715
        %v2717 = vsel %vm752, %v2645, 0.0
        %2718 = vadd.xlane.f32.xlu0 %v2717
        %v2719 = vpop.xlane.xlu0 %2718
        %v2720 = vsel %vm752, %v2646, 0.0
        %2721 = vadd.xlane.f32.xlu0 %v2720
        %v2722 = vpop.xlane.xlu0 %2721
        %v2723 = vsel %vm752, %v2647, 0.0
        %2724 = vadd.xlane.f32.xlu0 %v2723
        %v2725 = vpop.xlane.xlu0 %2724
        %v2726 = vsel %vm752, %v2648, 0.0
        %2727 = vadd.xlane.f32.xlu0 %v2726
        %v2728 = vpop.xlane.xlu0 %2727
        %v2729 = vsel %vm752, %v2649, 0.0
        %2730 = vadd.xlane.f32.xlu0 %v2729
        %v2731 = vpop.xlane.xlu0 %2730
        %v2732 = vsel %vm752, %v2650, 0.0
        %2733 = vadd.xlane.f32.xlu0 %v2732
        %v2734 = vpop.xlane.xlu0 %2733
        %v2735 = vsel %vm752, %v2651, 0.0
        %2736 = vadd.xlane.f32.xlu0 %v2735
        %v2737 = vpop.xlane.xlu0 %2736
        %v2738 = vsel %vm752, %v2652, 0.0
        %2739 = vadd.xlane.f32.xlu0 %v2738
        %v2740 = vpop.xlane.xlu0 %2739
        %v2741 = vsel %vm752, %v2653, 0.0
        %2742 = vadd.xlane.f32.xlu0 %v2741
        %v2743 = vpop.xlane.xlu0 %2742
        %v2744 = vsel %vm752, %v2654, 0.0
        %2745 = vadd.xlane.f32.xlu0 %v2744
        %v2746 = vpop.xlane.xlu0 %2745
        %v2747 = vsel %vm752, %v2655, 0.0
        %2748 = vadd.xlane.f32.xlu0 %v2747
        %v2749 = vpop.xlane.xlu0 %2748
        %v2750 = vsel %vm752, %v2656, 0.0
        %2751 = vadd.xlane.f32.xlu0 %v2750
        %v2752 = vpop.xlane.xlu0 %2751
        %v2753 = vsel %vm752, %v2657, 0.0
        %2754 = vadd.xlane.f32.xlu0 %v2753
        %v2755 = vpop.xlane.xlu0 %2754
        %v2756 = vsel %vm752, %v2658, 0.0
        %2757 = vadd.xlane.f32.xlu0 %v2756
        %v2758 = vpop.xlane.xlu0 %2757
        %v2759 = vmul.f32 %v2665, %v849
        %v2760 = vmul.f32 %v2668, %v849
        %v2761 = vmul.f32 %v2671, %v849
        %v2762 = vmul.f32 %v2674, %v849
        %v2763 = vmul.f32 %v2677, %v849
        %v2764 = vmul.f32 %v2680, %v849
        %v2765 = vmul.f32 %v2683, %v849
        %v2766 = vmul.f32 %v2686, %v849
        %v2767 = vmul.f32 %v2689, %v849
        %v2768 = vmul.f32 %v2692, %v849
        %v2769 = vmul.f32 %v2695, %v849
        %v2770 = vmul.f32 %v2698, %v849
        %v2771 = vmul.f32 %v2701, %v849
        %v2772 = vmul.f32 %v2704, %v849
        %v2773 = vmul.f32 %v2707, %v849
        %v2774 = vmul.f32 %v2710, %v849
        %v2775 = vmul.f32 %v2713, %v849
        %v2776 = vmul.f32 %v2716, %v849
        %v2777 = vmul.f32 %v2719, %v849
        %v2778 = vmul.f32 %v2722, %v849
        %v2779 = vmul.f32 %v2725, %v849
        %v2780 = vmul.f32 %v2728, %v849
        %v2781 = vmul.f32 %v2731, %v849
        %v2782 = vmul.f32 %v2734, %v849
        %v2783 = vmul.f32 %v2737, %v849
        %v2784 = vmul.f32 %v2740, %v849
        %v2785 = vmul.f32 %v2743, %v849
        %v2786 = vmul.f32 %v2746, %v849
        %v2787 = vmul.f32 %v2749, %v849
        %v2788 = vmul.f32 %v2752, %v849
        %v2789 = vmul.f32 %v2755, %v849
        %v2790 = vmul.f32 %v2758, %v849
        %v2791 = vsub.f32 %v2627, %v2759
        %v2792 = vsub.f32 %v2628, %v2760
        %v2793 = vsub.f32 %v2629, %v2761
        %v2794 = vsub.f32 %v2630, %v2762
        %v2795 = vsub.f32 %v2631, %v2763
        %v2796 = vsub.f32 %v2632, %v2764
        %v2797 = vsub.f32 %v2633, %v2765
        %v2798 = vsub.f32 %v2634, %v2766
        %v2799 = vsub.f32 %v2635, %v2767
        %v2800 = vsub.f32 %v2636, %v2768
        %v2801 = vsub.f32 %v2637, %v2769
        %v2802 = vsub.f32 %v2638, %v2770
        %v2803 = vsub.f32 %v2639, %v2771
        %v2804 = vsub.f32 %v2640, %v2772
        %v2805 = vsub.f32 %v2641, %v2773
        %v2806 = vsub.f32 %v2642, %v2774
        %v2807 = vsub.f32 %v2643, %v2775
        %v2808 = vsub.f32 %v2644, %v2776
        %v2809 = vsub.f32 %v2645, %v2777
        %v2810 = vsub.f32 %v2646, %v2778
        %v2811 = vsub.f32 %v2647, %v2779
        %v2812 = vsub.f32 %v2648, %v2780
        %v2813 = vsub.f32 %v2649, %v2781
        %v2814 = vsub.f32 %v2650, %v2782
        %v2815 = vsub.f32 %v2651, %v2783
        %v2816 = vsub.f32 %v2652, %v2784
        %v2817 = vsub.f32 %v2653, %v2785
        %v2818 = vsub.f32 %v2654, %v2786
        %v2819 = vsub.f32 %v2655, %v2787
        %v2820 = vsub.f32 %v2656, %v2788
        %v2821 = vsub.f32 %v2657, %v2789
        %v2822 = vsub.f32 %v2658, %v2790
        %v2823 = vmul.f32 %v2791, %v2791
        %v2824 = vmul.f32 %v2792, %v2792
        %v2825 = vmul.f32 %v2793, %v2793
        %v2826 = vmul.f32 %v2794, %v2794
        %v2827 = vmul.f32 %v2795, %v2795
        %v2828 = vmul.f32 %v2796, %v2796
        %v2829 = vmul.f32 %v2797, %v2797
        %v2830 = vmul.f32 %v2798, %v2798
        %v2831 = vmul.f32 %v2799, %v2799
        %v2832 = vmul.f32 %v2800, %v2800
        %v2833 = vmul.f32 %v2801, %v2801
        %v2834 = vmul.f32 %v2802, %v2802
        %v2835 = vmul.f32 %v2803, %v2803
        %v2836 = vmul.f32 %v2804, %v2804
        %v2837 = vmul.f32 %v2805, %v2805
        %v2838 = vmul.f32 %v2806, %v2806
        %v2839 = vmul.f32 %v2807, %v2807
        %v2840 = vmul.f32 %v2808, %v2808
        %v2841 = vmul.f32 %v2809, %v2809
        %v2842 = vmul.f32 %v2810, %v2810
        %v2843 = vmul.f32 %v2811, %v2811
        %v2844 = vmul.f32 %v2812, %v2812
        %v2845 = vmul.f32 %v2813, %v2813
        %v2846 = vmul.f32 %v2814, %v2814
        %v2847 = vmul.f32 %v2815, %v2815
        %v2848 = vmul.f32 %v2816, %v2816
        %v2849 = vmul.f32 %v2817, %v2817
        %v2850 = vmul.f32 %v2818, %v2818
        %v2851 = vmul.f32 %v2819, %v2819
        %v2852 = vmul.f32 %v2820, %v2820
        %v2853 = vmul.f32 %v2821, %v2821
        %v2854 = vmul.f32 %v2822, %v2822
        %v2855 = vsel %vm752, %v2823, 0.0
        %2856 = vadd.xlane.f32.xlu0 %v2855
        %v2857 = vpop.xlane.xlu0 %2856
        %v2858 = vsel %vm752, %v2824, 0.0
        %2859 = vadd.xlane.f32.xlu0 %v2858
        %v2860 = vpop.xlane.xlu0 %2859
        %v2861 = vsel %vm752, %v2825, 0.0
        %2862 = vadd.xlane.f32.xlu0 %v2861
        %v2863 = vpop.xlane.xlu0 %2862
        %v2864 = vsel %vm752, %v2826, 0.0
        %2865 = vadd.xlane.f32.xlu0 %v2864
        %v2866 = vpop.xlane.xlu0 %2865
        %v2867 = vsel %vm752, %v2827, 0.0
        %2868 = vadd.xlane.f32.xlu0 %v2867
        %v2869 = vpop.xlane.xlu0 %2868
        %v2870 = vsel %vm752, %v2828, 0.0
        %2871 = vadd.xlane.f32.xlu0 %v2870
        %v2872 = vpop.xlane.xlu0 %2871
        %v2873 = vsel %vm752, %v2829, 0.0
        %2874 = vadd.xlane.f32.xlu0 %v2873
        %v2875 = vpop.xlane.xlu0 %2874
        %v2876 = vsel %vm752, %v2830, 0.0
        %2877 = vadd.xlane.f32.xlu0 %v2876
        %v2878 = vpop.xlane.xlu0 %2877
        %v2879 = vsel %vm752, %v2831, 0.0
        %2880 = vadd.xlane.f32.xlu0 %v2879
        %v2881 = vpop.xlane.xlu0 %2880
        %v2882 = vsel %vm752, %v2832, 0.0
        %2883 = vadd.xlane.f32.xlu0 %v2882
        %v2884 = vpop.xlane.xlu0 %2883
        %v2885 = vsel %vm752, %v2833, 0.0
        %2886 = vadd.xlane.f32.xlu0 %v2885
        %v2887 = vpop.xlane.xlu0 %2886
        %v2888 = vsel %vm752, %v2834, 0.0
        %2889 = vadd.xlane.f32.xlu0 %v2888
        %v2890 = vpop.xlane.xlu0 %2889
        %v2891 = vsel %vm752, %v2835, 0.0
        %2892 = vadd.xlane.f32.xlu0 %v2891
        %v2893 = vpop.xlane.xlu0 %2892
        %v2894 = vsel %vm752, %v2836, 0.0
        %2895 = vadd.xlane.f32.xlu0 %v2894
        %v2896 = vpop.xlane.xlu0 %2895
        %v2897 = vsel %vm752, %v2837, 0.0
        %2898 = vadd.xlane.f32.xlu0 %v2897
        %v2899 = vpop.xlane.xlu0 %2898
        %v2900 = vsel %vm752, %v2838, 0.0
        %2901 = vadd.xlane.f32.xlu0 %v2900
        %v2902 = vpop.xlane.xlu0 %2901
        %v2903 = vsel %vm752, %v2839, 0.0
        %2904 = vadd.xlane.f32.xlu0 %v2903
        %v2905 = vpop.xlane.xlu0 %2904
        %v2906 = vsel %vm752, %v2840, 0.0
        %2907 = vadd.xlane.f32.xlu0 %v2906
        %v2908 = vpop.xlane.xlu0 %2907
        %v2909 = vsel %vm752, %v2841, 0.0
        %2910 = vadd.xlane.f32.xlu0 %v2909
        %v2911 = vpop.xlane.xlu0 %2910
        %v2912 = vsel %vm752, %v2842, 0.0
        %2913 = vadd.xlane.f32.xlu0 %v2912
        %v2914 = vpop.xlane.xlu0 %2913
        %v2915 = vsel %vm752, %v2843, 0.0
        %2916 = vadd.xlane.f32.xlu0 %v2915
        %v2917 = vpop.xlane.xlu0 %2916
        %v2918 = vsel %vm752, %v2844, 0.0
        %2919 = vadd.xlane.f32.xlu0 %v2918
        %v2920 = vpop.xlane.xlu0 %2919
        %v2921 = vsel %vm752, %v2845, 0.0
        %2922 = vadd.xlane.f32.xlu0 %v2921
        %v2923 = vpop.xlane.xlu0 %2922
        %v2924 = vsel %vm752, %v2846, 0.0
        %2925 = vadd.xlane.f32.xlu0 %v2924
        %v2926 = vpop.xlane.xlu0 %2925
        %v2927 = vsel %vm752, %v2847, 0.0
        %2928 = vadd.xlane.f32.xlu0 %v2927
        %v2929 = vpop.xlane.xlu0 %2928
        %v2930 = vsel %vm752, %v2848, 0.0
        %2931 = vadd.xlane.f32.xlu0 %v2930
        %v2932 = vpop.xlane.xlu0 %2931
        %v2933 = vsel %vm752, %v2849, 0.0
        %2934 = vadd.xlane.f32.xlu0 %v2933
        %v2935 = vpop.xlane.xlu0 %2934
        %v2936 = vsel %vm752, %v2850, 0.0
        %2937 = vadd.xlane.f32.xlu0 %v2936
        %v2938 = vpop.xlane.xlu0 %2937
        %v2939 = vsel %vm752, %v2851, 0.0
        %2940 = vadd.xlane.f32.xlu0 %v2939
        %v2941 = vpop.xlane.xlu0 %2940
        %v2942 = vsel %vm752, %v2852, 0.0
        %2943 = vadd.xlane.f32.xlu0 %v2942
        %v2944 = vpop.xlane.xlu0 %2943
        %v2945 = vsel %vm752, %v2853, 0.0
        %2946 = vadd.xlane.f32.xlu0 %v2945
        %v2947 = vpop.xlane.xlu0 %2946
        %v2948 = vsel %vm752, %v2854, 0.0
        %2949 = vadd.xlane.f32.xlu0 %v2948
        %v2950 = vpop.xlane.xlu0 %2949
        %v2951 = vmul.f32 %v2857, %v849
        %v2952 = vmul.f32 %v2860, %v849
        %v2953 = vmul.f32 %v2863, %v849
        %v2954 = vmul.f32 %v2866, %v849
        %v2955 = vmul.f32 %v2869, %v849
        %v2956 = vmul.f32 %v2872, %v849
        %v2957 = vmul.f32 %v2875, %v849
        %v2958 = vmul.f32 %v2878, %v849
        %v2959 = vmul.f32 %v2881, %v849
        %v2960 = vmul.f32 %v2884, %v849
        %v2961 = vmul.f32 %v2887, %v849
        %v2962 = vmul.f32 %v2890, %v849
        %v2963 = vmul.f32 %v2893, %v849
        %v2964 = vmul.f32 %v2896, %v849
        %v2965 = vmul.f32 %v2899, %v849
        %v2966 = vmul.f32 %v2902, %v849
        %v2967 = vmul.f32 %v2905, %v849
        %v2968 = vmul.f32 %v2908, %v849
        %v2969 = vmul.f32 %v2911, %v849
        %v2970 = vmul.f32 %v2914, %v849
        %v2971 = vmul.f32 %v2917, %v849
        %v2972 = vmul.f32 %v2920, %v849
        %v2973 = vmul.f32 %v2923, %v849
        %v2974 = vmul.f32 %v2926, %v849
        %v2975 = vmul.f32 %v2929, %v849
        %v2976 = vmul.f32 %v2932, %v849
        %v2977 = vmul.f32 %v2935, %v849
        %v2978 = vmul.f32 %v2938, %v849
        %v2979 = vmul.f32 %v2941, %v849
        %v2980 = vmul.f32 %v2944, %v849
        %v2981 = vmul.f32 %v2947, %v849
        %v2982 = vmul.f32 %v2950, %v849
        %v2983 = vadd.f32 %v2951, 1e-05
        %v2984 = vadd.f32 %v2952, 1e-05
        %v2985 = vadd.f32 %v2953, 1e-05
        %v2986 = vadd.f32 %v2954, 1e-05
        %v2987 = vadd.f32 %v2955, 1e-05
        %v2988 = vadd.f32 %v2956, 1e-05
        %v2989 = vadd.f32 %v2957, 1e-05
        %v2990 = vadd.f32 %v2958, 1e-05
        %v2991 = vadd.f32 %v2959, 1e-05
        %v2992 = vadd.f32 %v2960, 1e-05
        %v2993 = vadd.f32 %v2961, 1e-05
        %v2994 = vadd.f32 %v2962, 1e-05
        %v2995 = vadd.f32 %v2963, 1e-05
        %v2996 = vadd.f32 %v2964, 1e-05
        %v2997 = vadd.f32 %v2965, 1e-05
        %v2998 = vadd.f32 %v2966, 1e-05
        %v2999 = vadd.f32 %v2967, 1e-05
        %v3000 = vadd.f32 %v2968, 1e-05
        %v3001 = vadd.f32 %v2969, 1e-05
        %v3002 = vadd.f32 %v2970, 1e-05
        %v3003 = vadd.f32 %v2971, 1e-05
        %v3004 = vadd.f32 %v2972, 1e-05
        %v3005 = vadd.f32 %v2973, 1e-05
        %v3006 = vadd.f32 %v2974, 1e-05
        %v3007 = vadd.f32 %v2975, 1e-05
        %v3008 = vadd.f32 %v2976, 1e-05
        %v3009 = vadd.f32 %v2977, 1e-05
        %v3010 = vadd.f32 %v2978, 1e-05
        %v3011 = vadd.f32 %v2979, 1e-05
        %v3012 = vadd.f32 %v2980, 1e-05
        %v3013 = vadd.f32 %v2981, 1e-05
        %v3014 = vadd.f32 %v2982, 1e-05
        %v3015 = vrsqrt.pop %v2983
        %v3016 = vrsqrt.pop %v2984
        %v3017 = vrsqrt.pop %v2985
        %v3018 = vrsqrt.pop %v2986
        %v3019 = vrsqrt.pop %v2987
        %v3020 = vrsqrt.pop %v2988
        %v3021 = vrsqrt.pop %v2989
        %v3022 = vrsqrt.pop %v2990
        %v3023 = vrsqrt.pop %v2991
        %v3024 = vrsqrt.pop %v2992
        %v3025 = vrsqrt.pop %v2993
        %v3026 = vrsqrt.pop %v2994
        %v3027 = vrsqrt.pop %v2995
        %v3028 = vrsqrt.pop %v2996
        %v3029 = vrsqrt.pop %v2997
        %v3030 = vrsqrt.pop %v2998
        %v3031 = vrsqrt.pop %v2999
        %v3032 = vrsqrt.pop %v3000
        %v3033 = vrsqrt.pop %v3001
        %v3034 = vrsqrt.pop %v3002
        %v3035 = vrsqrt.pop %v3003
        %v3036 = vrsqrt.pop %v3004
        %v3037 = vrsqrt.pop %v3005
        %v3038 = vrsqrt.pop %v3006
        %v3039 = vrsqrt.pop %v3007
        %v3040 = vrsqrt.pop %v3008
        %v3041 = vrsqrt.pop %v3009
        %v3042 = vrsqrt.pop %v3010
        %v3043 = vrsqrt.pop %v3011
        %v3044 = vrsqrt.pop %v3012
        %v3045 = vrsqrt.pop %v3013
        %v3046 = vrsqrt.pop %v3014
        %v3047 = vmul.f32 %v2791, %v3015
        %v3048 = vmul.f32 %v2792, %v3016
        %v3049 = vmul.f32 %v2793, %v3017
        %v3050 = vmul.f32 %v2794, %v3018
        %v3051 = vmul.f32 %v2795, %v3019
        %v3052 = vmul.f32 %v2796, %v3020
        %v3053 = vmul.f32 %v2797, %v3021
        %v3054 = vmul.f32 %v2798, %v3022
        %v3055 = vmul.f32 %v2799, %v3023
        %v3056 = vmul.f32 %v2800, %v3024
        %v3057 = vmul.f32 %v2801, %v3025
        %v3058 = vmul.f32 %v2802, %v3026
        %v3059 = vmul.f32 %v2803, %v3027
        %v3060 = vmul.f32 %v2804, %v3028
        %v3061 = vmul.f32 %v2805, %v3029
        %v3062 = vmul.f32 %v2806, %v3030
        %v3063 = vmul.f32 %v2807, %v3031
        %v3064 = vmul.f32 %v2808, %v3032
        %v3065 = vmul.f32 %v2809, %v3033
        %v3066 = vmul.f32 %v2810, %v3034
        %v3067 = vmul.f32 %v2811, %v3035
        %v3068 = vmul.f32 %v2812, %v3036
        %v3069 = vmul.f32 %v2813, %v3037
        %v3070 = vmul.f32 %v2814, %v3038
        %v3071 = vmul.f32 %v2815, %v3039
        %v3072 = vmul.f32 %v2816, %v3040
        %v3073 = vmul.f32 %v2817, %v3041
        %v3074 = vmul.f32 %v2818, %v3042
        %v3075 = vmul.f32 %v2819, %v3043
        %v3076 = vmul.f32 %v2820, %v3044
        %v3077 = vmul.f32 %v2821, %v3045
        %v3078 = vmul.f32 %v2822, %v3046
        %v3080 = vlaneseq
        %v3081 = vshrl.u32 %v3080, 7
        %v3082 = vsub.s32 0, %v3081
        %v3083 = vrot.slane %v2660, %v3082
        %v3085 = vmul.f32 %v3047, %v3083
        %v3086 = vmul.f32 %v3048, %v3083
        %v3087 = vmul.f32 %v3049, %v3083
        %v3088 = vmul.f32 %v3050, %v3083
        %v3089 = vmul.f32 %v3051, %v3083
        %v3090 = vmul.f32 %v3052, %v3083
        %v3091 = vmul.f32 %v3053, %v3083
        %v3092 = vmul.f32 %v3054, %v3083
        %v3093 = vmul.f32 %v3055, %v3083
        %v3094 = vmul.f32 %v3056, %v3083
        %v3095 = vmul.f32 %v3057, %v3083
        %v3096 = vmul.f32 %v3058, %v3083
        %v3097 = vmul.f32 %v3059, %v3083
        %v3098 = vmul.f32 %v3060, %v3083
        %v3099 = vmul.f32 %v3061, %v3083
        %v3100 = vmul.f32 %v3062, %v3083
        %v3101 = vmul.f32 %v3063, %v3083
        %v3102 = vmul.f32 %v3064, %v3083
        %v3103 = vmul.f32 %v3065, %v3083
        %v3104 = vmul.f32 %v3066, %v3083
        %v3105 = vmul.f32 %v3067, %v3083
        %v3106 = vmul.f32 %v3068, %v3083
        %v3107 = vmul.f32 %v3069, %v3083
        %v3108 = vmul.f32 %v3070, %v3083
        %v3109 = vmul.f32 %v3071, %v3083
        %v3110 = vmul.f32 %v3072, %v3083
        %v3111 = vmul.f32 %v3073, %v3083
        %v3112 = vmul.f32 %v3074, %v3083
        %v3113 = vmul.f32 %v3075, %v3083
        %v3114 = vmul.f32 %v3076, %v3083
        %v3115 = vmul.f32 %v3077, %v3083
        %v3116 = vmul.f32 %v3078, %v3083
        %v3118 = vlaneseq
        %v3119 = vshrl.u32 %v3118, 7
        %v3120 = vsub.s32 0, %v3119
        %v3121 = vrot.slane %v2662, %v3120
        %v3123 = vadd.f32 %v3085, %v3121
        %v3124 = vadd.f32 %v3086, %v3121
        %v3125 = vadd.f32 %v3087, %v3121
        %v3126 = vadd.f32 %v3088, %v3121
        %v3127 = vadd.f32 %v3089, %v3121
        %v3128 = vadd.f32 %v3090, %v3121
        %v3129 = vadd.f32 %v3091, %v3121
        %v3130 = vadd.f32 %v3092, %v3121
        %v3131 = vadd.f32 %v3093, %v3121
        %v3132 = vadd.f32 %v3094, %v3121
        %v3133 = vadd.f32 %v3095, %v3121
        %v3134 = vadd.f32 %v3096, %v3121
        %v3135 = vadd.f32 %v3097, %v3121
        %v3136 = vadd.f32 %v3098, %v3121
        %v3137 = vadd.f32 %v3099, %v3121
        %v3138 = vadd.f32 %v3100, %v3121
        %v3139 = vadd.f32 %v3101, %v3121
        %v3140 = vadd.f32 %v3102, %v3121
        %v3141 = vadd.f32 %v3103, %v3121
        %v3142 = vadd.f32 %v3104, %v3121
        %v3143 = vadd.f32 %v3105, %v3121
        %v3144 = vadd.f32 %v3106, %v3121
        %v3145 = vadd.f32 %v3107, %v3121
        %v3146 = vadd.f32 %v3108, %v3121
        %v3147 = vadd.f32 %v3109, %v3121
        %v3148 = vadd.f32 %v3110, %v3121
        %v3149 = vadd.f32 %v3111, %v3121
        %v3150 = vadd.f32 %v3112, %v3121
        %v3151 = vadd.f32 %v3113, %v3121
        %v3152 = vadd.f32 %v3114, %v3121
        %v3153 = vadd.f32 %v3115, %v3121
        %v3154 = vadd.f32 %v3116, %v3121
        %v3155 = vmax.f32 %v3123, 0.0
        %v3156 = vmax.f32 %v3124, 0.0
        %v3157 = vmax.f32 %v3125, 0.0
        %v3158 = vmax.f32 %v3126, 0.0
        %v3159 = vmax.f32 %v3127, 0.0
        %v3160 = vmax.f32 %v3128, 0.0
        %v3161 = vmax.f32 %v3129, 0.0
        %v3162 = vmax.f32 %v3130, 0.0
        %v3163 = vmax.f32 %v3131, 0.0
        %v3164 = vmax.f32 %v3132, 0.0
        %v3165 = vmax.f32 %v3133, 0.0
        %v3166 = vmax.f32 %v3134, 0.0
        %v3167 = vmax.f32 %v3135, 0.0
        %v3168 = vmax.f32 %v3136, 0.0
        %v3169 = vmax.f32 %v3137, 0.0
        %v3170 = vmax.f32 %v3138, 0.0
        %v3171 = vmax.f32 %v3139, 0.0
        %v3172 = vmax.f32 %v3140, 0.0
        %v3173 = vmax.f32 %v3141, 0.0
        %v3174 = vmax.f32 %v3142, 0.0
        %v3175 = vmax.f32 %v3143, 0.0
        %v3176 = vmax.f32 %v3144, 0.0
        %v3177 = vmax.f32 %v3145, 0.0
        %v3178 = vmax.f32 %v3146, 0.0
        %v3179 = vmax.f32 %v3147, 0.0
        %v3180 = vmax.f32 %v3148, 0.0
        %v3181 = vmax.f32 %v3149, 0.0
        %v3182 = vmax.f32 %v3150, 0.0
        %v3183 = vmax.f32 %v3151, 0.0
        %v3184 = vmax.f32 %v3152, 0.0
        %v3185 = vmax.f32 %v3153, 0.0
        %v3186 = vmax.f32 %v3154, 0.0
        %v3187 = vpack.c.bf16 %v3156, %v3155
        %v3188 = vpack.c.bf16 %v3158, %v3157
        %v3189 = vpack.c.bf16 %v3160, %v3159
        %v3190 = vpack.c.bf16 %v3162, %v3161
        %v3191 = vpack.c.bf16 %v3164, %v3163
        %v3192 = vpack.c.bf16 %v3166, %v3165
        %v3193 = vpack.c.bf16 %v3168, %v3167
        %v3194 = vpack.c.bf16 %v3170, %v3169
        %v3195 = vpack.c.bf16 %v3172, %v3171
        %v3196 = vpack.c.bf16 %v3174, %v3173
        %v3197 = vpack.c.bf16 %v3176, %v3175
        %v3198 = vpack.c.bf16 %v3178, %v3177
        %v3199 = vpack.c.bf16 %v3180, %v3179
        %v3200 = vpack.c.bf16 %v3182, %v3181
        %v3201 = vpack.c.bf16 %v3184, %v3183
        %v3202 = vpack.c.bf16 %v3186, %v3185
        %v3203 = vld [vmem:[%s10] sm:$0xf]
        %v3204 = vld [vmem:[%s10 + $0x4] sm:$0xf]
        %v3205 = vld [vmem:[%s10 + $0x8] sm:$0xf]
        %v3206 = vld [vmem:[%s10 + $0xc] sm:$0xf]
        %v3207 = vld [vmem:[%s11] sm:$0x1]
        %v3209 = vlaneseq
        %v3210 = vshrl.u32 %v3209, 7
        %v3211 = vsub.s32 0, %v3210
        %v3212 = vrot.slane %v3207, %v3211
        %v3218 = vunpack.c.l.b16 %v3203
        %v3219 = vunpack.c.l.b16 %v3204
        %v3220 = vunpack.c.l.b16 %v3205
        %v3221 = vunpack.c.l.b16 %v3206
        %v3222 = vpack.c.b16 %v3219, %v3218
        %v3223 = vpack.c.b16 %v3221, %v3220
        %v3227 = vsel %vm752, %v3187, 0
        %v3230 = vsel %vm752, %v3188, 0
        %v3233 = vsel %vm752, %v3189, 0
        %v3236 = vsel %vm752, %v3190, 0
        %v3239 = vsel %vm752, %v3191, 0
        %v3242 = vsel %vm752, %v3192, 0
        %v3245 = vsel %vm752, %v3193, 0
        %v3248 = vsel %vm752, %v3194, 0
        %v3251 = vsel %vm752, %v3195, 0
        %v3254 = vsel %vm752, %v3196, 0
        %v3257 = vsel %vm752, %v3197, 0
        %v3260 = vsel %vm752, %v3198, 0
        %v3263 = vsel %vm752, %v3199, 0
        %v3266 = vsel %vm752, %v3200, 0
        %v3269 = vsel %vm752, %v3201, 0
        %v3272 = vsel %vm752, %v3202, 0
        %3274 = vmatprep.subr.bf16.mxu0 0
        %3275 = vmatpush1.bf16.msra.mxu0 0
        %3276 = vmatprep.subr.bf16.mxu0 0
        %3277 = vmatpush1.bf16.msra.mxu0 0
        %3278 = vmatprep.subr.bf16.mxu0 0
        %3279 = vmatpush1.bf16.msra.mxu0 0
        %3280 = vmatprep.subr.bf16.mxu0 0
        %3281 = vmatpush1.bf16.msra.mxu0 0
        %3282 = vmatprep.subr.bf16.mxu0 0
        %3283 = vmatpush1.bf16.msra.mxu0 0
        %3284 = vmatprep.subr.bf16.mxu0 0
        %3285 = vmatpush1.bf16.msra.mxu0 0
        %3286 = vmatprep.subr.bf16.mxu0 0
        %3287 = vmatpush1.bf16.msra.mxu0 %v3223
        %3288 = vmatprep.subr.bf16.mxu0 0
        %3289 = vmatpush1.bf16.msra.mxu0 %v3222
        %3290 = vmatprep.subr.bf16.mxu0 0
        %3291 = vmatpush2.bf16.msra.mxu0 0
        %3292 = vmatprep.subr.bf16.mxu0 0
        %3293 = vmatpush2.bf16.msra.mxu0 0
        %3294 = vmatprep.subr.bf16.mxu0 0
        %3295 = vmatpush2.bf16.msra.mxu0 0
        %3296 = vmatprep.subr.bf16.mxu0 0
        %3297 = vmatpush2.bf16.msra.mxu0 0
        %3298 = vmatprep.subr.bf16.mxu0 0
        %3299 = vmatpush2.bf16.msra.mxu0 0
        %3300 = vmatprep.subr.bf16.mxu0 0
        %3301 = vmatpush2.bf16.msra.mxu0 0
        %3302 = vmatprep.subr.bf16.mxu0 0
        %3303 = vmatpush2.bf16.msra.mxu0 0
        %3304 = vmatprep.subr.bf16.mxu0 0
        %3305 = vmatpush2.bf16.msra.mxu0 0
        %3306 = vmatprep.mubr.bf16.mxu0 0
        %3307 = vmatmul.mubr.bf16.gmra.mxu0 %v3227
        %v3308 = vpop.f32.mrf.mxu0
        %v3309 = vadd.f32 %v3212, %v3308
        %v3310 = vpop.f32.mrf.mxu0
        %v3311 = vpop.f32.mrf.mxu0
        %v3312 = vadd.f32 %v3212, %v3311
        %v3313 = vpop.f32.mrf.mxu0
        %3314 = vmatprep.mubr.bf16.mxu0 0
        %3315 = vmatmul.mubr.bf16.gmra.mxu0 %v3230
        %v3316 = vpop.f32.mrf.mxu0
        %v3317 = vadd.f32 %v3212, %v3316
        %v3318 = vpop.f32.mrf.mxu0
        %v3319 = vpop.f32.mrf.mxu0
        %v3320 = vadd.f32 %v3212, %v3319
        %v3321 = vpop.f32.mrf.mxu0
        %3322 = vmatprep.mubr.bf16.mxu0 0
        %3323 = vmatmul.mubr.bf16.gmra.mxu0 %v3233
        %v3324 = vpop.f32.mrf.mxu0
        %v3325 = vadd.f32 %v3212, %v3324
        %v3326 = vpop.f32.mrf.mxu0
        %v3327 = vpop.f32.mrf.mxu0
        %v3328 = vadd.f32 %v3212, %v3327
        %v3329 = vpop.f32.mrf.mxu0
        %3330 = vmatprep.mubr.bf16.mxu0 0
        %3331 = vmatmul.mubr.bf16.gmra.mxu0 %v3236
        %v3332 = vpop.f32.mrf.mxu0
        %v3333 = vadd.f32 %v3212, %v3332
        %v3334 = vpop.f32.mrf.mxu0
        %v3335 = vpop.f32.mrf.mxu0
        %v3336 = vadd.f32 %v3212, %v3335
        %v3337 = vpop.f32.mrf.mxu0
        %3338 = vmatprep.mubr.bf16.mxu0 0
        %3339 = vmatmul.mubr.bf16.gmra.mxu0 %v3239
        %v3340 = vpop.f32.mrf.mxu0
        %v3341 = vadd.f32 %v3212, %v3340
        %v3342 = vpop.f32.mrf.mxu0
        %v3343 = vpop.f32.mrf.mxu0
        %v3344 = vadd.f32 %v3212, %v3343
        %v3345 = vpop.f32.mrf.mxu0
        %3346 = vmatprep.mubr.bf16.mxu0 0
        %3347 = vmatmul.mubr.bf16.gmra.mxu0 %v3242
        %v3348 = vpop.f32.mrf.mxu0
        %v3349 = vadd.f32 %v3212, %v3348
        %v3350 = vpop.f32.mrf.mxu0
        %v3351 = vpop.f32.mrf.mxu0
        %v3352 = vadd.f32 %v3212, %v3351
        %v3353 = vpop.f32.mrf.mxu0
        %3354 = vmatprep.mubr.bf16.mxu0 0
        %3355 = vmatmul.mubr.bf16.gmra.mxu0 %v3245
        %v3356 = vpop.f32.mrf.mxu0
        %v3357 = vadd.f32 %v3212, %v3356
        %v3358 = vpop.f32.mrf.mxu0
        %v3359 = vpop.f32.mrf.mxu0
        %v3360 = vadd.f32 %v3212, %v3359
        %v3361 = vpop.f32.mrf.mxu0
        %3362 = vmatprep.mubr.bf16.mxu0 0
        %3363 = vmatmul.mubr.bf16.gmra.mxu0 %v3248
        %v3364 = vpop.f32.mrf.mxu0
        %v3365 = vadd.f32 %v3212, %v3364
        %v3366 = vpop.f32.mrf.mxu0
        %v3367 = vpop.f32.mrf.mxu0
        %v3368 = vadd.f32 %v3212, %v3367
        %v3369 = vpop.f32.mrf.mxu0
        %3370 = vmatprep.mubr.bf16.mxu0 0
        %3371 = vmatmul.mubr.bf16.gmra.mxu0 %v3251
        %v3372 = vpop.f32.mrf.mxu0
        %v3373 = vadd.f32 %v3212, %v3372
        %v3374 = vpop.f32.mrf.mxu0
        %v3375 = vpop.f32.mrf.mxu0
        %v3376 = vadd.f32 %v3212, %v3375
        %v3377 = vpop.f32.mrf.mxu0
        %3378 = vmatprep.mubr.bf16.mxu0 0
        %3379 = vmatmul.mubr.bf16.gmra.mxu0 %v3254
        %v3380 = vpop.f32.mrf.mxu0
        %v3381 = vadd.f32 %v3212, %v3380
        %v3382 = vpop.f32.mrf.mxu0
        %v3383 = vpop.f32.mrf.mxu0
        %v3384 = vadd.f32 %v3212, %v3383
        %v3385 = vpop.f32.mrf.mxu0
        %3386 = vmatprep.mubr.bf16.mxu0 0
        %3387 = vmatmul.mubr.bf16.gmra.mxu0 %v3257
        %v3388 = vpop.f32.mrf.mxu0
        %v3389 = vadd.f32 %v3212, %v3388
        %v3390 = vpop.f32.mrf.mxu0
        %v3391 = vpop.f32.mrf.mxu0
        %v3392 = vadd.f32 %v3212, %v3391
        %v3393 = vpop.f32.mrf.mxu0
        %3394 = vmatprep.mubr.bf16.mxu0 0
        %3395 = vmatmul.mubr.bf16.gmra.mxu0 %v3260
        %v3396 = vpop.f32.mrf.mxu0
        %v3397 = vadd.f32 %v3212, %v3396
        %v3398 = vpop.f32.mrf.mxu0
        %v3399 = vpop.f32.mrf.mxu0
        %v3400 = vadd.f32 %v3212, %v3399
        %v3401 = vpop.f32.mrf.mxu0
        %3402 = vmatprep.mubr.bf16.mxu0 0
        %3403 = vmatmul.mubr.bf16.gmra.mxu0 %v3263
        %v3404 = vpop.f32.mrf.mxu0
        %v3405 = vadd.f32 %v3212, %v3404
        %v3406 = vpop.f32.mrf.mxu0
        %v3407 = vpop.f32.mrf.mxu0
        %v3408 = vadd.f32 %v3212, %v3407
        %v3409 = vpop.f32.mrf.mxu0
        %3410 = vmatprep.mubr.bf16.mxu0 0
        %3411 = vmatmul.mubr.bf16.gmra.mxu0 %v3266
        %v3412 = vpop.f32.mrf.mxu0
        %v3413 = vadd.f32 %v3212, %v3412
        %v3414 = vpop.f32.mrf.mxu0
        %v3415 = vpop.f32.mrf.mxu0
        %v3416 = vadd.f32 %v3212, %v3415
        %v3417 = vpop.f32.mrf.mxu0
        %3418 = vmatprep.mubr.bf16.mxu0 0
        %3419 = vmatmul.mubr.bf16.gmra.mxu0 %v3269
        %v3420 = vpop.f32.mrf.mxu0
        %v3421 = vadd.f32 %v3212, %v3420
        %v3422 = vpop.f32.mrf.mxu0
        %v3423 = vpop.f32.mrf.mxu0
        %v3424 = vadd.f32 %v3212, %v3423
        %v3425 = vpop.f32.mrf.mxu0
        %3426 = vmatprep.mubr.bf16.mxu0 0
        %3427 = vmatmul.mubr.bf16.gmra.mxu0 %v3272
        %v3428 = vpop.f32.mrf.mxu0
        %v3429 = vadd.f32 %v3212, %v3428
        %v3430 = vpop.f32.mrf.mxu0
        %v3431 = vpop.f32.mrf.mxu0
        %v3432 = vadd.f32 %v3212, %v3431
        %v3433 = vpop.f32.mrf.mxu0
        %3434 = vdwg.mxu0
        %v3435 = vmax.f32 %v3309, 0.0
        %v3436 = vmax.f32 %v3312, 0.0
        %v3437 = vmax.f32 %v3317, 0.0
        %v3438 = vmax.f32 %v3320, 0.0
        %v3439 = vmax.f32 %v3325, 0.0
        %v3440 = vmax.f32 %v3328, 0.0
        %v3441 = vmax.f32 %v3333, 0.0
        %v3442 = vmax.f32 %v3336, 0.0
        %v3443 = vmax.f32 %v3341, 0.0
        %v3444 = vmax.f32 %v3344, 0.0
        %v3445 = vmax.f32 %v3349, 0.0
        %v3446 = vmax.f32 %v3352, 0.0
        %v3447 = vmax.f32 %v3357, 0.0
        %v3448 = vmax.f32 %v3360, 0.0
        %v3449 = vmax.f32 %v3365, 0.0
        %v3450 = vmax.f32 %v3368, 0.0
        %v3451 = vmax.f32 %v3373, 0.0
        %v3452 = vmax.f32 %v3376, 0.0
        %v3453 = vmax.f32 %v3381, 0.0
        %v3454 = vmax.f32 %v3384, 0.0
        %v3455 = vmax.f32 %v3389, 0.0
        %v3456 = vmax.f32 %v3392, 0.0
        %v3457 = vmax.f32 %v3397, 0.0
        %v3458 = vmax.f32 %v3400, 0.0
        %v3459 = vmax.f32 %v3405, 0.0
        %v3460 = vmax.f32 %v3408, 0.0
        %v3461 = vmax.f32 %v3413, 0.0
        %v3462 = vmax.f32 %v3416, 0.0
        %v3463 = vmax.f32 %v3421, 0.0
        %v3464 = vmax.f32 %v3424, 0.0
        %v3465 = vmax.f32 %v3429, 0.0
        %v3466 = vmax.f32 %v3432, 0.0
        %3467 = vst [vmem:[%s407] sm:$0xff] %v3435
        %3468 = vst [vmem:[%s407 + $0x8] sm:$0xff] %v3436
        %3469 = vst [vmem:[%s407 + $0x10] sm:$0xff] %v3437
        %3470 = vst [vmem:[%s407 + $0x18] sm:$0xff] %v3438
        %3471 = vst [vmem:[%s407 + $0x20] sm:$0xff] %v3439
        %3472 = vst [vmem:[%s407 + $0x28] sm:$0xff] %v3440
        %3473 = vst [vmem:[%s407 + $0x30] sm:$0xff] %v3441
        %3474 = vst [vmem:[%s407 + $0x38] sm:$0xff] %v3442
        %3475 = vst [vmem:[%s407 + $0x40] sm:$0xff] %v3443
        %3476 = vst [vmem:[%s407 + $0x48] sm:$0xff] %v3444
        %3477 = vst [vmem:[%s407 + $0x50] sm:$0xff] %v3445
        %3478 = vst [vmem:[%s407 + $0x58] sm:$0xff] %v3446
        %3479 = vst [vmem:[%s407 + $0x60] sm:$0xff] %v3447
        %3480 = vst [vmem:[%s407 + $0x68] sm:$0xff] %v3448
        %3481 = vst [vmem:[%s407 + $0x70] sm:$0xff] %v3449
        %3482 = vst [vmem:[%s407 + $0x78] sm:$0xff] %v3450
        %3483 = vst [vmem:[%s407 + $0x80] sm:$0xff] %v3451
        %3484 = vst [vmem:[%s407 + $0x88] sm:$0xff] %v3452
        %3485 = vst [vmem:[%s407 + $0x90] sm:$0xff] %v3453
        %3486 = vst [vmem:[%s407 + $0x98] sm:$0xff] %v3454
        %3487 = vst [vmem:[%s407 + $0xa0] sm:$0xff] %v3455
        %3488 = vst [vmem:[%s407 + $0xa8] sm:$0xff] %v3456
        %3489 = vst [vmem:[%s407 + $0xb0] sm:$0xff] %v3457
        %3490 = vst [vmem:[%s407 + $0xb8] sm:$0xff] %v3458
        %3491 = vst [vmem:[%s407 + $0xc0] sm:$0xff] %v3459
        %3492 = vst [vmem:[%s407 + $0xc8] sm:$0xff] %v3460
        %3493 = vst [vmem:[%s407 + $0xd0] sm:$0xff] %v3461
        %3494 = vst [vmem:[%s407 + $0xd8] sm:$0xff] %v3462
        %3495 = vst [vmem:[%s407 + $0xe0] sm:$0xff] %v3463
        %3496 = vst [vmem:[%s407 + $0xe8] sm:$0xff] %v3464
        %3497 = vst [vmem:[%s407 + $0xf0] sm:$0xff] %v3465
        %3498 = vst [vmem:[%s407 + $0xf8] sm:$0xff] %v3466
        %s3499 = sand.u32 %s291, 1
        %s3500 = scalar_lea.sflag [#allocation3], %s3499
        %s3501 = sand.u32 %s291, 1
        %s3502 = smul.addr %s3501, 256
        %s3503 = scalar_lea.vmem [#allocation2], %s3502
        // Predicated region
        $region69: #{tpu_custom_call.1} parent=67 // pred_check
          %p3504 = pneg %p301
        $region70: #{tpu_custom_call.1} parent=67 // pred_check_branch
          %3506 = sbr.rel (%p3504) target = $region72
        $region71: #{tpu_custom_call.1} parent=67 // pred_region
          %s3507 = smul.u32 32, %s26
          %s3509 = ssub.s32 4096, 4096
          %3510 = vsyncadd %s3500, %s3509
          %s3511 = smul.addr %s3507, 128
          %s3512 = scalar_lea.hbm %s12, %s3511
          %s3513 = sshll.u32 %s3503, 4
          %s3514 = int_to_ptr.vmem [resolvable:$true] %s3513
          %3519 = dma.vmem_to_hbm [thread:$0]  %s3514, 4096, %s3512, %s3500, 128, 128, 8
        $region72: #{tpu_custom_call.1} parent=67 // pred_fallthru
          _
      $region68: #{tpu_custom_call.1} parent=5 // pred_fallthru
        _
      %p3520 = scmp.le.s32.totalorder 2, %s21
      // Predicated region
      $region73: #{tpu_custom_call.1} parent=5 // pred_check
        %p3521 = pneg %p3520
      $region74: #{tpu_custom_call.1} parent=5 // pred_check_branch
        %3523 = sbr.rel (%p3521) target = $region76
      $region75: #{tpu_custom_call.1} parent=5 // pred_region
        %s3524 = ssub.s32 %s21, 2
        // Predicated region
        $region77: #{tpu_custom_call.1} parent=75 // pred_check
          %p3525 = pneg %p307
        $region78: #{tpu_custom_call.1} parent=75 // pred_check_branch
          %3527 = sbr.rel (%p3525) target = $region80
        $region79: #{tpu_custom_call.1} parent=75 // pred_region
          %s3528 = sand.u32 %s292, 1
          %s3529 = scalar_lea.sflag [#allocation3], %s3528
          %s3530 = sand.u32 %s292, 1
          %s3531 = smul.addr %s3530, 256
          %s3532 = scalar_lea.vmem [#allocation2], %s3531
          %3533 = dma.done %s3529, 4096
        $region80: #{tpu_custom_call.1} parent=75 // pred_fallthru
          _
      $region76: #{tpu_custom_call.1} parent=5 // pred_fallthru
        _
    $region6: #{tpu_custom_call.1} parent=1 // loop_footer
      %s25 = sadd.s32 1, %s21
    $region7: #{tpu_custom_call.1} parent=1 // loop_footer_branch
      %20 = sbr.rel target = $region3
    $region8: #{tpu_custom_call.1} parent=1 // loop_exit
      _
    %3534 = vsyncpa [#allocation3], 1
    %s3535 = scalar_lea.sflag [#allocation3], 1
    %3536 = vsyncpa %s3535, 1

</llo_original>
